<compile_context>
chip_gen: v6e
topology: v6e:2x2x1
jax: 0.10.0
libtpu: 0.0.40
codegen_flags: <defaults>
</compile_context>

<pallas_src>
import math

import jax
import jax.numpy as jnp
from jax import lax
from jax.experimental import pallas as pl
from jax.experimental.pallas import tpu as pltpu

# -------- small, module-consistent shapes --------
B, S, H = 2, 8, 32          # batch, seq, hidden_size
NUM_LAYERS = 4              # model_config.num_hidden_layers (scaled down)
NUM_HEADS = 2
HEAD_DIM = H // NUM_HEADS
FFN = 64
VOCAB = 100
M = B * S                   # flattened token count
LN_EPS = 1e-5
ATT_SCALE = 1.0 / math.sqrt(HEAD_DIM)


# ---------------------------------------------------------------------------
# In-kernel helpers (pure jnp on VMEM-resident values)
# ---------------------------------------------------------------------------
def _layer_norm(x, g, b):
    mu = jnp.mean(x, axis=-1, keepdims=True)
    var = jnp.mean((x - mu) ** 2, axis=-1, keepdims=True)
    return (x - mu) * lax.rsqrt(var + LN_EPS) * g + b


def _gelu_tanh(x):
    # TODO(synk): RoBERTa uses exact (erf-based) GELU; tanh approximation is
    # used inside the kernel since erf has no guaranteed Mosaic lowering.
    c = math.sqrt(2.0 / math.pi)
    return 0.5 * x * (1.0 + jnp.tanh(c * (x + 0.044715 * x * x * x)))


def _softmax_rows(s):
    m = jnp.max(s, axis=-1, keepdims=True)
    e = jnp.exp(s - m)
    return e / jnp.sum(e, axis=-1, keepdims=True)


# ---------------------------------------------------------------------------
# Fused backbone + span-head kernel (single pallas_call, everything in VMEM)
# ---------------------------------------------------------------------------
def _fused_backbone_head_kernel(
        emb_ref, mask_ref,
        emb_ln_g_ref, emb_ln_b_ref,
        wqkv_ref, bqkv_ref, wo_ref, bo_ref,
        aln_g_ref, aln_b_ref,
        w1_ref, b1_ref, w2_ref, b2_ref,
        fln_g_ref, fln_b_ref,
        wm_ref, wx_ref, bfc_ref,
        logits_ref):
    # --- embedding LayerNorm (f32, VPU) ---
    h = _layer_norm(emb_ref[...], emb_ln_g_ref[...], emb_ln_b_ref[...])   # (M, H)

    # additive attention-mask bias, one row per batch element: (B, S_k)
    mask_bias = (1.0 - mask_ref[...]) * (-1e9)                            # (B, S)

    # running span-head accumulators over hidden_states[:NUM_LAYERS]
    # (embedding output + layers 1..L-1, matching torch `range(num_layers)`)
    run_sum = h
    run_max = h

    for l in range(NUM_LAYERS):
        # ---- fused QKV projection: (M, H) @ (H, 3H) on the MXU ----
        qkv = (jnp.dot(h, wqkv_ref[l], preferred_element_type=jnp.float32)
               + bqkv_ref[l])                                             # (M, 3H)

        # ---- multi-head self-attention on 2-D (batch, head) blocks ----
        ctx_rows = []
        for b in range(B):
            bias_b = mask_bias[b:b + 1, :]                                # (1, S)
            head_ctx = []
            for hh in range(NUM_HEADS):
                r0, r1 = b * S, (b + 1) * S
                q = qkv[r0:r1, hh * HEAD_DIM:(hh + 1) * HEAD_DIM]          # (S, D)
                k = qkv[r0:r1, H + hh * HEAD_DIM:H + (hh + 1) * HEAD_DIM]  # (S, D)
                v = qkv[r0:r1, 2 * H + hh * HEAD_DIM:
                        2 * H + (hh + 1) * HEAD_DIM]                       # (S, D)
                # scores = q @ k^T  (contract last dims, no explicit transpose)
                s = lax.dot_general(
                    q, k, (((1,), (1,)), ((), ())),
                    preferred_element_type=jnp.float32) * ATT_SCALE        # (S, S)
                s = s + bias_b                                             # bcast over q
                p = _softmax_rows(s)                                       # (S, S)
                head_ctx.append(
                    jnp.dot(p, v, preferred_element_type=jnp.float32))     # (S, D)
            ctx_rows.append(jnp.concatenate(head_ctx, axis=-1))            # (S, H)
        ctx = jnp.concatenate(ctx_rows, axis=0)                            # (M, H)

        # ---- attention output projection + residual + LayerNorm ----
        attn_out = (jnp.dot(ctx, wo_ref[l], preferred_element_type=jnp.float32)
                    + bo_ref[l])
        h = _layer_norm(attn_out + h, aln_g_ref[l], aln_b_ref[l])

        # ---- FFN (H -> FFN -> H) + residual + LayerNorm ----
        inter = _gelu_tanh(
            jnp.dot(h, w1_ref[l], preferred_element_type=jnp.float32) + b1_ref[l])
        ffn_out = (jnp.dot(inter, w2_ref[l], preferred_element_type=jnp.float32)
                   + b2_ref[l])
        h = _layer_norm(ffn_out + h, fln_g_ref[l], fln_b_ref[l])

        # hidden_states[:NUM_LAYERS] excludes the last layer's output
        if l < NUM_LAYERS - 1:
            run_sum = run_sum + h
            run_max = jnp.maximum(run_max, h)

    # ---- span head: cat((mean, max), -1) @ W_fc == mean@Wm + max@Wx ----
    hs_mean = run_sum * (1.0 / NUM_LAYERS)
    logits_ref[...] = (
        jnp.dot(hs_mean, wm_ref[...], preferred_element_type=jnp.float32)
        + jnp.dot(run_max, wx_ref[...], preferred_element_type=jnp.float32)
        + bfc_ref[...]
    )


# ---------------------------------------------------------------------------
# Parameter init (synthetic, deterministic) and stacking for the fused kernel
# ---------------------------------------------------------------------------
def init_params(key):
    def dense(k, k_in, k_out):
        w = 0.02 * jax.random.normal(k, (k_in, k_out), jnp.float32)
        return w, jnp.zeros((k_out,), jnp.float32)

    keys = iter(jax.random.split(key, 64))
    p = {
        "word_emb": 0.02 * jax.random.normal(next(keys), (VOCAB, H), jnp.float32),
        "pos_emb": 0.02 * jax.random.normal(next(keys), (S, H), jnp.float32),
        "emb_ln_g": jnp.ones((H,), jnp.float32),
        "emb_ln_b": jnp.zeros((H,), jnp.float32),
        "layers": [],
    }
    for _ in range(NUM_LAYERS):
        lp = {}
        lp["wq"], lp["bq"] = dense(next(keys), H, H)
        lp["wk"], lp["bk"] = dense(next(keys), H, H)
        lp["wv"], lp["bv"] = dense(next(keys), H, H)
        lp["wo"], lp["bo"] = dense(next(keys), H, H)
        lp["attn_ln_g"] = jnp.ones((H,), jnp.float32)
        lp["attn_ln_b"] = jnp.zeros((H,), jnp.float32)
        lp["w1"], lp["b1"] = dense(next(keys), H, FFN)
        lp["w2"], lp["b2"] = dense(next(keys), FFN, H)
        lp["ffn_ln_g"] = jnp.ones((H,), jnp.float32)
        lp["ffn_ln_b"] = jnp.zeros((H,), jnp.float32)
        p["layers"].append(lp)
    p["w_fc"], p["b_fc"] = dense(next(keys), 2 * H, 2)   # nn.Linear(hidden*2, 2)
    return p


def prepare_fused_params(p):
    """Stack per-layer weights (L, ...) and concat QKV for the fused kernel."""
    L = p["layers"]
    stack = lambda f: jnp.stack([f(lp) for lp in L], axis=0)
    fused = {
        "word_emb": p["word_emb"],
        "pos_emb": p["pos_emb"],
        "emb_ln_g": p["emb_ln_g"].reshape(1, H),
        "emb_ln_b": p["emb_ln_b"].reshape(1, H),
        # fused QKV: (L, H, 3H) / (L, 1, 3H)
        "wqkv": stack(lambda lp: jnp.concatenate([lp["wq"], lp["wk"], lp["wv"]], axis=1)),
        "bqkv": stack(lambda lp: jnp.concatenate([lp["bq"], lp["bk"], lp["bv"]])[None, :]),
        "wo": stack(lambda lp: lp["wo"]),
        "bo": stack(lambda lp: lp["bo"][None, :]),
        "aln_g": stack(lambda lp: lp["attn_ln_g"][None, :]),
        "aln_b": stack(lambda lp: lp["attn_ln_b"][None, :]),
        "w1": stack(lambda lp: lp["w1"]),
        "b1": stack(lambda lp: lp["b1"][None, :]),
        "w2": stack(lambda lp: lp["w2"]),
        "b2": stack(lambda lp: lp["b2"][None, :]),
        "fln_g": stack(lambda lp: lp["ffn_ln_g"][None, :]),
        "fln_b": stack(lambda lp: lp["ffn_ln_b"][None, :]),
        # head: split W_fc (2H, 2) into mean / max halves
        "wm": p["w_fc"][:H],
        "wx": p["w_fc"][H:],
        "bfc": p["b_fc"].reshape(1, 2),
    }
    return fused


# ---------------------------------------------------------------------------
# Forward pass
# ---------------------------------------------------------------------------
_N_KERNEL_INPUTS = 19


def nlp_model_forward(fused, input_ids, attention_mask):
    # embedding lookup (word + position) stays in XLA (single gather + add);
    # everything downstream is one fused Pallas kernel.
    emb = fused["word_emb"][input_ids] + fused["pos_emb"][None, :, :]      # (B, S, H)
    emb2 = emb.reshape(M, H).astype(jnp.float32)
    mask_f = attention_mask.astype(jnp.float32)                            # (B, S)

    logits = pl.pallas_call(
        _fused_backbone_head_kernel,
        out_shape=jax.ShapeDtypeStruct((M, 2), jnp.float32),
        in_specs=[pl.BlockSpec(memory_space=pltpu.MemorySpace.VMEM)] * _N_KERNEL_INPUTS,
        out_specs=pl.BlockSpec(memory_space=pltpu.MemorySpace.VMEM),
    )(
        emb2, mask_f,
        fused["emb_ln_g"], fused["emb_ln_b"],
        fused["wqkv"], fused["bqkv"], fused["wo"], fused["bo"],
        fused["aln_g"], fused["aln_b"],
        fused["w1"], fused["b1"], fused["w2"], fused["b2"],
        fused["fln_g"], fused["fln_b"],
        fused["wm"], fused["wx"], fused["bfc"],
    )

    # Dropout(0.5) is identity at inference; mean over 5 identical fc outputs
    # equals a single fc(out).
    # TODO(synk): stochastic train-mode dropout averaging is not reproduced.
    logits = logits.reshape(B, S, 2)
    start_logits = logits[..., 0]   # logits.split(1, dim=-1) -> squeeze(-1)
    end_logits = logits[..., 1]
    return {"start_logits": start_logits, "end_logits": end_logits}


# ---------------------------------------------------------------------------
if __name__ == "__main__":
    root = jax.random.PRNGKey(0)
    k_param, k_ids = jax.random.split(root)

    params = init_params(k_param)
    fused_params = prepare_fused_params(params)

    input_ids = jax.random.randint(k_ids, (B, S), 0, VOCAB, dtype=jnp.int32)
    attention_mask = jnp.ones((B, S), jnp.int32).at[1, -2:].set(0)

    fwd = jax.jit(nlp_model_forward)
    out = fwd(fused_params, input_ids, attention_mask)
    jax.block_until_ready(out)

    assert out["start_logits"].shape == (B, S)
    assert out["end_logits"].shape == (B, S)
    assert jnp.all(jnp.isfinite(out["start_logits"]))
    assert jnp.all(jnp.isfinite(out["end_logits"]))
    print("KERNEL_OK")
</pallas_src>

<mosaic_0001>
module attributes {stable_mosaic.version = 11 : i64} {
  func.func @_fused_backbone_head_kernel(%arg0: memref<16x32xf32, #tpu.memory_space<vmem>>, %arg1: memref<2x8xf32, #tpu.memory_space<vmem>>, %arg2: memref<1x32xf32, #tpu.memory_space<vmem>>, %arg3: memref<1x32xf32, #tpu.memory_space<vmem>>, %arg4: memref<4x32x96xf32, #tpu.memory_space<vmem>>, %arg5: memref<4x1x96xf32, #tpu.memory_space<vmem>>, %arg6: memref<4x32x32xf32, #tpu.memory_space<vmem>>, %arg7: memref<4x1x32xf32, #tpu.memory_space<vmem>>, %arg8: memref<4x1x32xf32, #tpu.memory_space<vmem>>, %arg9: memref<4x1x32xf32, #tpu.memory_space<vmem>>, %arg10: memref<4x32x64xf32, #tpu.memory_space<vmem>>, %arg11: memref<4x1x64xf32, #tpu.memory_space<vmem>>, %arg12: memref<4x64x32xf32, #tpu.memory_space<vmem>>, %arg13: memref<4x1x32xf32, #tpu.memory_space<vmem>>, %arg14: memref<4x1x32xf32, #tpu.memory_space<vmem>>, %arg15: memref<4x1x32xf32, #tpu.memory_space<vmem>>, %arg16: memref<32x2xf32, #tpu.memory_space<vmem>>, %arg17: memref<32x2xf32, #tpu.memory_space<vmem>>, %arg18: memref<1x2xf32, #tpu.memory_space<vmem>>, %arg19: memref<16x2xf32, #tpu.memory_space<vmem>>) attributes {dimension_semantics = [], scalar_prefetch = 0 : i64, scratch_operands = 0 : i64, tpu.core_type = #tpu.core_type<tc>} {
    %c0 = arith.constant 0 : index
    %c0_0 = arith.constant 0 : index
    %0 = vector.load %arg0[%c0, %c0_0] : memref<16x32xf32, #tpu.memory_space<vmem>>, vector<16x32xf32>
    %c0_1 = arith.constant 0 : index
    %c0_2 = arith.constant 0 : index
    %1 = vector.load %arg2[%c0_1, %c0_2] : memref<1x32xf32, #tpu.memory_space<vmem>>, vector<1x32xf32>
    %c0_3 = arith.constant 0 : index
    %c0_4 = arith.constant 0 : index
    %2 = vector.load %arg3[%c0_3, %c0_4] : memref<1x32xf32, #tpu.memory_space<vmem>>, vector<1x32xf32>
    %cst = arith.constant dense<0.000000e+00> : vector<16xf32>
    %3 = vector.multi_reduction <add>, %0, %cst [1] : vector<16x32xf32> to vector<16xf32>
    %4 = vector.shape_cast %3 : vector<16xf32> to vector<16x1xf32>
    %cst_5 = arith.constant 3.200000e+01 : f32
    %5 = vector.broadcast %cst_5 : f32 to vector<16x1xf32>
    %6 = arith.divf %4, %5 : vector<16x1xf32>
    %7 = vector.broadcast %6 : vector<16x1xf32> to vector<16x32xf32>
    %8 = arith.subf %0, %7 : vector<16x32xf32>
    %9 = arith.mulf %8, %8 : vector<16x32xf32>
    %cst_6 = arith.constant dense<0.000000e+00> : vector<16xf32>
    %10 = vector.multi_reduction <add>, %9, %cst_6 [1] : vector<16x32xf32> to vector<16xf32>
    %11 = vector.shape_cast %10 : vector<16xf32> to vector<16x1xf32>
    %cst_7 = arith.constant 3.200000e+01 : f32
    %12 = vector.broadcast %cst_7 : f32 to vector<16x1xf32>
    %13 = arith.divf %11, %12 : vector<16x1xf32>
    %14 = vector.broadcast %6 : vector<16x1xf32> to vector<16x32xf32>
    %15 = arith.subf %0, %14 : vector<16x32xf32>
    %cst_8 = arith.constant 9.99999974E-6 : f32
    %16 = vector.broadcast %cst_8 : f32 to vector<16x1xf32>
    %17 = arith.addf %13, %16 : vector<16x1xf32>
    %18 = math.rsqrt %17 : vector<16x1xf32>
    %19 = vector.broadcast %18 : vector<16x1xf32> to vector<16x32xf32>
    %20 = arith.mulf %15, %19 : vector<16x32xf32>
    %21 = vector.broadcast %1 : vector<1x32xf32> to vector<16x32xf32>
    %22 = arith.mulf %20, %21 : vector<16x32xf32>
    %23 = vector.broadcast %2 : vector<1x32xf32> to vector<16x32xf32>
    %24 = arith.addf %22, %23 : vector<16x32xf32>
    %c0_9 = arith.constant 0 : index
    %c0_10 = arith.constant 0 : index
    %25 = vector.load %arg1[%c0_9, %c0_10] : memref<2x8xf32, #tpu.memory_space<vmem>>, vector<2x8xf32>
    %cst_11 = arith.constant 1.000000e+00 : f32
    %26 = vector.broadcast %cst_11 : f32 to vector<2x8xf32>
    %27 = arith.subf %26, %25 : vector<2x8xf32>
    %cst_12 = arith.constant -1.000000e+09 : f32
    %28 = vector.broadcast %cst_12 : f32 to vector<2x8xf32>
    %29 = arith.mulf %27, %28 : vector<2x8xf32>
    %c0_13 = arith.constant 0 : index
    %c0_14 = arith.constant 0 : index
    %c0_15 = arith.constant 0 : index
    %30 = vector.load %arg4[%c0_13, %c0_14, %c0_15] : memref<4x32x96xf32, #tpu.memory_space<vmem>>, vector<1x32x96xf32>
    %31 = vector.shape_cast %30 : vector<1x32x96xf32> to vector<32x96xf32>
    %cst_16 = arith.constant dense<0.000000e+00> : vector<16x96xf32>
    %32 = tpu.matmul %24, %31, %cst_16 {dimension_numbers = #tpu.dot_dimension_numbers<[1], [0], [0], [1], [0, 0, 1, 1], [], []>} : vector<16x32xf32>, vector<32x96xf32>, vector<16x96xf32> -> vector<16x96xf32>
    %c0_17 = arith.constant 0 : index
    %c0_18 = arith.constant 0 : index
    %c0_19 = arith.constant 0 : index
    %33 = vector.load %arg5[%c0_17, %c0_18, %c0_19] : memref<4x1x96xf32, #tpu.memory_space<vmem>>, vector<1x1x96xf32>
    %34 = vector.shape_cast %33 : vector<1x1x96xf32> to vector<1x96xf32>
    %35 = vector.broadcast %34 : vector<1x96xf32> to vector<16x96xf32>
    %36 = arith.addf %32, %35 : vector<16x96xf32>
    %37 = vector.extract_strided_slice %29 {offsets = [0, 0], sizes = [1, 8], strides = [1, 1]} : vector<2x8xf32> to vector<1x8xf32>
    %38 = vector.extract_strided_slice %36 {offsets = [0, 0], sizes = [8, 16], strides = [1, 1]} : vector<16x96xf32> to vector<8x16xf32>
    %39 = vector.extract_strided_slice %36 {offsets = [0, 32], sizes = [8, 16], strides = [1, 1]} : vector<16x96xf32> to vector<8x16xf32>
    %40 = vector.extract_strided_slice %36 {offsets = [0, 64], sizes = [8, 16], strides = [1, 1]} : vector<16x96xf32> to vector<8x16xf32>
    %cst_20 = arith.constant dense<0.000000e+00> : vector<8x8xf32>
    %41 = tpu.matmul %38, %39, %cst_20 {dimension_numbers = #tpu.dot_dimension_numbers<[1], [1], [0], [0], [0, 0, 1, 0], [], []>} : vector<8x16xf32>, vector<8x16xf32>, vector<8x8xf32> -> vector<8x8xf32>
    %cst_21 = arith.constant 2.500000e-01 : f32
    %42 = vector.broadcast %cst_21 : f32 to vector<8x8xf32>
    %43 = arith.mulf %41, %42 : vector<8x8xf32>
    %44 = vector.broadcast %37 : vector<1x8xf32> to vector<8x8xf32>
    %45 = arith.addf %43, %44 : vector<8x8xf32>
    %cst_22 = arith.constant dense<0xFF800000> : vector<8xf32>
    %46 = vector.multi_reduction <maximumf>, %45, %cst_22 [1] : vector<8x8xf32> to vector<8xf32>
    %47 = vector.shape_cast %46 : vector<8xf32> to vector<8x1xf32>
    %48 = vector.broadcast %47 : vector<8x1xf32> to vector<8x8xf32>
    %49 = arith.subf %45, %48 : vector<8x8xf32>
    %50 = math.exp %49 : vector<8x8xf32>
    %cst_23 = arith.constant dense<0.000000e+00> : vector<8xf32>
    %51 = vector.multi_reduction <add>, %50, %cst_23 [1] : vector<8x8xf32> to vector<8xf32>
    %52 = vector.shape_cast %51 : vector<8xf32> to vector<8x1xf32>
    %53 = vector.broadcast %52 : vector<8x1xf32> to vector<8x8xf32>
    %54 = arith.divf %50, %53 : vector<8x8xf32>
    %cst_24 = arith.constant dense<0.000000e+00> : vector<8x16xf32>
    %55 = tpu.matmul %54, %40, %cst_24 {dimension_numbers = #tpu.dot_dimension_numbers<[1], [0], [0], [1], [0, 0, 1, 1], [], []>} : vector<8x8xf32>, vector<8x16xf32>, vector<8x16xf32> -> vector<8x16xf32>
    %56 = vector.extract_strided_slice %36 {offsets = [0, 16], sizes = [8, 16], strides = [1, 1]} : vector<16x96xf32> to vector<8x16xf32>
    %57 = vector.extract_strided_slice %36 {offsets = [0, 48], sizes = [8, 16], strides = [1, 1]} : vector<16x96xf32> to vector<8x16xf32>
    %58 = vector.extract_strided_slice %36 {offsets = [0, 80], sizes = [8, 16], strides = [1, 1]} : vector<16x96xf32> to vector<8x16xf32>
    %cst_25 = arith.constant dense<0.000000e+00> : vector<8x8xf32>
    %59 = tpu.matmul %56, %57, %cst_25 {dimension_numbers = #tpu.dot_dimension_numbers<[1], [1], [0], [0], [0, 0, 1, 0], [], []>} : vector<8x16xf32>, vector<8x16xf32>, vector<8x8xf32> -> vector<8x8xf32>
    %cst_26 = arith.constant 2.500000e-01 : f32
    %60 = vector.broadcast %cst_26 : f32 to vector<8x8xf32>
    %61 = arith.mulf %59, %60 : vector<8x8xf32>
    %62 = vector.broadcast %37 : vector<1x8xf32> to vector<8x8xf32>
    %63 = arith.addf %61, %62 : vector<8x8xf32>
    %cst_27 = arith.constant dense<0xFF800000> : vector<8xf32>
    %64 = vector.multi_reduction <maximumf>, %63, %cst_27 [1] : vector<8x8xf32> to vector<8xf32>
    %65 = vector.shape_cast %64 : vector<8xf32> to vector<8x1xf32>
    %66 = vector.broadcast %65 : vector<8x1xf32> to vector<8x8xf32>
    %67 = arith.subf %63, %66 : vector<8x8xf32>
    %68 = math.exp %67 : vector<8x8xf32>
    %cst_28 = arith.constant dense<0.000000e+00> : vector<8xf32>
    %69 = vector.multi_reduction <add>, %68, %cst_28 [1] : vector<8x8xf32> to vector<8xf32>
    %70 = vector.shape_cast %69 : vector<8xf32> to vector<8x1xf32>
    %71 = vector.broadcast %70 : vector<8x1xf32> to vector<8x8xf32>
    %72 = arith.divf %68, %71 : vector<8x8xf32>
    %cst_29 = arith.constant dense<0.000000e+00> : vector<8x16xf32>
    %73 = tpu.matmul %72, %58, %cst_29 {dimension_numbers = #tpu.dot_dimension_numbers<[1], [0], [0], [1], [0, 0, 1, 1], [], []>} : vector<8x8xf32>, vector<8x16xf32>, vector<8x16xf32> -> vector<8x16xf32>
    %74 = tpu.concatenate %55, %73 in 1 : vector<8x16xf32>, vector<8x16xf32> -> vector<8x32xf32>
    %75 = vector.extract_strided_slice %29 {offsets = [1, 0], sizes = [1, 8], strides = [1, 1]} : vector<2x8xf32> to vector<1x8xf32>
    %76 = vector.extract_strided_slice %36 {offsets = [8, 0], sizes = [8, 16], strides = [1, 1]} : vector<16x96xf32> to vector<8x16xf32>
    %77 = vector.extract_strided_slice %36 {offsets = [8, 32], sizes = [8, 16], strides = [1, 1]} : vector<16x96xf32> to vector<8x16xf32>
    %78 = vector.extract_strided_slice %36 {offsets = [8, 64], sizes = [8, 16], strides = [1, 1]} : vector<16x96xf32> to vector<8x16xf32>
    %cst_30 = arith.constant dense<0.000000e+00> : vector<8x8xf32>
    %79 = tpu.matmul %76, %77, %cst_30 {dimension_numbers = #tpu.dot_dimension_numbers<[1], [1], [0], [0], [0, 0, 1, 0], [], []>} : vector<8x16xf32>, vector<8x16xf32>, vector<8x8xf32> -> vector<8x8xf32>
    %cst_31 = arith.constant 2.500000e-01 : f32
    %80 = vector.broadcast %cst_31 : f32 to vector<8x8xf32>
    %81 = arith.mulf %79, %80 : vector<8x8xf32>
    %82 = vector.broadcast %75 : vector<1x8xf32> to vector<8x8xf32>
    %83 = arith.addf %81, %82 : vector<8x8xf32>
    %cst_32 = arith.constant dense<0xFF800000> : vector<8xf32>
    %84 = vector.multi_reduction <maximumf>, %83, %cst_32 [1] : vector<8x8xf32> to vector<8xf32>
    %85 = vector.shape_cast %84 : vector<8xf32> to vector<8x1xf32>
    %86 = vector.broadcast %85 : vector<8x1xf32> to vector<8x8xf32>
    %87 = arith.subf %83, %86 : vector<8x8xf32>
    %88 = math.exp %87 : vector<8x8xf32>
    %cst_33 = arith.constant dense<0.000000e+00> : vector<8xf32>
    %89 = vector.multi_reduction <add>, %88, %cst_33 [1] : vector<8x8xf32> to vector<8xf32>
    %90 = vector.shape_cast %89 : vector<8xf32> to vector<8x1xf32>
    %91 = vector.broadcast %90 : vector<8x1xf32> to vector<8x8xf32>
    %92 = arith.divf %88, %91 : vector<8x8xf32>
    %cst_34 = arith.constant dense<0.000000e+00> : vector<8x16xf32>
    %93 = tpu.matmul %92, %78, %cst_34 {dimension_numbers = #tpu.dot_dimension_numbers<[1], [0], [0], [1], [0, 0, 1, 1], [], []>} : vector<8x8xf32>, vector<8x16xf32>, vector<8x16xf32> -> vector<8x16xf32>
    %94 = vector.extract_strided_slice %36 {offsets = [8, 16], sizes = [8, 16], strides = [1, 1]} : vector<16x96xf32> to vector<8x16xf32>
    %95 = vector.extract_strided_slice %36 {offsets = [8, 48], sizes = [8, 16], strides = [1, 1]} : vector<16x96xf32> to vector<8x16xf32>
    %96 = vector.extract_strided_slice %36 {offsets = [8, 80], sizes = [8, 16], strides = [1, 1]} : vector<16x96xf32> to vector<8x16xf32>
    %cst_35 = arith.constant dense<0.000000e+00> : vector<8x8xf32>
    %97 = tpu.matmul %94, %95, %cst_35 {dimension_numbers = #tpu.dot_dimension_numbers<[1], [1], [0], [0], [0, 0, 1, 0], [], []>} : vector<8x16xf32>, vector<8x16xf32>, vector<8x8xf32> -> vector<8x8xf32>
    %cst_36 = arith.constant 2.500000e-01 : f32
    %98 = vector.broadcast %cst_36 : f32 to vector<8x8xf32>
    %99 = arith.mulf %97, %98 : vector<8x8xf32>
    %100 = vector.broadcast %75 : vector<1x8xf32> to vector<8x8xf32>
    %101 = arith.addf %99, %100 : vector<8x8xf32>
    %cst_37 = arith.constant dense<0xFF800000> : vector<8xf32>
    %102 = vector.multi_reduction <maximumf>, %101, %cst_37 [1] : vector<8x8xf32> to vector<8xf32>
    %103 = vector.shape_cast %102 : vector<8xf32> to vector<8x1xf32>
    %104 = vector.broadcast %103 : vector<8x1xf32> to vector<8x8xf32>
    %105 = arith.subf %101, %104 : vector<8x8xf32>
    %106 = math.exp %105 : vector<8x8xf32>
    %cst_38 = arith.constant dense<0.000000e+00> : vector<8xf32>
    %107 = vector.multi_reduction <add>, %106, %cst_38 [1] : vector<8x8xf32> to vector<8xf32>
    %108 = vector.shape_cast %107 : vector<8xf32> to vector<8x1xf32>
    %109 = vector.broadcast %108 : vector<8x1xf32> to vector<8x8xf32>
    %110 = arith.divf %106, %109 : vector<8x8xf32>
    %cst_39 = arith.constant dense<0.000000e+00> : vector<8x16xf32>
    %111 = tpu.matmul %110, %96, %cst_39 {dimension_numbers = #tpu.dot_dimension_numbers<[1], [0], [0], [1], [0, 0, 1, 1], [], []>} : vector<8x8xf32>, vector<8x16xf32>, vector<8x16xf32> -> vector<8x16xf32>
    %112 = tpu.concatenate %93, %111 in 1 : vector<8x16xf32>, vector<8x16xf32> -> vector<8x32xf32>
    %113 = tpu.concatenate %74, %112 in 0 : vector<8x32xf32>, vector<8x32xf32> -> vector<16x32xf32>
    %c0_40 = arith.constant 0 : index
    %c0_41 = arith.constant 0 : index
    %c0_42 = arith.constant 0 : index
    %114 = vector.load %arg6[%c0_40, %c0_41, %c0_42] : memref<4x32x32xf32, #tpu.memory_space<vmem>>, vector<1x32x32xf32>
    %115 = vector.shape_cast %114 : vector<1x32x32xf32> to vector<32x32xf32>
    %cst_43 = arith.constant dense<0.000000e+00> : vector<16x32xf32>
    %116 = tpu.matmul %113, %115, %cst_43 {dimension_numbers = #tpu.dot_dimension_numbers<[1], [0], [0], [1], [0, 0, 1, 1], [], []>} : vector<16x32xf32>, vector<32x32xf32>, vector<16x32xf32> -> vector<16x32xf32>
    %c0_44 = arith.constant 0 : index
    %c0_45 = arith.constant 0 : index
    %c0_46 = arith.constant 0 : index
    %117 = vector.load %arg7[%c0_44, %c0_45, %c0_46] : memref<4x1x32xf32, #tpu.memory_space<vmem>>, vector<1x1x32xf32>
    %118 = vector.shape_cast %117 : vector<1x1x32xf32> to vector<1x32xf32>
    %119 = vector.broadcast %118 : vector<1x32xf32> to vector<16x32xf32>
    %120 = arith.addf %116, %119 : vector<16x32xf32>
    %121 = arith.addf %120, %24 : vector<16x32xf32>
    %c0_47 = arith.constant 0 : index
    %c0_48 = arith.constant 0 : index
    %c0_49 = arith.constant 0 : index
    %122 = vector.load %arg8[%c0_47, %c0_48, %c0_49] : memref<4x1x32xf32, #tpu.memory_space<vmem>>, vector<1x1x32xf32>
    %123 = vector.shape_cast %122 : vector<1x1x32xf32> to vector<1x32xf32>
    %c0_50 = arith.constant 0 : index
    %c0_51 = arith.constant 0 : index
    %c0_52 = arith.constant 0 : index
    %124 = vector.load %arg9[%c0_50, %c0_51, %c0_52] : memref<4x1x32xf32, #tpu.memory_space<vmem>>, vector<1x1x32xf32>
    %125 = vector.shape_cast %124 : vector<1x1x32xf32> to vector<1x32xf32>
    %cst_53 = arith.constant dense<0.000000e+00> : vector<16xf32>
    %126 = vector.multi_reduction <add>, %121, %cst_53 [1] : vector<16x32xf32> to vector<16xf32>
    %127 = vector.shape_cast %126 : vector<16xf32> to vector<16x1xf32>
    %cst_54 = arith.constant 3.200000e+01 : f32
    %128 = vector.broadcast %cst_54 : f32 to vector<16x1xf32>
    %129 = arith.divf %127, %128 : vector<16x1xf32>
    %130 = vector.broadcast %129 : vector<16x1xf32> to vector<16x32xf32>
    %131 = arith.subf %121, %130 : vector<16x32xf32>
    %132 = arith.mulf %131, %131 : vector<16x32xf32>
    %cst_55 = arith.constant dense<0.000000e+00> : vector<16xf32>
    %133 = vector.multi_reduction <add>, %132, %cst_55 [1] : vector<16x32xf32> to vector<16xf32>
    %134 = vector.shape_cast %133 : vector<16xf32> to vector<16x1xf32>
    %cst_56 = arith.constant 3.200000e+01 : f32
    %135 = vector.broadcast %cst_56 : f32 to vector<16x1xf32>
    %136 = arith.divf %134, %135 : vector<16x1xf32>
    %137 = vector.broadcast %129 : vector<16x1xf32> to vector<16x32xf32>
    %138 = arith.subf %121, %137 : vector<16x32xf32>
    %cst_57 = arith.constant 9.99999974E-6 : f32
    %139 = vector.broadcast %cst_57 : f32 to vector<16x1xf32>
    %140 = arith.addf %136, %139 : vector<16x1xf32>
    %141 = math.rsqrt %140 : vector<16x1xf32>
    %142 = vector.broadcast %141 : vector<16x1xf32> to vector<16x32xf32>
    %143 = arith.mulf %138, %142 : vector<16x32xf32>
    %144 = vector.broadcast %123 : vector<1x32xf32> to vector<16x32xf32>
    %145 = arith.mulf %143, %144 : vector<16x32xf32>
    %146 = vector.broadcast %125 : vector<1x32xf32> to vector<16x32xf32>
    %147 = arith.addf %145, %146 : vector<16x32xf32>
    %c0_58 = arith.constant 0 : index
    %c0_59 = arith.constant 0 : index
    %c0_60 = arith.constant 0 : index
    %148 = vector.load %arg10[%c0_58, %c0_59, %c0_60] : memref<4x32x64xf32, #tpu.memory_space<vmem>>, vector<1x32x64xf32>
    %149 = vector.shape_cast %148 : vector<1x32x64xf32> to vector<32x64xf32>
    %cst_61 = arith.constant dense<0.000000e+00> : vector<16x64xf32>
    %150 = tpu.matmul %147, %149, %cst_61 {dimension_numbers = #tpu.dot_dimension_numbers<[1], [0], [0], [1], [0, 0, 1, 1], [], []>} : vector<16x32xf32>, vector<32x64xf32>, vector<16x64xf32> -> vector<16x64xf32>
    %c0_62 = arith.constant 0 : index
    %c0_63 = arith.constant 0 : index
    %c0_64 = arith.constant 0 : index
    %151 = vector.load %arg11[%c0_62, %c0_63, %c0_64] : memref<4x1x64xf32, #tpu.memory_space<vmem>>, vector<1x1x64xf32>
    %152 = vector.shape_cast %151 : vector<1x1x64xf32> to vector<1x64xf32>
    %153 = vector.broadcast %152 : vector<1x64xf32> to vector<16x64xf32>
    %154 = arith.addf %150, %153 : vector<16x64xf32>
    %cst_65 = arith.constant 5.000000e-01 : f32
    %155 = vector.broadcast %cst_65 : f32 to vector<16x64xf32>
    %156 = arith.mulf %155, %154 : vector<16x64xf32>
    %cst_66 = arith.constant 4.471500e-02 : f32
    %157 = vector.broadcast %cst_66 : f32 to vector<16x64xf32>
    %158 = arith.mulf %157, %154 : vector<16x64xf32>
    %159 = arith.mulf %158, %154 : vector<16x64xf32>
    %160 = arith.mulf %159, %154 : vector<16x64xf32>
    %161 = arith.addf %154, %160 : vector<16x64xf32>
    %cst_67 = arith.constant 0.797884583 : f32
    %162 = vector.broadcast %cst_67 : f32 to vector<16x64xf32>
    %163 = arith.mulf %162, %161 : vector<16x64xf32>
    %164 = math.tanh %163 : vector<16x64xf32>
    %cst_68 = arith.constant 1.000000e+00 : f32
    %165 = vector.broadcast %cst_68 : f32 to vector<16x64xf32>
    %166 = arith.addf %165, %164 : vector<16x64xf32>
    %167 = arith.mulf %156, %166 : vector<16x64xf32>
    %c0_69 = arith.constant 0 : index
    %c0_70 = arith.constant 0 : index
    %c0_71 = arith.constant 0 : index
    %168 = vector.load %arg12[%c0_69, %c0_70, %c0_71] : memref<4x64x32xf32, #tpu.memory_space<vmem>>, vector<1x64x32xf32>
    %169 = vector.shape_cast %168 : vector<1x64x32xf32> to vector<64x32xf32>
    %cst_72 = arith.constant dense<0.000000e+00> : vector<16x32xf32>
    %170 = tpu.matmul %167, %169, %cst_72 {dimension_numbers = #tpu.dot_dimension_numbers<[1], [0], [0], [1], [0, 0, 1, 1], [], []>} : vector<16x64xf32>, vector<64x32xf32>, vector<16x32xf32> -> vector<16x32xf32>
    %c0_73 = arith.constant 0 : index
    %c0_74 = arith.constant 0 : index
    %c0_75 = arith.constant 0 : index
    %171 = vector.load %arg13[%c0_73, %c0_74, %c0_75] : memref<4x1x32xf32, #tpu.memory_space<vmem>>, vector<1x1x32xf32>
    %172 = vector.shape_cast %171 : vector<1x1x32xf32> to vector<1x32xf32>
    %173 = vector.broadcast %172 : vector<1x32xf32> to vector<16x32xf32>
    %174 = arith.addf %170, %173 : vector<16x32xf32>
    %175 = arith.addf %174, %147 : vector<16x32xf32>
    %c0_76 = arith.constant 0 : index
    %c0_77 = arith.constant 0 : index
    %c0_78 = arith.constant 0 : index
    %176 = vector.load %arg14[%c0_76, %c0_77, %c0_78] : memref<4x1x32xf32, #tpu.memory_space<vmem>>, vector<1x1x32xf32>
    %177 = vector.shape_cast %176 : vector<1x1x32xf32> to vector<1x32xf32>
    %c0_79 = arith.constant 0 : index
    %c0_80 = arith.constant 0 : index
    %c0_81 = arith.constant 0 : index
    %178 = vector.load %arg15[%c0_79, %c0_80, %c0_81] : memref<4x1x32xf32, #tpu.memory_space<vmem>>, vector<1x1x32xf32>
    %179 = vector.shape_cast %178 : vector<1x1x32xf32> to vector<1x32xf32>
    %cst_82 = arith.constant dense<0.000000e+00> : vector<16xf32>
    %180 = vector.multi_reduction <add>, %175, %cst_82 [1] : vector<16x32xf32> to vector<16xf32>
    %181 = vector.shape_cast %180 : vector<16xf32> to vector<16x1xf32>
    %cst_83 = arith.constant 3.200000e+01 : f32
    %182 = vector.broadcast %cst_83 : f32 to vector<16x1xf32>
    %183 = arith.divf %181, %182 : vector<16x1xf32>
    %184 = vector.broadcast %183 : vector<16x1xf32> to vector<16x32xf32>
    %185 = arith.subf %175, %184 : vector<16x32xf32>
    %186 = arith.mulf %185, %185 : vector<16x32xf32>
    %cst_84 = arith.constant dense<0.000000e+00> : vector<16xf32>
    %187 = vector.multi_reduction <add>, %186, %cst_84 [1] : vector<16x32xf32> to vector<16xf32>
    %188 = vector.shape_cast %187 : vector<16xf32> to vector<16x1xf32>
    %cst_85 = arith.constant 3.200000e+01 : f32
    %189 = vector.broadcast %cst_85 : f32 to vector<16x1xf32>
    %190 = arith.divf %188, %189 : vector<16x1xf32>
    %191 = vector.broadcast %183 : vector<16x1xf32> to vector<16x32xf32>
    %192 = arith.subf %175, %191 : vector<16x32xf32>
    %cst_86 = arith.constant 9.99999974E-6 : f32
    %193 = vector.broadcast %cst_86 : f32 to vector<16x1xf32>
    %194 = arith.addf %190, %193 : vector<16x1xf32>
    %195 = math.rsqrt %194 : vector<16x1xf32>
    %196 = vector.broadcast %195 : vector<16x1xf32> to vector<16x32xf32>
    %197 = arith.mulf %192, %196 : vector<16x32xf32>
    %198 = vector.broadcast %177 : vector<1x32xf32> to vector<16x32xf32>
    %199 = arith.mulf %197, %198 : vector<16x32xf32>
    %200 = vector.broadcast %179 : vector<1x32xf32> to vector<16x32xf32>
    %201 = arith.addf %199, %200 : vector<16x32xf32>
    %202 = arith.addf %24, %201 : vector<16x32xf32>
    %203 = arith.maximumf %24, %201 : vector<16x32xf32>
    %c1 = arith.constant 1 : index
    %c0_87 = arith.constant 0 : index
    %c0_88 = arith.constant 0 : index
    %204 = vector.load %arg4[%c1, %c0_87, %c0_88] : memref<4x32x96xf32, #tpu.memory_space<vmem>>, vector<1x32x96xf32>
    %205 = vector.shape_cast %204 : vector<1x32x96xf32> to vector<32x96xf32>
    %cst_89 = arith.constant dense<0.000000e+00> : vector<16x96xf32>
    %206 = tpu.matmul %201, %205, %cst_89 {dimension_numbers = #tpu.dot_dimension_numbers<[1], [0], [0], [1], [0, 0, 1, 1], [], []>} : vector<16x32xf32>, vector<32x96xf32>, vector<16x96xf32> -> vector<16x96xf32>
    %c1_90 = arith.constant 1 : index
    %c0_91 = arith.constant 0 : index
    %c0_92 = arith.constant 0 : index
    %207 = vector.load %arg5[%c1_90, %c0_91, %c0_92] : memref<4x1x96xf32, #tpu.memory_space<vmem>>, vector<1x1x96xf32>
    %208 = vector.shape_cast %207 : vector<1x1x96xf32> to vector<1x96xf32>
    %209 = vector.broadcast %208 : vector<1x96xf32> to vector<16x96xf32>
    %210 = arith.addf %206, %209 : vector<16x96xf32>
    %211 = vector.extract_strided_slice %29 {offsets = [0, 0], sizes = [1, 8], strides = [1, 1]} : vector<2x8xf32> to vector<1x8xf32>
    %212 = vector.extract_strided_slice %210 {offsets = [0, 0], sizes = [8, 16], strides = [1, 1]} : vector<16x96xf32> to vector<8x16xf32>
    %213 = vector.extract_strided_slice %210 {offsets = [0, 32], sizes = [8, 16], strides = [1, 1]} : vector<16x96xf32> to vector<8x16xf32>
    %214 = vector.extract_strided_slice %210 {offsets = [0, 64], sizes = [8, 16], strides = [1, 1]} : vector<16x96xf32> to vector<8x16xf32>
    %cst_93 = arith.constant dense<0.000000e+00> : vector<8x8xf32>
    %215 = tpu.matmul %212, %213, %cst_93 {dimension_numbers = #tpu.dot_dimension_numbers<[1], [1], [0], [0], [0, 0, 1, 0], [], []>} : vector<8x16xf32>, vector<8x16xf32>, vector<8x8xf32> -> vector<8x8xf32>
    %cst_94 = arith.constant 2.500000e-01 : f32
    %216 = vector.broadcast %cst_94 : f32 to vector<8x8xf32>
    %217 = arith.mulf %215, %216 : vector<8x8xf32>
    %218 = vector.broadcast %211 : vector<1x8xf32> to vector<8x8xf32>
    %219 = arith.addf %217, %218 : vector<8x8xf32>
    %cst_95 = arith.constant dense<0xFF800000> : vector<8xf32>
    %220 = vector.multi_reduction <maximumf>, %219, %cst_95 [1] : vector<8x8xf32> to vector<8xf32>
    %221 = vector.shape_cast %220 : vector<8xf32> to vector<8x1xf32>
    %222 = vector.broadcast %221 : vector<8x1xf32> to vector<8x8xf32>
    %223 = arith.subf %219, %222 : vector<8x8xf32>
    %224 = math.exp %223 : vector<8x8xf32>
    %cst_96 = arith.constant dense<0.000000e+00> : vector<8xf32>
    %225 = vector.multi_reduction <add>, %224, %cst_96 [1] : vector<8x8xf32> to vector<8xf32>
    %226 = vector.shape_cast %225 : vector<8xf32> to vector<8x1xf32>
    %227 = vector.broadcast %226 : vector<8x1xf32> to vector<8x8xf32>
    %228 = arith.divf %224, %227 : vector<8x8xf32>
    %cst_97 = arith.constant dense<0.000000e+00> : vector<8x16xf32>
    %229 = tpu.matmul %228, %214, %cst_97 {dimension_numbers = #tpu.dot_dimension_numbers<[1], [0], [0], [1], [0, 0, 1, 1], [], []>} : vector<8x8xf32>, vector<8x16xf32>, vector<8x16xf32> -> vector<8x16xf32>
    %230 = vector.extract_strided_slice %210 {offsets = [0, 16], sizes = [8, 16], strides = [1, 1]} : vector<16x96xf32> to vector<8x16xf32>
    %231 = vector.extract_strided_slice %210 {offsets = [0, 48], sizes = [8, 16], strides = [1, 1]} : vector<16x96xf32> to vector<8x16xf32>
    %232 = vector.extract_strided_slice %210 {offsets = [0, 80], sizes = [8, 16], strides = [1, 1]} : vector<16x96xf32> to vector<8x16xf32>
    %cst_98 = arith.constant dense<0.000000e+00> : vector<8x8xf32>
    %233 = tpu.matmul %230, %231, %cst_98 {dimension_numbers = #tpu.dot_dimension_numbers<[1], [1], [0], [0], [0, 0, 1, 0], [], []>} : vector<8x16xf32>, vector<8x16xf32>, vector<8x8xf32> -> vector<8x8xf32>
    %cst_99 = arith.constant 2.500000e-01 : f32
    %234 = vector.broadcast %cst_99 : f32 to vector<8x8xf32>
    %235 = arith.mulf %233, %234 : vector<8x8xf32>
    %236 = vector.broadcast %211 : vector<1x8xf32> to vector<8x8xf32>
    %237 = arith.addf %235, %236 : vector<8x8xf32>
    %cst_100 = arith.constant dense<0xFF800000> : vector<8xf32>
    %238 = vector.multi_reduction <maximumf>, %237, %cst_100 [1] : vector<8x8xf32> to vector<8xf32>
    %239 = vector.shape_cast %238 : vector<8xf32> to vector<8x1xf32>
    %240 = vector.broadcast %239 : vector<8x1xf32> to vector<8x8xf32>
    %241 = arith.subf %237, %240 : vector<8x8xf32>
    %242 = math.exp %241 : vector<8x8xf32>
    %cst_101 = arith.constant dense<0.000000e+00> : vector<8xf32>
    %243 = vector.multi_reduction <add>, %242, %cst_101 [1] : vector<8x8xf32> to vector<8xf32>
    %244 = vector.shape_cast %243 : vector<8xf32> to vector<8x1xf32>
    %245 = vector.broadcast %244 : vector<8x1xf32> to vector<8x8xf32>
    %246 = arith.divf %242, %245 : vector<8x8xf32>
    %cst_102 = arith.constant dense<0.000000e+00> : vector<8x16xf32>
    %247 = tpu.matmul %246, %232, %cst_102 {dimension_numbers = #tpu.dot_dimension_numbers<[1], [0], [0], [1], [0, 0, 1, 1], [], []>} : vector<8x8xf32>, vector<8x16xf32>, vector<8x16xf32> -> vector<8x16xf32>
    %248 = tpu.concatenate %229, %247 in 1 : vector<8x16xf32>, vector<8x16xf32> -> vector<8x32xf32>
    %249 = vector.extract_strided_slice %29 {offsets = [1, 0], sizes = [1, 8], strides = [1, 1]} : vector<2x8xf32> to vector<1x8xf32>
    %250 = vector.extract_strided_slice %210 {offsets = [8, 0], sizes = [8, 16], strides = [1, 1]} : vector<16x96xf32> to vector<8x16xf32>
    %251 = vector.extract_strided_slice %210 {offsets = [8, 32], sizes = [8, 16], strides = [1, 1]} : vector<16x96xf32> to vector<8x16xf32>
    %252 = vector.extract_strided_slice %210 {offsets = [8, 64], sizes = [8, 16], strides = [1, 1]} : vector<16x96xf32> to vector<8x16xf32>
    %cst_103 = arith.constant dense<0.000000e+00> : vector<8x8xf32>
    %253 = tpu.matmul %250, %251, %cst_103 {dimension_numbers = #tpu.dot_dimension_numbers<[1], [1], [0], [0], [0, 0, 1, 0], [], []>} : vector<8x16xf32>, vector<8x16xf32>, vector<8x8xf32> -> vector<8x8xf32>
    %cst_104 = arith.constant 2.500000e-01 : f32
    %254 = vector.broadcast %cst_104 : f32 to vector<8x8xf32>
    %255 = arith.mulf %253, %254 : vector<8x8xf32>
    %256 = vector.broadcast %249 : vector<1x8xf32> to vector<8x8xf32>
    %257 = arith.addf %255, %256 : vector<8x8xf32>
    %cst_105 = arith.constant dense<0xFF800000> : vector<8xf32>
    %258 = vector.multi_reduction <maximumf>, %257, %cst_105 [1] : vector<8x8xf32> to vector<8xf32>
    %259 = vector.shape_cast %258 : vector<8xf32> to vector<8x1xf32>
    %260 = vector.broadcast %259 : vector<8x1xf32> to vector<8x8xf32>
    %261 = arith.subf %257, %260 : vector<8x8xf32>
    %262 = math.exp %261 : vector<8x8xf32>
    %cst_106 = arith.constant dense<0.000000e+00> : vector<8xf32>
    %263 = vector.multi_reduction <add>, %262, %cst_106 [1] : vector<8x8xf32> to vector<8xf32>
    %264 = vector.shape_cast %263 : vector<8xf32> to vector<8x1xf32>
    %265 = vector.broadcast %264 : vector<8x1xf32> to vector<8x8xf32>
    %266 = arith.divf %262, %265 : vector<8x8xf32>
    %cst_107 = arith.constant dense<0.000000e+00> : vector<8x16xf32>
    %267 = tpu.matmul %266, %252, %cst_107 {dimension_numbers = #tpu.dot_dimension_numbers<[1], [0], [0], [1], [0, 0, 1, 1], [], []>} : vector<8x8xf32>, vector<8x16xf32>, vector<8x16xf32> -> vector<8x16xf32>
    %268 = vector.extract_strided_slice %210 {offsets = [8, 16], sizes = [8, 16], strides = [1, 1]} : vector<16x96xf32> to vector<8x16xf32>
    %269 = vector.extract_strided_slice %210 {offsets = [8, 48], sizes = [8, 16], strides = [1, 1]} : vector<16x96xf32> to vector<8x16xf32>
    %270 = vector.extract_strided_slice %210 {offsets = [8, 80], sizes = [8, 16], strides = [1, 1]} : vector<16x96xf32> to vector<8x16xf32>
    %cst_108 = arith.constant dense<0.000000e+00> : vector<8x8xf32>
    %271 = tpu.matmul %268, %269, %cst_108 {dimension_numbers = #tpu.dot_dimension_numbers<[1], [1], [0], [0], [0, 0, 1, 0], [], []>} : vector<8x16xf32>, vector<8x16xf32>, vector<8x8xf32> -> vector<8x8xf32>
    %cst_109 = arith.constant 2.500000e-01 : f32
    %272 = vector.broadcast %cst_109 : f32 to vector<8x8xf32>
    %273 = arith.mulf %271, %272 : vector<8x8xf32>
    %274 = vector.broadcast %249 : vector<1x8xf32> to vector<8x8xf32>
    %275 = arith.addf %273, %274 : vector<8x8xf32>
    %cst_110 = arith.constant dense<0xFF800000> : vector<8xf32>
    %276 = vector.multi_reduction <maximumf>, %275, %cst_110 [1] : vector<8x8xf32> to vector<8xf32>
    %277 = vector.shape_cast %276 : vector<8xf32> to vector<8x1xf32>
    %278 = vector.broadcast %277 : vector<8x1xf32> to vector<8x8xf32>
    %279 = arith.subf %275, %278 : vector<8x8xf32>
    %280 = math.exp %279 : vector<8x8xf32>
    %cst_111 = arith.constant dense<0.000000e+00> : vector<8xf32>
    %281 = vector.multi_reduction <add>, %280, %cst_111 [1] : vector<8x8xf32> to vector<8xf32>
    %282 = vector.shape_cast %281 : vector<8xf32> to vector<8x1xf32>
    %283 = vector.broadcast %282 : vector<8x1xf32> to vector<8x8xf32>
    %284 = arith.divf %280, %283 : vector<8x8xf32>
    %cst_112 = arith.constant dense<0.000000e+00> : vector<8x16xf32>
    %285 = tpu.matmul %284, %270, %cst_112 {dimension_numbers = #tpu.dot_dimension_numbers<[1], [0], [0], [1], [0, 0, 1, 1], [], []>} : vector<8x8xf32>, vector<8x16xf32>, vector<8x16xf32> -> vector<8x16xf32>
    %286 = tpu.concatenate %267, %285 in 1 : vector<8x16xf32>, vector<8x16xf32> -> vector<8x32xf32>
    %287 = tpu.concatenate %248, %286 in 0 : vector<8x32xf32>, vector<8x32xf32> -> vector<16x32xf32>
    %c1_113 = arith.constant 1 : index
    %c0_114 = arith.constant 0 : index
    %c0_115 = arith.constant 0 : index
    %288 = vector.load %arg6[%c1_113, %c0_114, %c0_115] : memref<4x32x32xf32, #tpu.memory_space<vmem>>, vector<1x32x32xf32>
    %289 = vector.shape_cast %288 : vector<1x32x32xf32> to vector<32x32xf32>
    %cst_116 = arith.constant dense<0.000000e+00> : vector<16x32xf32>
    %290 = tpu.matmul %287, %289, %cst_116 {dimension_numbers = #tpu.dot_dimension_numbers<[1], [0], [0], [1], [0, 0, 1, 1], [], []>} : vector<16x32xf32>, vector<32x32xf32>, vector<16x32xf32> -> vector<16x32xf32>
    %c1_117 = arith.constant 1 : index
    %c0_118 = arith.constant 0 : index
    %c0_119 = arith.constant 0 : index
    %291 = vector.load %arg7[%c1_117, %c0_118, %c0_119] : memref<4x1x32xf32, #tpu.memory_space<vmem>>, vector<1x1x32xf32>
    %292 = vector.shape_cast %291 : vector<1x1x32xf32> to vector<1x32xf32>
    %293 = vector.broadcast %292 : vector<1x32xf32> to vector<16x32xf32>
    %294 = arith.addf %290, %293 : vector<16x32xf32>
    %295 = arith.addf %294, %201 : vector<16x32xf32>
    %c1_120 = arith.constant 1 : index
    %c0_121 = arith.constant 0 : index
    %c0_122 = arith.constant 0 : index
    %296 = vector.load %arg8[%c1_120, %c0_121, %c0_122] : memref<4x1x32xf32, #tpu.memory_space<vmem>>, vector<1x1x32xf32>
    %297 = vector.shape_cast %296 : vector<1x1x32xf32> to vector<1x32xf32>
    %c1_123 = arith.constant 1 : index
    %c0_124 = arith.constant 0 : index
    %c0_125 = arith.constant 0 : index
    %298 = vector.load %arg9[%c1_123, %c0_124, %c0_125] : memref<4x1x32xf32, #tpu.memory_space<vmem>>, vector<1x1x32xf32>
    %299 = vector.shape_cast %298 : vector<1x1x32xf32> to vector<1x32xf32>
    %cst_126 = arith.constant dense<0.000000e+00> : vector<16xf32>
    %300 = vector.multi_reduction <add>, %295, %cst_126 [1] : vector<16x32xf32> to vector<16xf32>
    %301 = vector.shape_cast %300 : vector<16xf32> to vector<16x1xf32>
    %cst_127 = arith.constant 3.200000e+01 : f32
    %302 = vector.broadcast %cst_127 : f32 to vector<16x1xf32>
    %303 = arith.divf %301, %302 : vector<16x1xf32>
    %304 = vector.broadcast %303 : vector<16x1xf32> to vector<16x32xf32>
    %305 = arith.subf %295, %304 : vector<16x32xf32>
    %306 = arith.mulf %305, %305 : vector<16x32xf32>
    %cst_128 = arith.constant dense<0.000000e+00> : vector<16xf32>
    %307 = vector.multi_reduction <add>, %306, %cst_128 [1] : vector<16x32xf32> to vector<16xf32>
    %308 = vector.shape_cast %307 : vector<16xf32> to vector<16x1xf32>
    %cst_129 = arith.constant 3.200000e+01 : f32
    %309 = vector.broadcast %cst_129 : f32 to vector<16x1xf32>
    %310 = arith.divf %308, %309 : vector<16x1xf32>
    %311 = vector.broadcast %303 : vector<16x1xf32> to vector<16x32xf32>
    %312 = arith.subf %295, %311 : vector<16x32xf32>
    %cst_130 = arith.constant 9.99999974E-6 : f32
    %313 = vector.broadcast %cst_130 : f32 to vector<16x1xf32>
    %314 = arith.addf %310, %313 : vector<16x1xf32>
    %315 = math.rsqrt %314 : vector<16x1xf32>
    %316 = vector.broadcast %315 : vector<16x1xf32> to vector<16x32xf32>
    %317 = arith.mulf %312, %316 : vector<16x32xf32>
    %318 = vector.broadcast %297 : vector<1x32xf32> to vector<16x32xf32>
    %319 = arith.mulf %317, %318 : vector<16x32xf32>
    %320 = vector.broadcast %299 : vector<1x32xf32> to vector<16x32xf32>
    %321 = arith.addf %319, %320 : vector<16x32xf32>
    %c1_131 = arith.constant 1 : index
    %c0_132 = arith.constant 0 : index
    %c0_133 = arith.constant 0 : index
    %322 = vector.load %arg10[%c1_131, %c0_132, %c0_133] : memref<4x32x64xf32, #tpu.memory_space<vmem>>, vector<1x32x64xf32>
    %323 = vector.shape_cast %322 : vector<1x32x64xf32> to vector<32x64xf32>
    %cst_134 = arith.constant dense<0.000000e+00> : vector<16x64xf32>
    %324 = tpu.matmul %321, %323, %cst_134 {dimension_numbers = #tpu.dot_dimension_numbers<[1], [0], [0], [1], [0, 0, 1, 1], [], []>} : vector<16x32xf32>, vector<32x64xf32>, vector<16x64xf32> -> vector<16x64xf32>
    %c1_135 = arith.constant 1 : index
    %c0_136 = arith.constant 0 : index
    %c0_137 = arith.constant 0 : index
    %325 = vector.load %arg11[%c1_135, %c0_136, %c0_137] : memref<4x1x64xf32, #tpu.memory_space<vmem>>, vector<1x1x64xf32>
    %326 = vector.shape_cast %325 : vector<1x1x64xf32> to vector<1x64xf32>
    %327 = vector.broadcast %326 : vector<1x64xf32> to vector<16x64xf32>
    %328 = arith.addf %324, %327 : vector<16x64xf32>
    %cst_138 = arith.constant 5.000000e-01 : f32
    %329 = vector.broadcast %cst_138 : f32 to vector<16x64xf32>
    %330 = arith.mulf %329, %328 : vector<16x64xf32>
    %cst_139 = arith.constant 4.471500e-02 : f32
    %331 = vector.broadcast %cst_139 : f32 to vector<16x64xf32>
    %332 = arith.mulf %331, %328 : vector<16x64xf32>
    %333 = arith.mulf %332, %328 : vector<16x64xf32>
    %334 = arith.mulf %333, %328 : vector<16x64xf32>
    %335 = arith.addf %328, %334 : vector<16x64xf32>
    %cst_140 = arith.constant 0.797884583 : f32
    %336 = vector.broadcast %cst_140 : f32 to vector<16x64xf32>
    %337 = arith.mulf %336, %335 : vector<16x64xf32>
    %338 = math.tanh %337 : vector<16x64xf32>
    %cst_141 = arith.constant 1.000000e+00 : f32
    %339 = vector.broadcast %cst_141 : f32 to vector<16x64xf32>
    %340 = arith.addf %339, %338 : vector<16x64xf32>
    %341 = arith.mulf %330, %340 : vector<16x64xf32>
    %c1_142 = arith.constant 1 : index
    %c0_143 = arith.constant 0 : index
    %c0_144 = arith.constant 0 : index
    %342 = vector.load %arg12[%c1_142, %c0_143, %c0_144] : memref<4x64x32xf32, #tpu.memory_space<vmem>>, vector<1x64x32xf32>
    %343 = vector.shape_cast %342 : vector<1x64x32xf32> to vector<64x32xf32>
    %cst_145 = arith.constant dense<0.000000e+00> : vector<16x32xf32>
    %344 = tpu.matmul %341, %343, %cst_145 {dimension_numbers = #tpu.dot_dimension_numbers<[1], [0], [0], [1], [0, 0, 1, 1], [], []>} : vector<16x64xf32>, vector<64x32xf32>, vector<16x32xf32> -> vector<16x32xf32>
    %c1_146 = arith.constant 1 : index
    %c0_147 = arith.constant 0 : index
    %c0_148 = arith.constant 0 : index
    %345 = vector.load %arg13[%c1_146, %c0_147, %c0_148] : memref<4x1x32xf32, #tpu.memory_space<vmem>>, vector<1x1x32xf32>
    %346 = vector.shape_cast %345 : vector<1x1x32xf32> to vector<1x32xf32>
    %347 = vector.broadcast %346 : vector<1x32xf32> to vector<16x32xf32>
    %348 = arith.addf %344, %347 : vector<16x32xf32>
    %349 = arith.addf %348, %321 : vector<16x32xf32>
    %c1_149 = arith.constant 1 : index
    %c0_150 = arith.constant 0 : index
    %c0_151 = arith.constant 0 : index
    %350 = vector.load %arg14[%c1_149, %c0_150, %c0_151] : memref<4x1x32xf32, #tpu.memory_space<vmem>>, vector<1x1x32xf32>
    %351 = vector.shape_cast %350 : vector<1x1x32xf32> to vector<1x32xf32>
    %c1_152 = arith.constant 1 : index
    %c0_153 = arith.constant 0 : index
    %c0_154 = arith.constant 0 : index
    %352 = vector.load %arg15[%c1_152, %c0_153, %c0_154] : memref<4x1x32xf32, #tpu.memory_space<vmem>>, vector<1x1x32xf32>
    %353 = vector.shape_cast %352 : vector<1x1x32xf32> to vector<1x32xf32>
    %cst_155 = arith.constant dense<0.000000e+00> : vector<16xf32>
    %354 = vector.multi_reduction <add>, %349, %cst_155 [1] : vector<16x32xf32> to vector<16xf32>
    %355 = vector.shape_cast %354 : vector<16xf32> to vector<16x1xf32>
    %cst_156 = arith.constant 3.200000e+01 : f32
    %356 = vector.broadcast %cst_156 : f32 to vector<16x1xf32>
    %357 = arith.divf %355, %356 : vector<16x1xf32>
    %358 = vector.broadcast %357 : vector<16x1xf32> to vector<16x32xf32>
    %359 = arith.subf %349, %358 : vector<16x32xf32>
    %360 = arith.mulf %359, %359 : vector<16x32xf32>
    %cst_157 = arith.constant dense<0.000000e+00> : vector<16xf32>
    %361 = vector.multi_reduction <add>, %360, %cst_157 [1] : vector<16x32xf32> to vector<16xf32>
    %362 = vector.shape_cast %361 : vector<16xf32> to vector<16x1xf32>
    %cst_158 = arith.constant 3.200000e+01 : f32
    %363 = vector.broadcast %cst_158 : f32 to vector<16x1xf32>
    %364 = arith.divf %362, %363 : vector<16x1xf32>
    %365 = vector.broadcast %357 : vector<16x1xf32> to vector<16x32xf32>
    %366 = arith.subf %349, %365 : vector<16x32xf32>
    %cst_159 = arith.constant 9.99999974E-6 : f32
    %367 = vector.broadcast %cst_159 : f32 to vector<16x1xf32>
    %368 = arith.addf %364, %367 : vector<16x1xf32>
    %369 = math.rsqrt %368 : vector<16x1xf32>
    %370 = vector.broadcast %369 : vector<16x1xf32> to vector<16x32xf32>
    %371 = arith.mulf %366, %370 : vector<16x32xf32>
    %372 = vector.broadcast %351 : vector<1x32xf32> to vector<16x32xf32>
    %373 = arith.mulf %371, %372 : vector<16x32xf32>
    %374 = vector.broadcast %353 : vector<1x32xf32> to vector<16x32xf32>
    %375 = arith.addf %373, %374 : vector<16x32xf32>
    %376 = arith.addf %202, %375 : vector<16x32xf32>
    %377 = arith.maximumf %203, %375 : vector<16x32xf32>
    %c2 = arith.constant 2 : index
    %c0_160 = arith.constant 0 : index
    %c0_161 = arith.constant 0 : index
    %378 = vector.load %arg4[%c2, %c0_160, %c0_161] : memref<4x32x96xf32, #tpu.memory_space<vmem>>, vector<1x32x96xf32>
    %379 = vector.shape_cast %378 : vector<1x32x96xf32> to vector<32x96xf32>
    %cst_162 = arith.constant dense<0.000000e+00> : vector<16x96xf32>
    %380 = tpu.matmul %375, %379, %cst_162 {dimension_numbers = #tpu.dot_dimension_numbers<[1], [0], [0], [1], [0, 0, 1, 1], [], []>} : vector<16x32xf32>, vector<32x96xf32>, vector<16x96xf32> -> vector<16x96xf32>
    %c2_163 = arith.constant 2 : index
    %c0_164 = arith.constant 0 : index
    %c0_165 = arith.constant 0 : index
    %381 = vector.load %arg5[%c2_163, %c0_164, %c0_165] : memref<4x1x96xf32, #tpu.memory_space<vmem>>, vector<1x1x96xf32>
    %382 = vector.shape_cast %381 : vector<1x1x96xf32> to vector<1x96xf32>
    %383 = vector.broadcast %382 : vector<1x96xf32> to vector<16x96xf32>
    %384 = arith.addf %380, %383 : vector<16x96xf32>
    %385 = vector.extract_strided_slice %29 {offsets = [0, 0], sizes = [1, 8], strides = [1, 1]} : vector<2x8xf32> to vector<1x8xf32>
    %386 = vector.extract_strided_slice %384 {offsets = [0, 0], sizes = [8, 16], strides = [1, 1]} : vector<16x96xf32> to vector<8x16xf32>
    %387 = vector.extract_strided_slice %384 {offsets = [0, 32], sizes = [8, 16], strides = [1, 1]} : vector<16x96xf32> to vector<8x16xf32>
    %388 = vector.extract_strided_slice %384 {offsets = [0, 64], sizes = [8, 16], strides = [1, 1]} : vector<16x96xf32> to vector<8x16xf32>
    %cst_166 = arith.constant dense<0.000000e+00> : vector<8x8xf32>
    %389 = tpu.matmul %386, %387, %cst_166 {dimension_numbers = #tpu.dot_dimension_numbers<[1], [1], [0], [0], [0, 0, 1, 0], [], []>} : vector<8x16xf32>, vector<8x16xf32>, vector<8x8xf32> -> vector<8x8xf32>
    %cst_167 = arith.constant 2.500000e-01 : f32
    %390 = vector.broadcast %cst_167 : f32 to vector<8x8xf32>
    %391 = arith.mulf %389, %390 : vector<8x8xf32>
    %392 = vector.broadcast %385 : vector<1x8xf32> to vector<8x8xf32>
    %393 = arith.addf %391, %392 : vector<8x8xf32>
    %cst_168 = arith.constant dense<0xFF800000> : vector<8xf32>
    %394 = vector.multi_reduction <maximumf>, %393, %cst_168 [1] : vector<8x8xf32> to vector<8xf32>
    %395 = vector.shape_cast %394 : vector<8xf32> to vector<8x1xf32>
    %396 = vector.broadcast %395 : vector<8x1xf32> to vector<8x8xf32>
    %397 = arith.subf %393, %396 : vector<8x8xf32>
    %398 = math.exp %397 : vector<8x8xf32>
    %cst_169 = arith.constant dense<0.000000e+00> : vector<8xf32>
    %399 = vector.multi_reduction <add>, %398, %cst_169 [1] : vector<8x8xf32> to vector<8xf32>
    %400 = vector.shape_cast %399 : vector<8xf32> to vector<8x1xf32>
    %401 = vector.broadcast %400 : vector<8x1xf32> to vector<8x8xf32>
    %402 = arith.divf %398, %401 : vector<8x8xf32>
    %cst_170 = arith.constant dense<0.000000e+00> : vector<8x16xf32>
    %403 = tpu.matmul %402, %388, %cst_170 {dimension_numbers = #tpu.dot_dimension_numbers<[1], [0], [0], [1], [0, 0, 1, 1], [], []>} : vector<8x8xf32>, vector<8x16xf32>, vector<8x16xf32> -> vector<8x16xf32>
    %404 = vector.extract_strided_slice %384 {offsets = [0, 16], sizes = [8, 16], strides = [1, 1]} : vector<16x96xf32> to vector<8x16xf32>
    %405 = vector.extract_strided_slice %384 {offsets = [0, 48], sizes = [8, 16], strides = [1, 1]} : vector<16x96xf32> to vector<8x16xf32>
    %406 = vector.extract_strided_slice %384 {offsets = [0, 80], sizes = [8, 16], strides = [1, 1]} : vector<16x96xf32> to vector<8x16xf32>
    %cst_171 = arith.constant dense<0.000000e+00> : vector<8x8xf32>
    %407 = tpu.matmul %404, %405, %cst_171 {dimension_numbers = #tpu.dot_dimension_numbers<[1], [1], [0], [0], [0, 0, 1, 0], [], []>} : vector<8x16xf32>, vector<8x16xf32>, vector<8x8xf32> -> vector<8x8xf32>
    %cst_172 = arith.constant 2.500000e-01 : f32
    %408 = vector.broadcast %cst_172 : f32 to vector<8x8xf32>
    %409 = arith.mulf %407, %408 : vector<8x8xf32>
    %410 = vector.broadcast %385 : vector<1x8xf32> to vector<8x8xf32>
    %411 = arith.addf %409, %410 : vector<8x8xf32>
    %cst_173 = arith.constant dense<0xFF800000> : vector<8xf32>
    %412 = vector.multi_reduction <maximumf>, %411, %cst_173 [1] : vector<8x8xf32> to vector<8xf32>
    %413 = vector.shape_cast %412 : vector<8xf32> to vector<8x1xf32>
    %414 = vector.broadcast %413 : vector<8x1xf32> to vector<8x8xf32>
    %415 = arith.subf %411, %414 : vector<8x8xf32>
    %416 = math.exp %415 : vector<8x8xf32>
    %cst_174 = arith.constant dense<0.000000e+00> : vector<8xf32>
    %417 = vector.multi_reduction <add>, %416, %cst_174 [1] : vector<8x8xf32> to vector<8xf32>
    %418 = vector.shape_cast %417 : vector<8xf32> to vector<8x1xf32>
    %419 = vector.broadcast %418 : vector<8x1xf32> to vector<8x8xf32>
    %420 = arith.divf %416, %419 : vector<8x8xf32>
    %cst_175 = arith.constant dense<0.000000e+00> : vector<8x16xf32>
    %421 = tpu.matmul %420, %406, %cst_175 {dimension_numbers = #tpu.dot_dimension_numbers<[1], [0], [0], [1], [0, 0, 1, 1], [], []>} : vector<8x8xf32>, vector<8x16xf32>, vector<8x16xf32> -> vector<8x16xf32>
    %422 = tpu.concatenate %403, %421 in 1 : vector<8x16xf32>, vector<8x16xf32> -> vector<8x32xf32>
    %423 = vector.extract_strided_slice %29 {offsets = [1, 0], sizes = [1, 8], strides = [1, 1]} : vector<2x8xf32> to vector<1x8xf32>
    %424 = vector.extract_strided_slice %384 {offsets = [8, 0], sizes = [8, 16], strides = [1, 1]} : vector<16x96xf32> to vector<8x16xf32>
    %425 = vector.extract_strided_slice %384 {offsets = [8, 32], sizes = [8, 16], strides = [1, 1]} : vector<16x96xf32> to vector<8x16xf32>
    %426 = vector.extract_strided_slice %384 {offsets = [8, 64], sizes = [8, 16], strides = [1, 1]} : vector<16x96xf32> to vector<8x16xf32>
    %cst_176 = arith.constant dense<0.000000e+00> : vector<8x8xf32>
    %427 = tpu.matmul %424, %425, %cst_176 {dimension_numbers = #tpu.dot_dimension_numbers<[1], [1], [0], [0], [0, 0, 1, 0], [], []>} : vector<8x16xf32>, vector<8x16xf32>, vector<8x8xf32> -> vector<8x8xf32>
    %cst_177 = arith.constant 2.500000e-01 : f32
    %428 = vector.broadcast %cst_177 : f32 to vector<8x8xf32>
    %429 = arith.mulf %427, %428 : vector<8x8xf32>
    %430 = vector.broadcast %423 : vector<1x8xf32> to vector<8x8xf32>
    %431 = arith.addf %429, %430 : vector<8x8xf32>
    %cst_178 = arith.constant dense<0xFF800000> : vector<8xf32>
    %432 = vector.multi_reduction <maximumf>, %431, %cst_178 [1] : vector<8x8xf32> to vector<8xf32>
    %433 = vector.shape_cast %432 : vector<8xf32> to vector<8x1xf32>
    %434 = vector.broadcast %433 : vector<8x1xf32> to vector<8x8xf32>
    %435 = arith.subf %431, %434 : vector<8x8xf32>
    %436 = math.exp %435 : vector<8x8xf32>
    %cst_179 = arith.constant dense<0.000000e+00> : vector<8xf32>
    %437 = vector.multi_reduction <add>, %436, %cst_179 [1] : vector<8x8xf32> to vector<8xf32>
    %438 = vector.shape_cast %437 : vector<8xf32> to vector<8x1xf32>
    %439 = vector.broadcast %438 : vector<8x1xf32> to vector<8x8xf32>
    %440 = arith.divf %436, %439 : vector<8x8xf32>
    %cst_180 = arith.constant dense<0.000000e+00> : vector<8x16xf32>
    %441 = tpu.matmul %440, %426, %cst_180 {dimension_numbers = #tpu.dot_dimension_numbers<[1], [0], [0], [1], [0, 0, 1, 1], [], []>} : vector<8x8xf32>, vector<8x16xf32>, vector<8x16xf32> -> vector<8x16xf32>
    %442 = vector.extract_strided_slice %384 {offsets = [8, 16], sizes = [8, 16], strides = [1, 1]} : vector<16x96xf32> to vector<8x16xf32>
    %443 = vector.extract_strided_slice %384 {offsets = [8, 48], sizes = [8, 16], strides = [1, 1]} : vector<16x96xf32> to vector<8x16xf32>
    %444 = vector.extract_strided_slice %384 {offsets = [8, 80], sizes = [8, 16], strides = [1, 1]} : vector<16x96xf32> to vector<8x16xf32>
    %cst_181 = arith.constant dense<0.000000e+00> : vector<8x8xf32>
    %445 = tpu.matmul %442, %443, %cst_181 {dimension_numbers = #tpu.dot_dimension_numbers<[1], [1], [0], [0], [0, 0, 1, 0], [], []>} : vector<8x16xf32>, vector<8x16xf32>, vector<8x8xf32> -> vector<8x8xf32>
    %cst_182 = arith.constant 2.500000e-01 : f32
    %446 = vector.broadcast %cst_182 : f32 to vector<8x8xf32>
    %447 = arith.mulf %445, %446 : vector<8x8xf32>
    %448 = vector.broadcast %423 : vector<1x8xf32> to vector<8x8xf32>
    %449 = arith.addf %447, %448 : vector<8x8xf32>
    %cst_183 = arith.constant dense<0xFF800000> : vector<8xf32>
    %450 = vector.multi_reduction <maximumf>, %449, %cst_183 [1] : vector<8x8xf32> to vector<8xf32>
    %451 = vector.shape_cast %450 : vector<8xf32> to vector<8x1xf32>
    %452 = vector.broadcast %451 : vector<8x1xf32> to vector<8x8xf32>
    %453 = arith.subf %449, %452 : vector<8x8xf32>
    %454 = math.exp %453 : vector<8x8xf32>
    %cst_184 = arith.constant dense<0.000000e+00> : vector<8xf32>
    %455 = vector.multi_reduction <add>, %454, %cst_184 [1] : vector<8x8xf32> to vector<8xf32>
    %456 = vector.shape_cast %455 : vector<8xf32> to vector<8x1xf32>
    %457 = vector.broadcast %456 : vector<8x1xf32> to vector<8x8xf32>
    %458 = arith.divf %454, %457 : vector<8x8xf32>
    %cst_185 = arith.constant dense<0.000000e+00> : vector<8x16xf32>
    %459 = tpu.matmul %458, %444, %cst_185 {dimension_numbers = #tpu.dot_dimension_numbers<[1], [0], [0], [1], [0, 0, 1, 1], [], []>} : vector<8x8xf32>, vector<8x16xf32>, vector<8x16xf32> -> vector<8x16xf32>
    %460 = tpu.concatenate %441, %459 in 1 : vector<8x16xf32>, vector<8x16xf32> -> vector<8x32xf32>
    %461 = tpu.concatenate %422, %460 in 0 : vector<8x32xf32>, vector<8x32xf32> -> vector<16x32xf32>
    %c2_186 = arith.constant 2 : index
    %c0_187 = arith.constant 0 : index
    %c0_188 = arith.constant 0 : index
    %462 = vector.load %arg6[%c2_186, %c0_187, %c0_188] : memref<4x32x32xf32, #tpu.memory_space<vmem>>, vector<1x32x32xf32>
    %463 = vector.shape_cast %462 : vector<1x32x32xf32> to vector<32x32xf32>
    %cst_189 = arith.constant dense<0.000000e+00> : vector<16x32xf32>
    %464 = tpu.matmul %461, %463, %cst_189 {dimension_numbers = #tpu.dot_dimension_numbers<[1], [0], [0], [1], [0, 0, 1, 1], [], []>} : vector<16x32xf32>, vector<32x32xf32>, vector<16x32xf32> -> vector<16x32xf32>
    %c2_190 = arith.constant 2 : index
    %c0_191 = arith.constant 0 : index
    %c0_192 = arith.constant 0 : index
    %465 = vector.load %arg7[%c2_190, %c0_191, %c0_192] : memref<4x1x32xf32, #tpu.memory_space<vmem>>, vector<1x1x32xf32>
    %466 = vector.shape_cast %465 : vector<1x1x32xf32> to vector<1x32xf32>
    %467 = vector.broadcast %466 : vector<1x32xf32> to vector<16x32xf32>
    %468 = arith.addf %464, %467 : vector<16x32xf32>
    %469 = arith.addf %468, %375 : vector<16x32xf32>
    %c2_193 = arith.constant 2 : index
    %c0_194 = arith.constant 0 : index
    %c0_195 = arith.constant 0 : index
    %470 = vector.load %arg8[%c2_193, %c0_194, %c0_195] : memref<4x1x32xf32, #tpu.memory_space<vmem>>, vector<1x1x32xf32>
    %471 = vector.shape_cast %470 : vector<1x1x32xf32> to vector<1x32xf32>
    %c2_196 = arith.constant 2 : index
    %c0_197 = arith.constant 0 : index
    %c0_198 = arith.constant 0 : index
    %472 = vector.load %arg9[%c2_196, %c0_197, %c0_198] : memref<4x1x32xf32, #tpu.memory_space<vmem>>, vector<1x1x32xf32>
    %473 = vector.shape_cast %472 : vector<1x1x32xf32> to vector<1x32xf32>
    %cst_199 = arith.constant dense<0.000000e+00> : vector<16xf32>
    %474 = vector.multi_reduction <add>, %469, %cst_199 [1] : vector<16x32xf32> to vector<16xf32>
    %475 = vector.shape_cast %474 : vector<16xf32> to vector<16x1xf32>
    %cst_200 = arith.constant 3.200000e+01 : f32
    %476 = vector.broadcast %cst_200 : f32 to vector<16x1xf32>
    %477 = arith.divf %475, %476 : vector<16x1xf32>
    %478 = vector.broadcast %477 : vector<16x1xf32> to vector<16x32xf32>
    %479 = arith.subf %469, %478 : vector<16x32xf32>
    %480 = arith.mulf %479, %479 : vector<16x32xf32>
    %cst_201 = arith.constant dense<0.000000e+00> : vector<16xf32>
    %481 = vector.multi_reduction <add>, %480, %cst_201 [1] : vector<16x32xf32> to vector<16xf32>
    %482 = vector.shape_cast %481 : vector<16xf32> to vector<16x1xf32>
    %cst_202 = arith.constant 3.200000e+01 : f32
    %483 = vector.broadcast %cst_202 : f32 to vector<16x1xf32>
    %484 = arith.divf %482, %483 : vector<16x1xf32>
    %485 = vector.broadcast %477 : vector<16x1xf32> to vector<16x32xf32>
    %486 = arith.subf %469, %485 : vector<16x32xf32>
    %cst_203 = arith.constant 9.99999974E-6 : f32
    %487 = vector.broadcast %cst_203 : f32 to vector<16x1xf32>
    %488 = arith.addf %484, %487 : vector<16x1xf32>
    %489 = math.rsqrt %488 : vector<16x1xf32>
    %490 = vector.broadcast %489 : vector<16x1xf32> to vector<16x32xf32>
    %491 = arith.mulf %486, %490 : vector<16x32xf32>
    %492 = vector.broadcast %471 : vector<1x32xf32> to vector<16x32xf32>
    %493 = arith.mulf %491, %492 : vector<16x32xf32>
    %494 = vector.broadcast %473 : vector<1x32xf32> to vector<16x32xf32>
    %495 = arith.addf %493, %494 : vector<16x32xf32>
    %c2_204 = arith.constant 2 : index
    %c0_205 = arith.constant 0 : index
    %c0_206 = arith.constant 0 : index
    %496 = vector.load %arg10[%c2_204, %c0_205, %c0_206] : memref<4x32x64xf32, #tpu.memory_space<vmem>>, vector<1x32x64xf32>
    %497 = vector.shape_cast %496 : vector<1x32x64xf32> to vector<32x64xf32>
    %cst_207 = arith.constant dense<0.000000e+00> : vector<16x64xf32>
    %498 = tpu.matmul %495, %497, %cst_207 {dimension_numbers = #tpu.dot_dimension_numbers<[1], [0], [0], [1], [0, 0, 1, 1], [], []>} : vector<16x32xf32>, vector<32x64xf32>, vector<16x64xf32> -> vector<16x64xf32>
    %c2_208 = arith.constant 2 : index
    %c0_209 = arith.constant 0 : index
    %c0_210 = arith.constant 0 : index
    %499 = vector.load %arg11[%c2_208, %c0_209, %c0_210] : memref<4x1x64xf32, #tpu.memory_space<vmem>>, vector<1x1x64xf32>
    %500 = vector.shape_cast %499 : vector<1x1x64xf32> to vector<1x64xf32>
    %501 = vector.broadcast %500 : vector<1x64xf32> to vector<16x64xf32>
    %502 = arith.addf %498, %501 : vector<16x64xf32>
    %cst_211 = arith.constant 5.000000e-01 : f32
    %503 = vector.broadcast %cst_211 : f32 to vector<16x64xf32>
    %504 = arith.mulf %503, %502 : vector<16x64xf32>
    %cst_212 = arith.constant 4.471500e-02 : f32
    %505 = vector.broadcast %cst_212 : f32 to vector<16x64xf32>
    %506 = arith.mulf %505, %502 : vector<16x64xf32>
    %507 = arith.mulf %506, %502 : vector<16x64xf32>
    %508 = arith.mulf %507, %502 : vector<16x64xf32>
    %509 = arith.addf %502, %508 : vector<16x64xf32>
    %cst_213 = arith.constant 0.797884583 : f32
    %510 = vector.broadcast %cst_213 : f32 to vector<16x64xf32>
    %511 = arith.mulf %510, %509 : vector<16x64xf32>
    %512 = math.tanh %511 : vector<16x64xf32>
    %cst_214 = arith.constant 1.000000e+00 : f32
    %513 = vector.broadcast %cst_214 : f32 to vector<16x64xf32>
    %514 = arith.addf %513, %512 : vector<16x64xf32>
    %515 = arith.mulf %504, %514 : vector<16x64xf32>
    %c2_215 = arith.constant 2 : index
    %c0_216 = arith.constant 0 : index
    %c0_217 = arith.constant 0 : index
    %516 = vector.load %arg12[%c2_215, %c0_216, %c0_217] : memref<4x64x32xf32, #tpu.memory_space<vmem>>, vector<1x64x32xf32>
    %517 = vector.shape_cast %516 : vector<1x64x32xf32> to vector<64x32xf32>
    %cst_218 = arith.constant dense<0.000000e+00> : vector<16x32xf32>
    %518 = tpu.matmul %515, %517, %cst_218 {dimension_numbers = #tpu.dot_dimension_numbers<[1], [0], [0], [1], [0, 0, 1, 1], [], []>} : vector<16x64xf32>, vector<64x32xf32>, vector<16x32xf32> -> vector<16x32xf32>
    %c2_219 = arith.constant 2 : index
    %c0_220 = arith.constant 0 : index
    %c0_221 = arith.constant 0 : index
    %519 = vector.load %arg13[%c2_219, %c0_220, %c0_221] : memref<4x1x32xf32, #tpu.memory_space<vmem>>, vector<1x1x32xf32>
    %520 = vector.shape_cast %519 : vector<1x1x32xf32> to vector<1x32xf32>
    %521 = vector.broadcast %520 : vector<1x32xf32> to vector<16x32xf32>
    %522 = arith.addf %518, %521 : vector<16x32xf32>
    %523 = arith.addf %522, %495 : vector<16x32xf32>
    %c2_222 = arith.constant 2 : index
    %c0_223 = arith.constant 0 : index
    %c0_224 = arith.constant 0 : index
    %524 = vector.load %arg14[%c2_222, %c0_223, %c0_224] : memref<4x1x32xf32, #tpu.memory_space<vmem>>, vector<1x1x32xf32>
    %525 = vector.shape_cast %524 : vector<1x1x32xf32> to vector<1x32xf32>
    %c2_225 = arith.constant 2 : index
    %c0_226 = arith.constant 0 : index
    %c0_227 = arith.constant 0 : index
    %526 = vector.load %arg15[%c2_225, %c0_226, %c0_227] : memref<4x1x32xf32, #tpu.memory_space<vmem>>, vector<1x1x32xf32>
    %527 = vector.shape_cast %526 : vector<1x1x32xf32> to vector<1x32xf32>
    %cst_228 = arith.constant dense<0.000000e+00> : vector<16xf32>
    %528 = vector.multi_reduction <add>, %523, %cst_228 [1] : vector<16x32xf32> to vector<16xf32>
    %529 = vector.shape_cast %528 : vector<16xf32> to vector<16x1xf32>
    %cst_229 = arith.constant 3.200000e+01 : f32
    %530 = vector.broadcast %cst_229 : f32 to vector<16x1xf32>
    %531 = arith.divf %529, %530 : vector<16x1xf32>
    %532 = vector.broadcast %531 : vector<16x1xf32> to vector<16x32xf32>
    %533 = arith.subf %523, %532 : vector<16x32xf32>
    %534 = arith.mulf %533, %533 : vector<16x32xf32>
    %cst_230 = arith.constant dense<0.000000e+00> : vector<16xf32>
    %535 = vector.multi_reduction <add>, %534, %cst_230 [1] : vector<16x32xf32> to vector<16xf32>
    %536 = vector.shape_cast %535 : vector<16xf32> to vector<16x1xf32>
    %cst_231 = arith.constant 3.200000e+01 : f32
    %537 = vector.broadcast %cst_231 : f32 to vector<16x1xf32>
    %538 = arith.divf %536, %537 : vector<16x1xf32>
    %539 = vector.broadcast %531 : vector<16x1xf32> to vector<16x32xf32>
    %540 = arith.subf %523, %539 : vector<16x32xf32>
    %cst_232 = arith.constant 9.99999974E-6 : f32
    %541 = vector.broadcast %cst_232 : f32 to vector<16x1xf32>
    %542 = arith.addf %538, %541 : vector<16x1xf32>
    %543 = math.rsqrt %542 : vector<16x1xf32>
    %544 = vector.broadcast %543 : vector<16x1xf32> to vector<16x32xf32>
    %545 = arith.mulf %540, %544 : vector<16x32xf32>
    %546 = vector.broadcast %525 : vector<1x32xf32> to vector<16x32xf32>
    %547 = arith.mulf %545, %546 : vector<16x32xf32>
    %548 = vector.broadcast %527 : vector<1x32xf32> to vector<16x32xf32>
    %549 = arith.addf %547, %548 : vector<16x32xf32>
    %550 = arith.addf %376, %549 : vector<16x32xf32>
    %551 = arith.maximumf %377, %549 : vector<16x32xf32>
    %cst_233 = arith.constant 2.500000e-01 : f32
    %552 = vector.broadcast %cst_233 : f32 to vector<16x32xf32>
    %553 = arith.mulf %550, %552 : vector<16x32xf32>
    %c0_234 = arith.constant 0 : index
    %c0_235 = arith.constant 0 : index
    %554 = vector.load %arg16[%c0_234, %c0_235] : memref<32x2xf32, #tpu.memory_space<vmem>>, vector<32x2xf32>
    %cst_236 = arith.constant dense<0.000000e+00> : vector<16x2xf32>
    %555 = tpu.matmul %553, %554, %cst_236 {dimension_numbers = #tpu.dot_dimension_numbers<[1], [0], [0], [1], [0, 0, 1, 1], [], []>} : vector<16x32xf32>, vector<32x2xf32>, vector<16x2xf32> -> vector<16x2xf32>
    %c0_237 = arith.constant 0 : index
    %c0_238 = arith.constant 0 : index
    %556 = vector.load %arg17[%c0_237, %c0_238] : memref<32x2xf32, #tpu.memory_space<vmem>>, vector<32x2xf32>
    %cst_239 = arith.constant dense<0.000000e+00> : vector<16x2xf32>
    %557 = tpu.matmul %551, %556, %cst_239 {dimension_numbers = #tpu.dot_dimension_numbers<[1], [0], [0], [1], [0, 0, 1, 1], [], []>} : vector<16x32xf32>, vector<32x2xf32>, vector<16x2xf32> -> vector<16x2xf32>
    %558 = arith.addf %555, %557 : vector<16x2xf32>
    %c0_240 = arith.constant 0 : index
    %c0_241 = arith.constant 0 : index
    %559 = vector.load %arg18[%c0_240, %c0_241] : memref<1x2xf32, #tpu.memory_space<vmem>>, vector<1x2xf32>
    %560 = vector.broadcast %559 : vector<1x2xf32> to vector<16x2xf32>
    %561 = arith.addf %558, %560 : vector<16x2xf32>
    %c0_242 = arith.constant 0 : index
    %c0_243 = arith.constant 0 : index
    %562 = vector.load %arg19[%c0_242, %c0_243] : memref<16x2xf32, #tpu.memory_space<vmem>>, vector<16x2xf32>
    tpu.vector_store %arg19[%c0_242, %c0_243], %561 {strides = array<i32>} : memref<16x2xf32, #tpu.memory_space<vmem>>, vector<16x2xf32>,
    return
  }
}

</mosaic_0001>

<llo_original>
// kernel: nlp_model_forward.1
$region0: #{nlp_model_forward.1}
  #allocation0 [shape = 'u32[]', space=smem, size = 0x4, offset = 0x4, fixed_abs, tag = 'smem constant byte address 0x4 - core index']
  #allocation1 [shape = 'u32[144,128]{1,0:T(1,128)}', space=vmem, size = 0x12000, scoped, tag = 'internal scratch']
  %s0 = inlined_call_operand.vmem [shape: f32[16,32], index: 0, kind: input, shape index: {}]
  %s1 = inlined_call_operand.vmem [shape: f32[2,8], index: 1, kind: input, shape index: {}]
  %s2 = inlined_call_operand.vmem [shape: f32[1,32], index: 2, kind: input, shape index: {}]
  %s3 = inlined_call_operand.vmem [shape: f32[1,32], index: 3, kind: input, shape index: {}]
  %s4 = inlined_call_operand.vmem [shape: f32[4,32,96], index: 4, kind: input, shape index: {}]
  %s5 = inlined_call_operand.vmem [shape: f32[4,1,96], index: 5, kind: input, shape index: {}]
  %s6 = inlined_call_operand.vmem [shape: f32[4,32,32], index: 6, kind: input, shape index: {}]
  %s7 = inlined_call_operand.vmem [shape: f32[4,1,32], index: 7, kind: input, shape index: {}]
  %s8 = inlined_call_operand.vmem [shape: f32[4,1,32], index: 8, kind: input, shape index: {}]
  %s9 = inlined_call_operand.vmem [shape: f32[4,1,32], index: 9, kind: input, shape index: {}]
  %s10 = inlined_call_operand.vmem [shape: f32[4,32,64], index: 10, kind: input, shape index: {}]
  %s11 = inlined_call_operand.vmem [shape: f32[4,1,64], index: 11, kind: input, shape index: {}]
  %s12 = inlined_call_operand.vmem [shape: f32[4,64,32], index: 12, kind: input, shape index: {}]
  %s13 = inlined_call_operand.vmem [shape: f32[4,1,32], index: 13, kind: input, shape index: {}]
  %s14 = inlined_call_operand.vmem [shape: f32[4,1,32], index: 14, kind: input, shape index: {}]
  %s15 = inlined_call_operand.vmem [shape: f32[4,1,32], index: 15, kind: input, shape index: {}]
  %s16 = inlined_call_operand.vmem [shape: f32[32,2], index: 16, kind: input, shape index: {}]
  %s17 = inlined_call_operand.vmem [shape: f32[32,2], index: 17, kind: input, shape index: {}]
  %s18 = inlined_call_operand.vmem [shape: f32[1,2], index: 18, kind: input, shape index: {}]
  %s19 = inlined_call_operand.vmem [shape: f32[16,2], index: 19, kind: output, shape index: {}]
  %s20 = sld [smem:[#allocation0]]
  $region86: #{nlp_model_forward.1} parent=0
    _
  %s22 = ssub.s32 1, %s20
  %s23 = scalar_select 0, %s22, %s20
  // Predicated region
  $region2: #{nlp_model_forward.1} parent=0 // pred_check
    _
  $region3: #{nlp_model_forward.1} parent=0 // pred_check_branch
    %25 = sbr.rel (0) target = $region5
  $region4: #{nlp_model_forward.1} parent=0 // pred_region
    _
  $region5: #{nlp_model_forward.1} parent=0 // pred_fallthru
    _
  // Predicated region
  $region6: #{nlp_model_forward.1} parent=0 // pred_check
    _
  $region7: #{nlp_model_forward.1} parent=0 // pred_check_branch
    %27 = sbr.rel (0) target = $region9
  $region8: #{nlp_model_forward.1} parent=0 // pred_region
    _
  $region9: #{nlp_model_forward.1} parent=0 // pred_fallthru
    _
  // Predicated region
  $region10: #{nlp_model_forward.1} parent=0 // pred_check
    _
  $region11: #{nlp_model_forward.1} parent=0 // pred_check_branch
    %29 = sbr.rel (0) target = $region13
  $region12: #{nlp_model_forward.1} parent=0 // pred_region
    _
  $region13: #{nlp_model_forward.1} parent=0 // pred_fallthru
    _
  // Predicated region
  $region14: #{nlp_model_forward.1} parent=0 // pred_check
    _
  $region15: #{nlp_model_forward.1} parent=0 // pred_check_branch
    %31 = sbr.rel (0) target = $region17
  $region16: #{nlp_model_forward.1} parent=0 // pred_region
    _
  $region17: #{nlp_model_forward.1} parent=0 // pred_fallthru
    _
  // Predicated region
  $region18: #{nlp_model_forward.1} parent=0 // pred_check
    _
  $region19: #{nlp_model_forward.1} parent=0 // pred_check_branch
    %33 = sbr.rel (0) target = $region21
  $region20: #{nlp_model_forward.1} parent=0 // pred_region
    _
  $region21: #{nlp_model_forward.1} parent=0 // pred_fallthru
    _
  // Predicated region
  $region22: #{nlp_model_forward.1} parent=0 // pred_check
    _
  $region23: #{nlp_model_forward.1} parent=0 // pred_check_branch
    %35 = sbr.rel (0) target = $region25
  $region24: #{nlp_model_forward.1} parent=0 // pred_region
    _
  $region25: #{nlp_model_forward.1} parent=0 // pred_fallthru
    _
  // Predicated region
  $region26: #{nlp_model_forward.1} parent=0 // pred_check
    _
  $region27: #{nlp_model_forward.1} parent=0 // pred_check_branch
    %37 = sbr.rel (0) target = $region29
  $region28: #{nlp_model_forward.1} parent=0 // pred_region
    _
  $region29: #{nlp_model_forward.1} parent=0 // pred_fallthru
    _
  // Predicated region
  $region30: #{nlp_model_forward.1} parent=0 // pred_check
    _
  $region31: #{nlp_model_forward.1} parent=0 // pred_check_branch
    %39 = sbr.rel (0) target = $region33
  $region32: #{nlp_model_forward.1} parent=0 // pred_region
    _
  $region33: #{nlp_model_forward.1} parent=0 // pred_fallthru
    _
  // Predicated region
  $region34: #{nlp_model_forward.1} parent=0 // pred_check
    _
  $region35: #{nlp_model_forward.1} parent=0 // pred_check_branch
    %41 = sbr.rel (0) target = $region37
  $region36: #{nlp_model_forward.1} parent=0 // pred_region
    _
  $region37: #{nlp_model_forward.1} parent=0 // pred_fallthru
    _
  // Predicated region
  $region38: #{nlp_model_forward.1} parent=0 // pred_check
    _
  $region39: #{nlp_model_forward.1} parent=0 // pred_check_branch
    %43 = sbr.rel (0) target = $region41
  $region40: #{nlp_model_forward.1} parent=0 // pred_region
    _
  $region41: #{nlp_model_forward.1} parent=0 // pred_fallthru
    _
  // Predicated region
  $region42: #{nlp_model_forward.1} parent=0 // pred_check
    _
  $region43: #{nlp_model_forward.1} parent=0 // pred_check_branch
    %45 = sbr.rel (0) target = $region45
  $region44: #{nlp_model_forward.1} parent=0 // pred_region
    _
  $region45: #{nlp_model_forward.1} parent=0 // pred_fallthru
    _
  // Predicated region
  $region46: #{nlp_model_forward.1} parent=0 // pred_check
    _
  $region47: #{nlp_model_forward.1} parent=0 // pred_check_branch
    %47 = sbr.rel (0) target = $region49
  $region48: #{nlp_model_forward.1} parent=0 // pred_region
    _
  $region49: #{nlp_model_forward.1} parent=0 // pred_fallthru
    _
  // Predicated region
  $region50: #{nlp_model_forward.1} parent=0 // pred_check
    _
  $region51: #{nlp_model_forward.1} parent=0 // pred_check_branch
    %49 = sbr.rel (0) target = $region53
  $region52: #{nlp_model_forward.1} parent=0 // pred_region
    _
  $region53: #{nlp_model_forward.1} parent=0 // pred_fallthru
    _
  // Predicated region
  $region54: #{nlp_model_forward.1} parent=0 // pred_check
    _
  $region55: #{nlp_model_forward.1} parent=0 // pred_check_branch
    %51 = sbr.rel (0) target = $region57
  $region56: #{nlp_model_forward.1} parent=0 // pred_region
    _
  $region57: #{nlp_model_forward.1} parent=0 // pred_fallthru
    _
  // Predicated region
  $region58: #{nlp_model_forward.1} parent=0 // pred_check
    _
  $region59: #{nlp_model_forward.1} parent=0 // pred_check_branch
    %53 = sbr.rel (0) target = $region61
  $region60: #{nlp_model_forward.1} parent=0 // pred_region
    _
  $region61: #{nlp_model_forward.1} parent=0 // pred_fallthru
    _
  // Predicated region
  $region62: #{nlp_model_forward.1} parent=0 // pred_check
    _
  $region63: #{nlp_model_forward.1} parent=0 // pred_check_branch
    %55 = sbr.rel (0) target = $region65
  $region64: #{nlp_model_forward.1} parent=0 // pred_region
    _
  $region65: #{nlp_model_forward.1} parent=0 // pred_fallthru
    _
  // Predicated region
  $region66: #{nlp_model_forward.1} parent=0 // pred_check
    _
  $region67: #{nlp_model_forward.1} parent=0 // pred_check_branch
    %57 = sbr.rel (0) target = $region69
  $region68: #{nlp_model_forward.1} parent=0 // pred_region
    _
  $region69: #{nlp_model_forward.1} parent=0 // pred_fallthru
    _
  // Predicated region
  $region70: #{nlp_model_forward.1} parent=0 // pred_check
    _
  $region71: #{nlp_model_forward.1} parent=0 // pred_check_branch
    %59 = sbr.rel (0) target = $region73
  $region72: #{nlp_model_forward.1} parent=0 // pred_region
    _
  $region73: #{nlp_model_forward.1} parent=0 // pred_fallthru
    _
  // Predicated region
  $region74: #{nlp_model_forward.1} parent=0 // pred_check
    _
  $region75: #{nlp_model_forward.1} parent=0 // pred_check_branch
    %61 = sbr.rel (0) target = $region77
  $region76: #{nlp_model_forward.1} parent=0 // pred_region
    _
  $region77: #{nlp_model_forward.1} parent=0 // pred_fallthru
    _
  %v62 = vld [vmem:[%s0] sm:$0xff]
  %v63 = vld [vmem:[%s0 + $0x8] sm:$0xff]
  %v64 = vld [vmem:[%s2] sm:$0x1]
  %v65 = vld [vmem:[%s3] sm:$0x1]
  %vm66 = vcmask 261120
  %v67 = vsel %vm66, %v62, 0.0
  %68 = vadd.xlane.f32.xlu0 %v67
  %v69 = vpop.xlane.xlu0 %68
  %v70 = vsel %vm66, %v63, 0.0
  %71 = vadd.xlane.f32.xlu0 %v70
  %v72 = vpop.xlane.xlu0 %71
  %v73 = vrcp.pop 32.0
  %v74 = vmul.f32 %v69, %v73
  %v75 = vmul.f32 %v72, %v73
  %v76 = vsub.f32 %v62, %v74
  %v77 = vsub.f32 %v63, %v75
  %v78 = vmul.f32 %v76, %v76
  %v79 = vmul.f32 %v77, %v77
  %v80 = vsel %vm66, %v78, 0.0
  %81 = vadd.xlane.f32.xlu0 %v80
  %v82 = vpop.xlane.xlu0 %81
  %v83 = vsel %vm66, %v79, 0.0
  %84 = vadd.xlane.f32.xlu0 %v83
  %v85 = vpop.xlane.xlu0 %84
  %v86 = vmul.f32 %v82, %v73
  %v87 = vmul.f32 %v85, %v73
  %v88 = vadd.f32 %v86, 1e-05
  %v89 = vadd.f32 %v87, 1e-05
  %v90 = vrsqrt.pop %v88
  %v91 = vrsqrt.pop %v89
  %v92 = vmul.f32 %v76, %v90
  %v93 = vmul.f32 %v77, %v91
  %v95 = vlaneseq
  %v96 = vshrl.u32 %v95, 7
  %v97 = vsub.s32 0, %v96
  %v98 = vrot.slane %v64, %v97
  %v100 = vmul.f32 %v92, %v98
  %v101 = vmul.f32 %v93, %v98
  %v103 = vlaneseq
  %v104 = vshrl.u32 %v103, 7
  %v105 = vsub.s32 0, %v104
  %v106 = vrot.slane %v65, %v105
  %v108 = vadd.f32 %v100, %v106
  %v109 = vadd.f32 %v101, %v106
  %v110 = vld [vmem:[%s1] sm:$0x3]
  %v111 = vsub.f32 1.0, %v110
  %v112 = vmul.f32 %v111, -1e+09
  %v113 = vld [vmem:[%s4] sm:$0xff]
  %v114 = vld [vmem:[%s4 + $0x8] sm:$0xff]
  %v115 = vld [vmem:[%s4 + $0x10] sm:$0xff]
  %v116 = vld [vmem:[%s4 + $0x18] sm:$0xff]
  %v117 = vld [vmem:[%s5] sm:$0x1]
  %v119 = vlaneseq
  %v120 = vshrl.u32 %v119, 7
  %v121 = vsub.s32 0, %v120
  %v122 = vrot.slane %v117, %v121
  %v125 = vsel %vm66, %v108, 0
  %v128 = vsel %vm66, %v109, 0
  %130 = vmatprep.subr.mxu0 0.0
  %131 = vmatpush1.msra.mxu0 0.0
  %132 = vmatprep.subr.mxu0 0.0
  %133 = vmatpush1.msra.mxu0 0.0
  %134 = vmatprep.subr.mxu0 0.0
  %135 = vmatpush1.msra.mxu0 0.0
  %136 = vmatprep.subr.mxu0 0.0
  %137 = vmatpush1.msra.mxu0 0.0
  %138 = vmatprep.subr.mxu0 0.0
  %139 = vmatpush1.msra.mxu0 0.0
  %140 = vmatprep.subr.mxu0 0.0
  %141 = vmatpush1.msra.mxu0 0.0
  %142 = vmatprep.subr.mxu0 0.0
  %143 = vmatpush1.msra.mxu0 0.0
  %144 = vmatprep.subr.mxu0 0.0
  %145 = vmatpush1.msra.mxu0 0.0
  %146 = vmatprep.subr.mxu0 0.0
  %147 = vmatpush1.msra.mxu0 0.0
  %148 = vmatprep.subr.mxu0 0.0
  %149 = vmatpush1.msra.mxu0 0.0
  %150 = vmatprep.subr.mxu0 0.0
  %151 = vmatpush1.msra.mxu0 0.0
  %152 = vmatprep.subr.mxu0 0.0
  %153 = vmatpush1.msra.mxu0 0.0
  %154 = vmatprep.subr.mxu0 0.0
  %155 = vmatpush1.msra.mxu0 %v116
  %156 = vmatprep.subr.mxu0 0.0
  %157 = vmatpush1.msra.mxu0 %v115
  %158 = vmatprep.subr.mxu0 0.0
  %159 = vmatpush1.msra.mxu0 %v114
  %160 = vmatprep.subr.mxu0 0.0
  %161 = vmatpush1.msra.mxu0 %v113
  %162 = vmatprep.subr.mxu0 0.0
  %163 = vmatpush2.msra.mxu0 0.0
  %164 = vmatprep.subr.mxu0 0.0
  %165 = vmatpush2.msra.mxu0 0.0
  %166 = vmatprep.subr.mxu0 0.0
  %167 = vmatpush2.msra.mxu0 0.0
  %168 = vmatprep.subr.mxu0 0.0
  %169 = vmatpush2.msra.mxu0 0.0
  %170 = vmatprep.subr.mxu0 0.0
  %171 = vmatpush2.msra.mxu0 0.0
  %172 = vmatprep.subr.mxu0 0.0
  %173 = vmatpush2.msra.mxu0 0.0
  %174 = vmatprep.subr.mxu0 0.0
  %175 = vmatpush2.msra.mxu0 0.0
  %176 = vmatprep.subr.mxu0 0.0
  %177 = vmatpush2.msra.mxu0 0.0
  %178 = vmatprep.subr.mxu0 0.0
  %179 = vmatpush2.msra.mxu0 0.0
  %180 = vmatprep.subr.mxu0 0.0
  %181 = vmatpush2.msra.mxu0 0.0
  %182 = vmatprep.subr.mxu0 0.0
  %183 = vmatpush2.msra.mxu0 0.0
  %184 = vmatprep.subr.mxu0 0.0
  %185 = vmatpush2.msra.mxu0 0.0
  %186 = vmatprep.subr.mxu0 0.0
  %187 = vmatpush2.msra.mxu0 0.0
  %188 = vmatprep.subr.mxu0 0.0
  %189 = vmatpush2.msra.mxu0 0.0
  %190 = vmatprep.subr.mxu0 0.0
  %191 = vmatpush2.msra.mxu0 0.0
  %192 = vmatprep.subr.mxu0 0.0
  %193 = vmatpush2.msra.mxu0 0.0
  %194 = vmatprep.mubr.f32.mxu0 0.0
  %195 = vmatmul.mubr.f32.gmra.mxu0 %v125
  %v196 = vpop.f32.mrf.mxu0
  %v197 = vadd.f32 %v122, %v196
  %v198 = vpop.f32.mrf.mxu0
  %199 = vmatprep.mubr.f32.mxu0 0.0
  %200 = vmatmul.mubr.f32.gmra.mxu0 %v128
  %v201 = vpop.f32.mrf.mxu0
  %v202 = vadd.f32 %v122, %v201
  %v203 = vpop.f32.mrf.mxu0
  %204 = vdwg.mxu0
  %206 = vrot.lane.b32.xlu0 %v197, 96
  %v207 = vpop.permute.xlu0 %206
  %vm208 = vcmask 130048
  %v209 = vsel %vm208, %v197, 0
  %v211 = vsel %vm208, %v207, 0
  %213 = vmatprep.subr.mxu0 0.0
  %214 = vmatpush1.xpose.msra.mxu0 0.0
  %215 = vmatprep.subr.mxu0 0.0
  %216 = vmatpush1.xpose.msra.mxu0 0.0
  %217 = vmatprep.subr.mxu0 0.0
  %218 = vmatpush1.xpose.msra.mxu0 0.0
  %219 = vmatprep.subr.mxu0 0.0
  %220 = vmatpush1.xpose.msra.mxu0 0.0
  %221 = vmatprep.subr.mxu0 0.0
  %222 = vmatpush1.xpose.msra.mxu0 0.0
  %223 = vmatprep.subr.mxu0 0.0
  %224 = vmatpush1.xpose.msra.mxu0 0.0
  %225 = vmatprep.subr.mxu0 0.0
  %226 = vmatpush1.xpose.msra.mxu0 0.0
  %227 = vmatprep.subr.mxu0 0.0
  %228 = vmatpush1.xpose.msra.mxu0 0.0
  %229 = vmatprep.subr.mxu0 0.0
  %230 = vmatpush1.xpose.msra.mxu0 0.0
  %231 = vmatprep.subr.mxu0 0.0
  %232 = vmatpush1.xpose.msra.mxu0 0.0
  %233 = vmatprep.subr.mxu0 0.0
  %234 = vmatpush1.xpose.msra.mxu0 0.0
  %235 = vmatprep.subr.mxu0 0.0
  %236 = vmatpush1.xpose.msra.mxu0 0.0
  %237 = vmatprep.subr.mxu0 0.0
  %238 = vmatpush1.xpose.msra.mxu0 0.0
  %239 = vmatprep.subr.mxu0 0.0
  %240 = vmatpush1.xpose.msra.mxu0 0.0
  %241 = vmatprep.subr.mxu0 0.0
  %242 = vmatpush1.xpose.msra.mxu0 0.0
  %243 = vmatprep.subr.mxu0 0.0
  %244 = vmatpush1.xpose.msra.mxu0 %v211
  %245 = vmatprep.subr.mxu0 0.0
  %246 = vmatpush2.xpose.msra.mxu0 0.0
  %247 = vmatprep.subr.mxu0 0.0
  %248 = vmatpush2.xpose.msra.mxu0 0.0
  %249 = vmatprep.subr.mxu0 0.0
  %250 = vmatpush2.xpose.msra.mxu0 0.0
  %251 = vmatprep.subr.mxu0 0.0
  %252 = vmatpush2.xpose.msra.mxu0 0.0
  %253 = vmatprep.subr.mxu0 0.0
  %254 = vmatpush2.xpose.msra.mxu0 0.0
  %255 = vmatprep.subr.mxu0 0.0
  %256 = vmatpush2.xpose.msra.mxu0 0.0
  %257 = vmatprep.subr.mxu0 0.0
  %258 = vmatpush2.xpose.msra.mxu0 0.0
  %259 = vmatprep.subr.mxu0 0.0
  %260 = vmatpush2.xpose.msra.mxu0 0.0
  %261 = vmatprep.subr.mxu0 0.0
  %262 = vmatpush2.xpose.msra.mxu0 0.0
  %263 = vmatprep.subr.mxu0 0.0
  %264 = vmatpush2.xpose.msra.mxu0 0.0
  %265 = vmatprep.subr.mxu0 0.0
  %266 = vmatpush2.xpose.msra.mxu0 0.0
  %267 = vmatprep.subr.mxu0 0.0
  %268 = vmatpush2.xpose.msra.mxu0 0.0
  %269 = vmatprep.subr.mxu0 0.0
  %270 = vmatpush2.xpose.msra.mxu0 0.0
  %271 = vmatprep.subr.mxu0 0.0
  %272 = vmatpush2.xpose.msra.mxu0 0.0
  %273 = vmatprep.subr.mxu0 0.0
  %274 = vmatpush2.xpose.msra.mxu0 0.0
  %275 = vmatprep.subr.mxu0 0.0
  %276 = vmatpush2.xpose.msra.mxu0 0.0
  %277 = vmatprep.mubr.f32.mxu0 0.0
  %278 = vmatmul.mubr.f32.gmra.mxu0 %v209
  %v279 = vpop.f32.mrf.mxu0
  %v280 = vadd.f32 0.0, %v279
  %v281 = vpop.f32.mrf.mxu0
  %282 = vdwg.mxu0
  %v283 = vmul.f32 %v280, 0.25
  %v284 = vlaneseq
  %v285 = vshrl.u32 %v284, 7
  %v286 = vsub.s32 0, %v285
  %v287 = vrot.slane %v112, %v286
  %v288 = vadd.f32 %v283, %v287
  %vm289 = vcmask 64512
  %v290 = vsel %vm289, %v288, -inf
  %291 = vmax.xlane.f32.xlu0 %v290
  %v292 = vpop.xlane.xlu0 %291
  %v293 = vsub.f32 %v288, %v292
  %v294 = vmul.f32 %v293, 1.442695
  %v295 = vpow.pop %v294
  %v296 = vsel %vm289, %v295, 0.0
  %297 = vadd.xlane.f32.xlu0 %v296
  %v298 = vpop.xlane.xlu0 %297
  %v299 = vrcp.pop %v298
  %v300 = vmul.f32 %v295, %v299
  %301 = vrot.lane.b32.xlu0 %v197, 64
  %v302 = vpop.permute.xlu0 %301
  %v305 = vsel %vm289, %v300, 0
  %307 = vmatprep.subr.mxu0 0.0
  %308 = vmatpush1.msra.mxu0 0.0
  %309 = vmatprep.subr.mxu0 0.0
  %310 = vmatpush1.msra.mxu0 0.0
  %311 = vmatprep.subr.mxu0 0.0
  %312 = vmatpush1.msra.mxu0 0.0
  %313 = vmatprep.subr.mxu0 0.0
  %314 = vmatpush1.msra.mxu0 0.0
  %315 = vmatprep.subr.mxu0 0.0
  %316 = vmatpush1.msra.mxu0 0.0
  %317 = vmatprep.subr.mxu0 0.0
  %318 = vmatpush1.msra.mxu0 0.0
  %319 = vmatprep.subr.mxu0 0.0
  %320 = vmatpush1.msra.mxu0 0.0
  %321 = vmatprep.subr.mxu0 0.0
  %322 = vmatpush1.msra.mxu0 0.0
  %323 = vmatprep.subr.mxu0 0.0
  %324 = vmatpush1.msra.mxu0 0.0
  %325 = vmatprep.subr.mxu0 0.0
  %326 = vmatpush1.msra.mxu0 0.0
  %327 = vmatprep.subr.mxu0 0.0
  %328 = vmatpush1.msra.mxu0 0.0
  %329 = vmatprep.subr.mxu0 0.0
  %330 = vmatpush1.msra.mxu0 0.0
  %331 = vmatprep.subr.mxu0 0.0
  %332 = vmatpush1.msra.mxu0 0.0
  %333 = vmatprep.subr.mxu0 0.0
  %334 = vmatpush1.msra.mxu0 0.0
  %335 = vmatprep.subr.mxu0 0.0
  %336 = vmatpush1.msra.mxu0 0.0
  %337 = vmatprep.subr.mxu0 0.0
  %338 = vmatpush1.msra.mxu0 %v302
  %339 = vmatprep.subr.mxu0 0.0
  %340 = vmatpush2.msra.mxu0 0.0
  %341 = vmatprep.subr.mxu0 0.0
  %342 = vmatpush2.msra.mxu0 0.0
  %343 = vmatprep.subr.mxu0 0.0
  %344 = vmatpush2.msra.mxu0 0.0
  %345 = vmatprep.subr.mxu0 0.0
  %346 = vmatpush2.msra.mxu0 0.0
  %347 = vmatprep.subr.mxu0 0.0
  %348 = vmatpush2.msra.mxu0 0.0
  %349 = vmatprep.subr.mxu0 0.0
  %350 = vmatpush2.msra.mxu0 0.0
  %351 = vmatprep.subr.mxu0 0.0
  %352 = vmatpush2.msra.mxu0 0.0
  %353 = vmatprep.subr.mxu0 0.0
  %354 = vmatpush2.msra.mxu0 0.0
  %355 = vmatprep.subr.mxu0 0.0
  %356 = vmatpush2.msra.mxu0 0.0
  %357 = vmatprep.subr.mxu0 0.0
  %358 = vmatpush2.msra.mxu0 0.0
  %359 = vmatprep.subr.mxu0 0.0
  %360 = vmatpush2.msra.mxu0 0.0
  %361 = vmatprep.subr.mxu0 0.0
  %362 = vmatpush2.msra.mxu0 0.0
  %363 = vmatprep.subr.mxu0 0.0
  %364 = vmatpush2.msra.mxu0 0.0
  %365 = vmatprep.subr.mxu0 0.0
  %366 = vmatpush2.msra.mxu0 0.0
  %367 = vmatprep.subr.mxu0 0.0
  %368 = vmatpush2.msra.mxu0 0.0
  %369 = vmatprep.subr.mxu0 0.0
  %370 = vmatpush2.msra.mxu0 0.0
  %371 = vmatprep.mubr.f32.mxu0 0.0
  %372 = vmatmul.mubr.f32.gmra.mxu0 %v305
  %v373 = vpop.f32.mrf.mxu0
  %v374 = vadd.f32 0.0, %v373
  %v375 = vpop.f32.mrf.mxu0
  %376 = vdwg.mxu0
  %377 = vrot.lane.b32.xlu0 %v197, 112
  %v378 = vpop.permute.xlu0 %377
  %379 = vrot.lane.b32.xlu0 %v197, 80
  %v380 = vpop.permute.xlu0 %379
  %v381 = vsel %vm208, %v378, 0
  %v383 = vsel %vm208, %v380, 0
  %385 = vmatprep.subr.mxu0 0.0
  %386 = vmatpush1.xpose.msra.mxu0 0.0
  %387 = vmatprep.subr.mxu0 0.0
  %388 = vmatpush1.xpose.msra.mxu0 0.0
  %389 = vmatprep.subr.mxu0 0.0
  %390 = vmatpush1.xpose.msra.mxu0 0.0
  %391 = vmatprep.subr.mxu0 0.0
  %392 = vmatpush1.xpose.msra.mxu0 0.0
  %393 = vmatprep.subr.mxu0 0.0
  %394 = vmatpush1.xpose.msra.mxu0 0.0
  %395 = vmatprep.subr.mxu0 0.0
  %396 = vmatpush1.xpose.msra.mxu0 0.0
  %397 = vmatprep.subr.mxu0 0.0
  %398 = vmatpush1.xpose.msra.mxu0 0.0
  %399 = vmatprep.subr.mxu0 0.0
  %400 = vmatpush1.xpose.msra.mxu0 0.0
  %401 = vmatprep.subr.mxu0 0.0
  %402 = vmatpush1.xpose.msra.mxu0 0.0
  %403 = vmatprep.subr.mxu0 0.0
  %404 = vmatpush1.xpose.msra.mxu0 0.0
  %405 = vmatprep.subr.mxu0 0.0
  %406 = vmatpush1.xpose.msra.mxu0 0.0
  %407 = vmatprep.subr.mxu0 0.0
  %408 = vmatpush1.xpose.msra.mxu0 0.0
  %409 = vmatprep.subr.mxu0 0.0
  %410 = vmatpush1.xpose.msra.mxu0 0.0
  %411 = vmatprep.subr.mxu0 0.0
  %412 = vmatpush1.xpose.msra.mxu0 0.0
  %413 = vmatprep.subr.mxu0 0.0
  %414 = vmatpush1.xpose.msra.mxu0 0.0
  %415 = vmatprep.subr.mxu0 0.0
  %416 = vmatpush1.xpose.msra.mxu0 %v383
  %417 = vmatprep.subr.mxu0 0.0
  %418 = vmatpush2.xpose.msra.mxu0 0.0
  %419 = vmatprep.subr.mxu0 0.0
  %420 = vmatpush2.xpose.msra.mxu0 0.0
  %421 = vmatprep.subr.mxu0 0.0
  %422 = vmatpush2.xpose.msra.mxu0 0.0
  %423 = vmatprep.subr.mxu0 0.0
  %424 = vmatpush2.xpose.msra.mxu0 0.0
  %425 = vmatprep.subr.mxu0 0.0
  %426 = vmatpush2.xpose.msra.mxu0 0.0
  %427 = vmatprep.subr.mxu0 0.0
  %428 = vmatpush2.xpose.msra.mxu0 0.0
  %429 = vmatprep.subr.mxu0 0.0
  %430 = vmatpush2.xpose.msra.mxu0 0.0
  %431 = vmatprep.subr.mxu0 0.0
  %432 = vmatpush2.xpose.msra.mxu0 0.0
  %433 = vmatprep.subr.mxu0 0.0
  %434 = vmatpush2.xpose.msra.mxu0 0.0
  %435 = vmatprep.subr.mxu0 0.0
  %436 = vmatpush2.xpose.msra.mxu0 0.0
  %437 = vmatprep.subr.mxu0 0.0
  %438 = vmatpush2.xpose.msra.mxu0 0.0
  %439 = vmatprep.subr.mxu0 0.0
  %440 = vmatpush2.xpose.msra.mxu0 0.0
  %441 = vmatprep.subr.mxu0 0.0
  %442 = vmatpush2.xpose.msra.mxu0 0.0
  %443 = vmatprep.subr.mxu0 0.0
  %444 = vmatpush2.xpose.msra.mxu0 0.0
  %445 = vmatprep.subr.mxu0 0.0
  %446 = vmatpush2.xpose.msra.mxu0 0.0
  %447 = vmatprep.subr.mxu0 0.0
  %448 = vmatpush2.xpose.msra.mxu0 0.0
  %449 = vmatprep.mubr.f32.mxu0 0.0
  %450 = vmatmul.mubr.f32.gmra.mxu0 %v381
  %v451 = vpop.f32.mrf.mxu0
  %v452 = vadd.f32 0.0, %v451
  %v453 = vpop.f32.mrf.mxu0
  %454 = vdwg.mxu0
  %v455 = vmul.f32 %v452, 0.25
  %v456 = vadd.f32 %v455, %v287
  %v457 = vsel %vm289, %v456, -inf
  %458 = vmax.xlane.f32.xlu0 %v457
  %v459 = vpop.xlane.xlu0 %458
  %v460 = vsub.f32 %v456, %v459
  %v461 = vmul.f32 %v460, 1.442695
  %v462 = vpow.pop %v461
  %v463 = vsel %vm289, %v462, 0.0
  %464 = vadd.xlane.f32.xlu0 %v463
  %v465 = vpop.xlane.xlu0 %464
  %v466 = vrcp.pop %v465
  %v467 = vmul.f32 %v462, %v466
  %468 = vrot.lane.b32.xlu0 %v197, 48
  %v469 = vpop.permute.xlu0 %468
  %v472 = vsel %vm289, %v467, 0
  %474 = vmatprep.subr.mxu0 0.0
  %475 = vmatpush1.msra.mxu0 0.0
  %476 = vmatprep.subr.mxu0 0.0
  %477 = vmatpush1.msra.mxu0 0.0
  %478 = vmatprep.subr.mxu0 0.0
  %479 = vmatpush1.msra.mxu0 0.0
  %480 = vmatprep.subr.mxu0 0.0
  %481 = vmatpush1.msra.mxu0 0.0
  %482 = vmatprep.subr.mxu0 0.0
  %483 = vmatpush1.msra.mxu0 0.0
  %484 = vmatprep.subr.mxu0 0.0
  %485 = vmatpush1.msra.mxu0 0.0
  %486 = vmatprep.subr.mxu0 0.0
  %487 = vmatpush1.msra.mxu0 0.0
  %488 = vmatprep.subr.mxu0 0.0
  %489 = vmatpush1.msra.mxu0 0.0
  %490 = vmatprep.subr.mxu0 0.0
  %491 = vmatpush1.msra.mxu0 0.0
  %492 = vmatprep.subr.mxu0 0.0
  %493 = vmatpush1.msra.mxu0 0.0
  %494 = vmatprep.subr.mxu0 0.0
  %495 = vmatpush1.msra.mxu0 0.0
  %496 = vmatprep.subr.mxu0 0.0
  %497 = vmatpush1.msra.mxu0 0.0
  %498 = vmatprep.subr.mxu0 0.0
  %499 = vmatpush1.msra.mxu0 0.0
  %500 = vmatprep.subr.mxu0 0.0
  %501 = vmatpush1.msra.mxu0 0.0
  %502 = vmatprep.subr.mxu0 0.0
  %503 = vmatpush1.msra.mxu0 0.0
  %504 = vmatprep.subr.mxu0 0.0
  %505 = vmatpush1.msra.mxu0 %v469
  %506 = vmatprep.subr.mxu0 0.0
  %507 = vmatpush2.msra.mxu0 0.0
  %508 = vmatprep.subr.mxu0 0.0
  %509 = vmatpush2.msra.mxu0 0.0
  %510 = vmatprep.subr.mxu0 0.0
  %511 = vmatpush2.msra.mxu0 0.0
  %512 = vmatprep.subr.mxu0 0.0
  %513 = vmatpush2.msra.mxu0 0.0
  %514 = vmatprep.subr.mxu0 0.0
  %515 = vmatpush2.msra.mxu0 0.0
  %516 = vmatprep.subr.mxu0 0.0
  %517 = vmatpush2.msra.mxu0 0.0
  %518 = vmatprep.subr.mxu0 0.0
  %519 = vmatpush2.msra.mxu0 0.0
  %520 = vmatprep.subr.mxu0 0.0
  %521 = vmatpush2.msra.mxu0 0.0
  %522 = vmatprep.subr.mxu0 0.0
  %523 = vmatpush2.msra.mxu0 0.0
  %524 = vmatprep.subr.mxu0 0.0
  %525 = vmatpush2.msra.mxu0 0.0
  %526 = vmatprep.subr.mxu0 0.0
  %527 = vmatpush2.msra.mxu0 0.0
  %528 = vmatprep.subr.mxu0 0.0
  %529 = vmatpush2.msra.mxu0 0.0
  %530 = vmatprep.subr.mxu0 0.0
  %531 = vmatpush2.msra.mxu0 0.0
  %532 = vmatprep.subr.mxu0 0.0
  %533 = vmatpush2.msra.mxu0 0.0
  %534 = vmatprep.subr.mxu0 0.0
  %535 = vmatpush2.msra.mxu0 0.0
  %536 = vmatprep.subr.mxu0 0.0
  %537 = vmatpush2.msra.mxu0 0.0
  %538 = vmatprep.mubr.f32.mxu0 0.0
  %539 = vmatmul.mubr.f32.gmra.mxu0 %v472
  %v540 = vpop.f32.mrf.mxu0
  %v541 = vadd.f32 0.0, %v540
  %v542 = vpop.f32.mrf.mxu0
  %543 = vdwg.mxu0
  %545 = vrot.lane.b32.xlu0 %v541, 16
  %v546 = vpop.permute.xlu0 %545
  %v548 = vsel %vm208, %v374, %v546
  %550 = vrot.lane.b32.xlu0 %v202, 96
  %v551 = vpop.permute.xlu0 %550
  %v552 = vsel %vm208, %v202, 0
  %v554 = vsel %vm208, %v551, 0
  %556 = vmatprep.subr.mxu0 0.0
  %557 = vmatpush1.xpose.msra.mxu0 0.0
  %558 = vmatprep.subr.mxu0 0.0
  %559 = vmatpush1.xpose.msra.mxu0 0.0
  %560 = vmatprep.subr.mxu0 0.0
  %561 = vmatpush1.xpose.msra.mxu0 0.0
  %562 = vmatprep.subr.mxu0 0.0
  %563 = vmatpush1.xpose.msra.mxu0 0.0
  %564 = vmatprep.subr.mxu0 0.0
  %565 = vmatpush1.xpose.msra.mxu0 0.0
  %566 = vmatprep.subr.mxu0 0.0
  %567 = vmatpush1.xpose.msra.mxu0 0.0
  %568 = vmatprep.subr.mxu0 0.0
  %569 = vmatpush1.xpose.msra.mxu0 0.0
  %570 = vmatprep.subr.mxu0 0.0
  %571 = vmatpush1.xpose.msra.mxu0 0.0
  %572 = vmatprep.subr.mxu0 0.0
  %573 = vmatpush1.xpose.msra.mxu0 0.0
  %574 = vmatprep.subr.mxu0 0.0
  %575 = vmatpush1.xpose.msra.mxu0 0.0
  %576 = vmatprep.subr.mxu0 0.0
  %577 = vmatpush1.xpose.msra.mxu0 0.0
  %578 = vmatprep.subr.mxu0 0.0
  %579 = vmatpush1.xpose.msra.mxu0 0.0
  %580 = vmatprep.subr.mxu0 0.0
  %581 = vmatpush1.xpose.msra.mxu0 0.0
  %582 = vmatprep.subr.mxu0 0.0
  %583 = vmatpush1.xpose.msra.mxu0 0.0
  %584 = vmatprep.subr.mxu0 0.0
  %585 = vmatpush1.xpose.msra.mxu0 0.0
  %586 = vmatprep.subr.mxu0 0.0
  %587 = vmatpush1.xpose.msra.mxu0 %v554
  %588 = vmatprep.subr.mxu0 0.0
  %589 = vmatpush2.xpose.msra.mxu0 0.0
  %590 = vmatprep.subr.mxu0 0.0
  %591 = vmatpush2.xpose.msra.mxu0 0.0
  %592 = vmatprep.subr.mxu0 0.0
  %593 = vmatpush2.xpose.msra.mxu0 0.0
  %594 = vmatprep.subr.mxu0 0.0
  %595 = vmatpush2.xpose.msra.mxu0 0.0
  %596 = vmatprep.subr.mxu0 0.0
  %597 = vmatpush2.xpose.msra.mxu0 0.0
  %598 = vmatprep.subr.mxu0 0.0
  %599 = vmatpush2.xpose.msra.mxu0 0.0
  %600 = vmatprep.subr.mxu0 0.0
  %601 = vmatpush2.xpose.msra.mxu0 0.0
  %602 = vmatprep.subr.mxu0 0.0
  %603 = vmatpush2.xpose.msra.mxu0 0.0
  %604 = vmatprep.subr.mxu0 0.0
  %605 = vmatpush2.xpose.msra.mxu0 0.0
  %606 = vmatprep.subr.mxu0 0.0
  %607 = vmatpush2.xpose.msra.mxu0 0.0
  %608 = vmatprep.subr.mxu0 0.0
  %609 = vmatpush2.xpose.msra.mxu0 0.0
  %610 = vmatprep.subr.mxu0 0.0
  %611 = vmatpush2.xpose.msra.mxu0 0.0
  %612 = vmatprep.subr.mxu0 0.0
  %613 = vmatpush2.xpose.msra.mxu0 0.0
  %614 = vmatprep.subr.mxu0 0.0
  %615 = vmatpush2.xpose.msra.mxu0 0.0
  %616 = vmatprep.subr.mxu0 0.0
  %617 = vmatpush2.xpose.msra.mxu0 0.0
  %618 = vmatprep.subr.mxu0 0.0
  %619 = vmatpush2.xpose.msra.mxu0 0.0
  %620 = vmatprep.mubr.f32.mxu0 0.0
  %621 = vmatmul.mubr.f32.gmra.mxu0 %v552
  %v622 = vpop.f32.mrf.mxu0
  %v623 = vadd.f32 0.0, %v622
  %v624 = vpop.f32.mrf.mxu0
  %625 = vdwg.mxu0
  %v626 = vmul.f32 %v623, 0.25
  %v627 = vlaneseq
  %v628 = vshrl.u32 %v627, 7
  %v629 = vsub.s32 1, %v628
  %v630 = vrot.slane %v112, %v629
  %v631 = vadd.f32 %v626, %v630
  %v632 = vsel %vm289, %v631, -inf
  %633 = vmax.xlane.f32.xlu0 %v632
  %v634 = vpop.xlane.xlu0 %633
  %v635 = vsub.f32 %v631, %v634
  %v636 = vmul.f32 %v635, 1.442695
  %v637 = vpow.pop %v636
  %v638 = vsel %vm289, %v637, 0.0
  %639 = vadd.xlane.f32.xlu0 %v638
  %v640 = vpop.xlane.xlu0 %639
  %v641 = vrcp.pop %v640
  %v642 = vmul.f32 %v637, %v641
  %643 = vrot.lane.b32.xlu0 %v202, 64
  %v644 = vpop.permute.xlu0 %643
  %v647 = vsel %vm289, %v642, 0
  %649 = vmatprep.subr.mxu0 0.0
  %650 = vmatpush1.msra.mxu0 0.0
  %651 = vmatprep.subr.mxu0 0.0
  %652 = vmatpush1.msra.mxu0 0.0
  %653 = vmatprep.subr.mxu0 0.0
  %654 = vmatpush1.msra.mxu0 0.0
  %655 = vmatprep.subr.mxu0 0.0
  %656 = vmatpush1.msra.mxu0 0.0
  %657 = vmatprep.subr.mxu0 0.0
  %658 = vmatpush1.msra.mxu0 0.0
  %659 = vmatprep.subr.mxu0 0.0
  %660 = vmatpush1.msra.mxu0 0.0
  %661 = vmatprep.subr.mxu0 0.0
  %662 = vmatpush1.msra.mxu0 0.0
  %663 = vmatprep.subr.mxu0 0.0
  %664 = vmatpush1.msra.mxu0 0.0
  %665 = vmatprep.subr.mxu0 0.0
  %666 = vmatpush1.msra.mxu0 0.0
  %667 = vmatprep.subr.mxu0 0.0
  %668 = vmatpush1.msra.mxu0 0.0
  %669 = vmatprep.subr.mxu0 0.0
  %670 = vmatpush1.msra.mxu0 0.0
  %671 = vmatprep.subr.mxu0 0.0
  %672 = vmatpush1.msra.mxu0 0.0
  %673 = vmatprep.subr.mxu0 0.0
  %674 = vmatpush1.msra.mxu0 0.0
  %675 = vmatprep.subr.mxu0 0.0
  %676 = vmatpush1.msra.mxu0 0.0
  %677 = vmatprep.subr.mxu0 0.0
  %678 = vmatpush1.msra.mxu0 0.0
  %679 = vmatprep.subr.mxu0 0.0
  %680 = vmatpush1.msra.mxu0 %v644
  %681 = vmatprep.subr.mxu0 0.0
  %682 = vmatpush2.msra.mxu0 0.0
  %683 = vmatprep.subr.mxu0 0.0
  %684 = vmatpush2.msra.mxu0 0.0
  %685 = vmatprep.subr.mxu0 0.0
  %686 = vmatpush2.msra.mxu0 0.0
  %687 = vmatprep.subr.mxu0 0.0
  %688 = vmatpush2.msra.mxu0 0.0
  %689 = vmatprep.subr.mxu0 0.0
  %690 = vmatpush2.msra.mxu0 0.0
  %691 = vmatprep.subr.mxu0 0.0
  %692 = vmatpush2.msra.mxu0 0.0
  %693 = vmatprep.subr.mxu0 0.0
  %694 = vmatpush2.msra.mxu0 0.0
  %695 = vmatprep.subr.mxu0 0.0
  %696 = vmatpush2.msra.mxu0 0.0
  %697 = vmatprep.subr.mxu0 0.0
  %698 = vmatpush2.msra.mxu0 0.0
  %699 = vmatprep.subr.mxu0 0.0
  %700 = vmatpush2.msra.mxu0 0.0
  %701 = vmatprep.subr.mxu0 0.0
  %702 = vmatpush2.msra.mxu0 0.0
  %703 = vmatprep.subr.mxu0 0.0
  %704 = vmatpush2.msra.mxu0 0.0
  %705 = vmatprep.subr.mxu0 0.0
  %706 = vmatpush2.msra.mxu0 0.0
  %707 = vmatprep.subr.mxu0 0.0
  %708 = vmatpush2.msra.mxu0 0.0
  %709 = vmatprep.subr.mxu0 0.0
  %710 = vmatpush2.msra.mxu0 0.0
  %711 = vmatprep.subr.mxu0 0.0
  %712 = vmatpush2.msra.mxu0 0.0
  %713 = vmatprep.mubr.f32.mxu0 0.0
  %714 = vmatmul.mubr.f32.gmra.mxu0 %v647
  %v715 = vpop.f32.mrf.mxu0
  %v716 = vadd.f32 0.0, %v715
  %v717 = vpop.f32.mrf.mxu0
  %718 = vdwg.mxu0
  %719 = vrot.lane.b32.xlu0 %v202, 112
  %v720 = vpop.permute.xlu0 %719
  %721 = vrot.lane.b32.xlu0 %v202, 80
  %v722 = vpop.permute.xlu0 %721
  %v723 = vsel %vm208, %v720, 0
  %v725 = vsel %vm208, %v722, 0
  %727 = vmatprep.subr.mxu0 0.0
  %728 = vmatpush1.xpose.msra.mxu0 0.0
  %729 = vmatprep.subr.mxu0 0.0
  %730 = vmatpush1.xpose.msra.mxu0 0.0
  %731 = vmatprep.subr.mxu0 0.0
  %732 = vmatpush1.xpose.msra.mxu0 0.0
  %733 = vmatprep.subr.mxu0 0.0
  %734 = vmatpush1.xpose.msra.mxu0 0.0
  %735 = vmatprep.subr.mxu0 0.0
  %736 = vmatpush1.xpose.msra.mxu0 0.0
  %737 = vmatprep.subr.mxu0 0.0
  %738 = vmatpush1.xpose.msra.mxu0 0.0
  %739 = vmatprep.subr.mxu0 0.0
  %740 = vmatpush1.xpose.msra.mxu0 0.0
  %741 = vmatprep.subr.mxu0 0.0
  %742 = vmatpush1.xpose.msra.mxu0 0.0
  %743 = vmatprep.subr.mxu0 0.0
  %744 = vmatpush1.xpose.msra.mxu0 0.0
  %745 = vmatprep.subr.mxu0 0.0
  %746 = vmatpush1.xpose.msra.mxu0 0.0
  %747 = vmatprep.subr.mxu0 0.0
  %748 = vmatpush1.xpose.msra.mxu0 0.0
  %749 = vmatprep.subr.mxu0 0.0
  %750 = vmatpush1.xpose.msra.mxu0 0.0
  %751 = vmatprep.subr.mxu0 0.0
  %752 = vmatpush1.xpose.msra.mxu0 0.0
  %753 = vmatprep.subr.mxu0 0.0
  %754 = vmatpush1.xpose.msra.mxu0 0.0
  %755 = vmatprep.subr.mxu0 0.0
  %756 = vmatpush1.xpose.msra.mxu0 0.0
  %757 = vmatprep.subr.mxu0 0.0
  %758 = vmatpush1.xpose.msra.mxu0 %v725
  %759 = vmatprep.subr.mxu0 0.0
  %760 = vmatpush2.xpose.msra.mxu0 0.0
  %761 = vmatprep.subr.mxu0 0.0
  %762 = vmatpush2.xpose.msra.mxu0 0.0
  %763 = vmatprep.subr.mxu0 0.0
  %764 = vmatpush2.xpose.msra.mxu0 0.0
  %765 = vmatprep.subr.mxu0 0.0
  %766 = vmatpush2.xpose.msra.mxu0 0.0
  %767 = vmatprep.subr.mxu0 0.0
  %768 = vmatpush2.xpose.msra.mxu0 0.0
  %769 = vmatprep.subr.mxu0 0.0
  %770 = vmatpush2.xpose.msra.mxu0 0.0
  %771 = vmatprep.subr.mxu0 0.0
  %772 = vmatpush2.xpose.msra.mxu0 0.0
  %773 = vmatprep.subr.mxu0 0.0
  %774 = vmatpush2.xpose.msra.mxu0 0.0
  %775 = vmatprep.subr.mxu0 0.0
  %776 = vmatpush2.xpose.msra.mxu0 0.0
  %777 = vmatprep.subr.mxu0 0.0
  %778 = vmatpush2.xpose.msra.mxu0 0.0
  %779 = vmatprep.subr.mxu0 0.0
  %780 = vmatpush2.xpose.msra.mxu0 0.0
  %781 = vmatprep.subr.mxu0 0.0
  %782 = vmatpush2.xpose.msra.mxu0 0.0
  %783 = vmatprep.subr.mxu0 0.0
  %784 = vmatpush2.xpose.msra.mxu0 0.0
  %785 = vmatprep.subr.mxu0 0.0
  %786 = vmatpush2.xpose.msra.mxu0 0.0
  %787 = vmatprep.subr.mxu0 0.0
  %788 = vmatpush2.xpose.msra.mxu0 0.0
  %789 = vmatprep.subr.mxu0 0.0
  %790 = vmatpush2.xpose.msra.mxu0 0.0
  %791 = vmatprep.mubr.f32.mxu0 0.0
  %792 = vmatmul.mubr.f32.gmra.mxu0 %v723
  %v793 = vpop.f32.mrf.mxu0
  %v794 = vadd.f32 0.0, %v793
  %v795 = vpop.f32.mrf.mxu0
  %796 = vdwg.mxu0
  %v797 = vmul.f32 %v794, 0.25
  %v798 = vadd.f32 %v797, %v630
  %v799 = vsel %vm289, %v798, -inf
  %800 = vmax.xlane.f32.xlu0 %v799
  %v801 = vpop.xlane.xlu0 %800
  %v802 = vsub.f32 %v798, %v801
  %v803 = vmul.f32 %v802, 1.442695
  %v804 = vpow.pop %v803
  %v805 = vsel %vm289, %v804, 0.0
  %806 = vadd.xlane.f32.xlu0 %v805
  %v807 = vpop.xlane.xlu0 %806
  %v808 = vrcp.pop %v807
  %v809 = vmul.f32 %v804, %v808
  %810 = vrot.lane.b32.xlu0 %v202, 48
  %v811 = vpop.permute.xlu0 %810
  %v814 = vsel %vm289, %v809, 0
  %816 = vmatprep.subr.mxu0 0.0
  %817 = vmatpush1.msra.mxu0 0.0
  %818 = vmatprep.subr.mxu0 0.0
  %819 = vmatpush1.msra.mxu0 0.0
  %820 = vmatprep.subr.mxu0 0.0
  %821 = vmatpush1.msra.mxu0 0.0
  %822 = vmatprep.subr.mxu0 0.0
  %823 = vmatpush1.msra.mxu0 0.0
  %824 = vmatprep.subr.mxu0 0.0
  %825 = vmatpush1.msra.mxu0 0.0
  %826 = vmatprep.subr.mxu0 0.0
  %827 = vmatpush1.msra.mxu0 0.0
  %828 = vmatprep.subr.mxu0 0.0
  %829 = vmatpush1.msra.mxu0 0.0
  %830 = vmatprep.subr.mxu0 0.0
  %831 = vmatpush1.msra.mxu0 0.0
  %832 = vmatprep.subr.mxu0 0.0
  %833 = vmatpush1.msra.mxu0 0.0
  %834 = vmatprep.subr.mxu0 0.0
  %835 = vmatpush1.msra.mxu0 0.0
  %836 = vmatprep.subr.mxu0 0.0
  %837 = vmatpush1.msra.mxu0 0.0
  %838 = vmatprep.subr.mxu0 0.0
  %839 = vmatpush1.msra.mxu0 0.0
  %840 = vmatprep.subr.mxu0 0.0
  %841 = vmatpush1.msra.mxu0 0.0
  %842 = vmatprep.subr.mxu0 0.0
  %843 = vmatpush1.msra.mxu0 0.0
  %844 = vmatprep.subr.mxu0 0.0
  %845 = vmatpush1.msra.mxu0 0.0
  %846 = vmatprep.subr.mxu0 0.0
  %847 = vmatpush1.msra.mxu0 %v811
  %848 = vmatprep.subr.mxu0 0.0
  %849 = vmatpush2.msra.mxu0 0.0
  %850 = vmatprep.subr.mxu0 0.0
  %851 = vmatpush2.msra.mxu0 0.0
  %852 = vmatprep.subr.mxu0 0.0
  %853 = vmatpush2.msra.mxu0 0.0
  %854 = vmatprep.subr.mxu0 0.0
  %855 = vmatpush2.msra.mxu0 0.0
  %856 = vmatprep.subr.mxu0 0.0
  %857 = vmatpush2.msra.mxu0 0.0
  %858 = vmatprep.subr.mxu0 0.0
  %859 = vmatpush2.msra.mxu0 0.0
  %860 = vmatprep.subr.mxu0 0.0
  %861 = vmatpush2.msra.mxu0 0.0
  %862 = vmatprep.subr.mxu0 0.0
  %863 = vmatpush2.msra.mxu0 0.0
  %864 = vmatprep.subr.mxu0 0.0
  %865 = vmatpush2.msra.mxu0 0.0
  %866 = vmatprep.subr.mxu0 0.0
  %867 = vmatpush2.msra.mxu0 0.0
  %868 = vmatprep.subr.mxu0 0.0
  %869 = vmatpush2.msra.mxu0 0.0
  %870 = vmatprep.subr.mxu0 0.0
  %871 = vmatpush2.msra.mxu0 0.0
  %872 = vmatprep.subr.mxu0 0.0
  %873 = vmatpush2.msra.mxu0 0.0
  %874 = vmatprep.subr.mxu0 0.0
  %875 = vmatpush2.msra.mxu0 0.0
  %876 = vmatprep.subr.mxu0 0.0
  %877 = vmatpush2.msra.mxu0 0.0
  %878 = vmatprep.subr.mxu0 0.0
  %879 = vmatpush2.msra.mxu0 0.0
  %880 = vmatprep.mubr.f32.mxu0 0.0
  %881 = vmatmul.mubr.f32.gmra.mxu0 %v814
  %v882 = vpop.f32.mrf.mxu0
  %v883 = vadd.f32 0.0, %v882
  %v884 = vpop.f32.mrf.mxu0
  %885 = vdwg.mxu0
  %887 = vrot.lane.b32.xlu0 %v883, 16
  %v888 = vpop.permute.xlu0 %887
  %v890 = vsel %vm208, %v716, %v888
  %v891 = vld [vmem:[%s6] sm:$0xff]
  %v892 = vld [vmem:[%s6 + $0x8] sm:$0xff]
  %v893 = vld [vmem:[%s6 + $0x10] sm:$0xff]
  %v894 = vld [vmem:[%s6 + $0x18] sm:$0xff]
  %v895 = vld [vmem:[%s7] sm:$0x1]
  %v897 = vlaneseq
  %v898 = vshrl.u32 %v897, 7
  %v899 = vsub.s32 0, %v898
  %v900 = vrot.slane %v895, %v899
  %v903 = vsel %vm66, %v548, 0
  %v906 = vsel %vm66, %v890, 0
  %908 = vmatprep.subr.mxu0 0.0
  %909 = vmatpush1.msra.mxu0 0.0
  %910 = vmatprep.subr.mxu0 0.0
  %911 = vmatpush1.msra.mxu0 0.0
  %912 = vmatprep.subr.mxu0 0.0
  %913 = vmatpush1.msra.mxu0 0.0
  %914 = vmatprep.subr.mxu0 0.0
  %915 = vmatpush1.msra.mxu0 0.0
  %916 = vmatprep.subr.mxu0 0.0
  %917 = vmatpush1.msra.mxu0 0.0
  %918 = vmatprep.subr.mxu0 0.0
  %919 = vmatpush1.msra.mxu0 0.0
  %920 = vmatprep.subr.mxu0 0.0
  %921 = vmatpush1.msra.mxu0 0.0
  %922 = vmatprep.subr.mxu0 0.0
  %923 = vmatpush1.msra.mxu0 0.0
  %924 = vmatprep.subr.mxu0 0.0
  %925 = vmatpush1.msra.mxu0 0.0
  %926 = vmatprep.subr.mxu0 0.0
  %927 = vmatpush1.msra.mxu0 0.0
  %928 = vmatprep.subr.mxu0 0.0
  %929 = vmatpush1.msra.mxu0 0.0
  %930 = vmatprep.subr.mxu0 0.0
  %931 = vmatpush1.msra.mxu0 0.0
  %932 = vmatprep.subr.mxu0 0.0
  %933 = vmatpush1.msra.mxu0 %v894
  %934 = vmatprep.subr.mxu0 0.0
  %935 = vmatpush1.msra.mxu0 %v893
  %936 = vmatprep.subr.mxu0 0.0
  %937 = vmatpush1.msra.mxu0 %v892
  %938 = vmatprep.subr.mxu0 0.0
  %939 = vmatpush1.msra.mxu0 %v891
  %940 = vmatprep.subr.mxu0 0.0
  %941 = vmatpush2.msra.mxu0 0.0
  %942 = vmatprep.subr.mxu0 0.0
  %943 = vmatpush2.msra.mxu0 0.0
  %944 = vmatprep.subr.mxu0 0.0
  %945 = vmatpush2.msra.mxu0 0.0
  %946 = vmatprep.subr.mxu0 0.0
  %947 = vmatpush2.msra.mxu0 0.0
  %948 = vmatprep.subr.mxu0 0.0
  %949 = vmatpush2.msra.mxu0 0.0
  %950 = vmatprep.subr.mxu0 0.0
  %951 = vmatpush2.msra.mxu0 0.0
  %952 = vmatprep.subr.mxu0 0.0
  %953 = vmatpush2.msra.mxu0 0.0
  %954 = vmatprep.subr.mxu0 0.0
  %955 = vmatpush2.msra.mxu0 0.0
  %956 = vmatprep.subr.mxu0 0.0
  %957 = vmatpush2.msra.mxu0 0.0
  %958 = vmatprep.subr.mxu0 0.0
  %959 = vmatpush2.msra.mxu0 0.0
  %960 = vmatprep.subr.mxu0 0.0
  %961 = vmatpush2.msra.mxu0 0.0
  %962 = vmatprep.subr.mxu0 0.0
  %963 = vmatpush2.msra.mxu0 0.0
  %964 = vmatprep.subr.mxu0 0.0
  %965 = vmatpush2.msra.mxu0 0.0
  %966 = vmatprep.subr.mxu0 0.0
  %967 = vmatpush2.msra.mxu0 0.0
  %968 = vmatprep.subr.mxu0 0.0
  %969 = vmatpush2.msra.mxu0 0.0
  %970 = vmatprep.subr.mxu0 0.0
  %971 = vmatpush2.msra.mxu0 0.0
  %972 = vmatprep.mubr.f32.mxu0 0.0
  %973 = vmatmul.mubr.f32.gmra.mxu0 %v903
  %v974 = vpop.f32.mrf.mxu0
  %v975 = vadd.f32 %v900, %v974
  %v976 = vpop.f32.mrf.mxu0
  %977 = vmatprep.mubr.f32.mxu0 0.0
  %978 = vmatmul.mubr.f32.gmra.mxu0 %v906
  %v979 = vpop.f32.mrf.mxu0
  %v980 = vadd.f32 %v900, %v979
  %v981 = vpop.f32.mrf.mxu0
  %982 = vdwg.mxu0
  %v983 = vadd.f32 %v975, %v108
  %v984 = vadd.f32 %v980, %v109
  %v985 = vld [vmem:[%s8] sm:$0x1]
  %v986 = vld [vmem:[%s9] sm:$0x1]
  %v987 = vsel %vm66, %v983, 0.0
  %988 = vadd.xlane.f32.xlu0 %v987
  %v989 = vpop.xlane.xlu0 %988
  %v990 = vsel %vm66, %v984, 0.0
  %991 = vadd.xlane.f32.xlu0 %v990
  %v992 = vpop.xlane.xlu0 %991
  %v993 = vmul.f32 %v989, %v73
  %v994 = vmul.f32 %v992, %v73
  %v995 = vsub.f32 %v983, %v993
  %v996 = vsub.f32 %v984, %v994
  %v997 = vmul.f32 %v995, %v995
  %v998 = vmul.f32 %v996, %v996
  %v999 = vsel %vm66, %v997, 0.0
  %1000 = vadd.xlane.f32.xlu0 %v999
  %v1001 = vpop.xlane.xlu0 %1000
  %v1002 = vsel %vm66, %v998, 0.0
  %1003 = vadd.xlane.f32.xlu0 %v1002
  %v1004 = vpop.xlane.xlu0 %1003
  %v1005 = vmul.f32 %v1001, %v73
  %v1006 = vmul.f32 %v1004, %v73
  %v1007 = vadd.f32 %v1005, 1e-05
  %v1008 = vadd.f32 %v1006, 1e-05
  %v1009 = vrsqrt.pop %v1007
  %v1010 = vrsqrt.pop %v1008
  %v1011 = vmul.f32 %v995, %v1009
  %v1012 = vmul.f32 %v996, %v1010
  %v1014 = vlaneseq
  %v1015 = vshrl.u32 %v1014, 7
  %v1016 = vsub.s32 0, %v1015
  %v1017 = vrot.slane %v985, %v1016
  %v1019 = vmul.f32 %v1011, %v1017
  %v1020 = vmul.f32 %v1012, %v1017
  %v1022 = vlaneseq
  %v1023 = vshrl.u32 %v1022, 7
  %v1024 = vsub.s32 0, %v1023
  %v1025 = vrot.slane %v986, %v1024
  %v1027 = vadd.f32 %v1019, %v1025
  %v1028 = vadd.f32 %v1020, %v1025
  %v1029 = vld [vmem:[%s10] sm:$0xff]
  %v1030 = vld [vmem:[%s10 + $0x8] sm:$0xff]
  %v1031 = vld [vmem:[%s10 + $0x10] sm:$0xff]
  %v1032 = vld [vmem:[%s10 + $0x18] sm:$0xff]
  %v1033 = vld [vmem:[%s11] sm:$0x1]
  %v1035 = vlaneseq
  %v1036 = vshrl.u32 %v1035, 7
  %v1037 = vsub.s32 0, %v1036
  %v1038 = vrot.slane %v1033, %v1037
  %v1041 = vsel %vm66, %v1027, 0
  %v1044 = vsel %vm66, %v1028, 0
  %1046 = vmatprep.subr.mxu0 0.0
  %1047 = vmatpush1.msra.mxu0 0.0
  %1048 = vmatprep.subr.mxu0 0.0
  %1049 = vmatpush1.msra.mxu0 0.0
  %1050 = vmatprep.subr.mxu0 0.0
  %1051 = vmatpush1.msra.mxu0 0.0
  %1052 = vmatprep.subr.mxu0 0.0
  %1053 = vmatpush1.msra.mxu0 0.0
  %1054 = vmatprep.subr.mxu0 0.0
  %1055 = vmatpush1.msra.mxu0 0.0
  %1056 = vmatprep.subr.mxu0 0.0
  %1057 = vmatpush1.msra.mxu0 0.0
  %1058 = vmatprep.subr.mxu0 0.0
  %1059 = vmatpush1.msra.mxu0 0.0
  %1060 = vmatprep.subr.mxu0 0.0
  %1061 = vmatpush1.msra.mxu0 0.0
  %1062 = vmatprep.subr.mxu0 0.0
  %1063 = vmatpush1.msra.mxu0 0.0
  %1064 = vmatprep.subr.mxu0 0.0
  %1065 = vmatpush1.msra.mxu0 0.0
  %1066 = vmatprep.subr.mxu0 0.0
  %1067 = vmatpush1.msra.mxu0 0.0
  %1068 = vmatprep.subr.mxu0 0.0
  %1069 = vmatpush1.msra.mxu0 0.0
  %1070 = vmatprep.subr.mxu0 0.0
  %1071 = vmatpush1.msra.mxu0 %v1032
  %1072 = vmatprep.subr.mxu0 0.0
  %1073 = vmatpush1.msra.mxu0 %v1031
  %1074 = vmatprep.subr.mxu0 0.0
  %1075 = vmatpush1.msra.mxu0 %v1030
  %1076 = vmatprep.subr.mxu0 0.0
  %1077 = vmatpush1.msra.mxu0 %v1029
  %1078 = vmatprep.subr.mxu0 0.0
  %1079 = vmatpush2.msra.mxu0 0.0
  %1080 = vmatprep.subr.mxu0 0.0
  %1081 = vmatpush2.msra.mxu0 0.0
  %1082 = vmatprep.subr.mxu0 0.0
  %1083 = vmatpush2.msra.mxu0 0.0
  %1084 = vmatprep.subr.mxu0 0.0
  %1085 = vmatpush2.msra.mxu0 0.0
  %1086 = vmatprep.subr.mxu0 0.0
  %1087 = vmatpush2.msra.mxu0 0.0
  %1088 = vmatprep.subr.mxu0 0.0
  %1089 = vmatpush2.msra.mxu0 0.0
  %1090 = vmatprep.subr.mxu0 0.0
  %1091 = vmatpush2.msra.mxu0 0.0
  %1092 = vmatprep.subr.mxu0 0.0
  %1093 = vmatpush2.msra.mxu0 0.0
  %1094 = vmatprep.subr.mxu0 0.0
  %1095 = vmatpush2.msra.mxu0 0.0
  %1096 = vmatprep.subr.mxu0 0.0
  %1097 = vmatpush2.msra.mxu0 0.0
  %1098 = vmatprep.subr.mxu0 0.0
  %1099 = vmatpush2.msra.mxu0 0.0
  %1100 = vmatprep.subr.mxu0 0.0
  %1101 = vmatpush2.msra.mxu0 0.0
  %1102 = vmatprep.subr.mxu0 0.0
  %1103 = vmatpush2.msra.mxu0 0.0
  %1104 = vmatprep.subr.mxu0 0.0
  %1105 = vmatpush2.msra.mxu0 0.0
  %1106 = vmatprep.subr.mxu0 0.0
  %1107 = vmatpush2.msra.mxu0 0.0
  %1108 = vmatprep.subr.mxu0 0.0
  %1109 = vmatpush2.msra.mxu0 0.0
  %1110 = vmatprep.mubr.f32.mxu0 0.0
  %1111 = vmatmul.mubr.f32.gmra.mxu0 %v1041
  %v1112 = vpop.f32.mrf.mxu0
  %v1113 = vadd.f32 %v1038, %v1112
  %v1114 = vpop.f32.mrf.mxu0
  %1115 = vmatprep.mubr.f32.mxu0 0.0
  %1116 = vmatmul.mubr.f32.gmra.mxu0 %v1044
  %v1117 = vpop.f32.mrf.mxu0
  %v1118 = vadd.f32 %v1038, %v1117
  %v1119 = vpop.f32.mrf.mxu0
  %1120 = vdwg.mxu0
  %v1121 = vmul.f32 %v1113, 0.5
  %v1122 = vmul.f32 %v1118, 0.5
  %v1123 = vmul.f32 %v1113, 0.044715
  %v1124 = vmul.f32 %v1118, 0.044715
  %v1125 = vmul.f32 %v1123, %v1113
  %v1126 = vmul.f32 %v1124, %v1118
  %v1127 = vmul.f32 %v1125, %v1113
  %v1128 = vmul.f32 %v1126, %v1118
  %v1129 = vadd.f32 %v1113, %v1127
  %v1130 = vadd.f32 %v1118, %v1128
  %v1131 = vmul.f32 %v1129, 0.7978846
  %v1132 = vmul.f32 %v1130, 0.7978846
  %v1133 = vtanh.pop %v1131
  %v1134 = vtanh.pop %v1132
  %v1135 = vadd.f32 %v1133, 1.0
  %v1136 = vadd.f32 %v1134, 1.0
  %v1137 = vmul.f32 %v1121, %v1135
  %v1138 = vmul.f32 %v1122, %v1136
  %v1139 = vld [vmem:[%s12] sm:$0xff]
  %v1140 = vld [vmem:[%s12 + $0x8] sm:$0xff]
  %v1141 = vld [vmem:[%s12 + $0x10] sm:$0xff]
  %v1142 = vld [vmem:[%s12 + $0x18] sm:$0xff]
  %v1143 = vld [vmem:[%s12 + $0x20] sm:$0xff]
  %v1144 = vld [vmem:[%s12 + $0x28] sm:$0xff]
  %v1145 = vld [vmem:[%s12 + $0x30] sm:$0xff]
  %v1146 = vld [vmem:[%s12 + $0x38] sm:$0xff]
  %v1147 = vld [vmem:[%s13] sm:$0x1]
  %v1149 = vlaneseq
  %v1150 = vshrl.u32 %v1149, 7
  %v1151 = vsub.s32 0, %v1150
  %v1152 = vrot.slane %v1147, %v1151
  %vm1154 = vcmask 523264
  %v1156 = vsel %vm1154, %v1137, 0
  %v1159 = vsel %vm1154, %v1138, 0
  %1161 = vmatprep.subr.mxu0 0.0
  %1162 = vmatpush1.msra.mxu0 0.0
  %1163 = vmatprep.subr.mxu0 0.0
  %1164 = vmatpush1.msra.mxu0 0.0
  %1165 = vmatprep.subr.mxu0 0.0
  %1166 = vmatpush1.msra.mxu0 0.0
  %1167 = vmatprep.subr.mxu0 0.0
  %1168 = vmatpush1.msra.mxu0 0.0
  %1169 = vmatprep.subr.mxu0 0.0
  %1170 = vmatpush1.msra.mxu0 0.0
  %1171 = vmatprep.subr.mxu0 0.0
  %1172 = vmatpush1.msra.mxu0 0.0
  %1173 = vmatprep.subr.mxu0 0.0
  %1174 = vmatpush1.msra.mxu0 0.0
  %1175 = vmatprep.subr.mxu0 0.0
  %1176 = vmatpush1.msra.mxu0 0.0
  %1177 = vmatprep.subr.mxu0 0.0
  %1178 = vmatpush1.msra.mxu0 %v1146
  %1179 = vmatprep.subr.mxu0 0.0
  %1180 = vmatpush1.msra.mxu0 %v1145
  %1181 = vmatprep.subr.mxu0 0.0
  %1182 = vmatpush1.msra.mxu0 %v1144
  %1183 = vmatprep.subr.mxu0 0.0
  %1184 = vmatpush1.msra.mxu0 %v1143
  %1185 = vmatprep.subr.mxu0 0.0
  %1186 = vmatpush1.msra.mxu0 %v1142
  %1187 = vmatprep.subr.mxu0 0.0
  %1188 = vmatpush1.msra.mxu0 %v1141
  %1189 = vmatprep.subr.mxu0 0.0
  %1190 = vmatpush1.msra.mxu0 %v1140
  %1191 = vmatprep.subr.mxu0 0.0
  %1192 = vmatpush1.msra.mxu0 %v1139
  %1193 = vmatprep.subr.mxu0 0.0
  %1194 = vmatpush2.msra.mxu0 0.0
  %1195 = vmatprep.subr.mxu0 0.0
  %1196 = vmatpush2.msra.mxu0 0.0
  %1197 = vmatprep.subr.mxu0 0.0
  %1198 = vmatpush2.msra.mxu0 0.0
  %1199 = vmatprep.subr.mxu0 0.0
  %1200 = vmatpush2.msra.mxu0 0.0
  %1201 = vmatprep.subr.mxu0 0.0
  %1202 = vmatpush2.msra.mxu0 0.0
  %1203 = vmatprep.subr.mxu0 0.0
  %1204 = vmatpush2.msra.mxu0 0.0
  %1205 = vmatprep.subr.mxu0 0.0
  %1206 = vmatpush2.msra.mxu0 0.0
  %1207 = vmatprep.subr.mxu0 0.0
  %1208 = vmatpush2.msra.mxu0 0.0
  %1209 = vmatprep.subr.mxu0 0.0
  %1210 = vmatpush2.msra.mxu0 0.0
  %1211 = vmatprep.subr.mxu0 0.0
  %1212 = vmatpush2.msra.mxu0 0.0
  %1213 = vmatprep.subr.mxu0 0.0
  %1214 = vmatpush2.msra.mxu0 0.0
  %1215 = vmatprep.subr.mxu0 0.0
  %1216 = vmatpush2.msra.mxu0 0.0
  %1217 = vmatprep.subr.mxu0 0.0
  %1218 = vmatpush2.msra.mxu0 0.0
  %1219 = vmatprep.subr.mxu0 0.0
  %1220 = vmatpush2.msra.mxu0 0.0
  %1221 = vmatprep.subr.mxu0 0.0
  %1222 = vmatpush2.msra.mxu0 0.0
  %1223 = vmatprep.subr.mxu0 0.0
  %1224 = vmatpush2.msra.mxu0 0.0
  %1225 = vmatprep.mubr.f32.mxu0 0.0
  %1226 = vmatmul.mubr.f32.gmra.mxu0 %v1156
  %v1227 = vpop.f32.mrf.mxu0
  %v1228 = vadd.f32 %v1152, %v1227
  %v1229 = vpop.f32.mrf.mxu0
  %1230 = vmatprep.mubr.f32.mxu0 0.0
  %1231 = vmatmul.mubr.f32.gmra.mxu0 %v1159
  %v1232 = vpop.f32.mrf.mxu0
  %v1233 = vadd.f32 %v1152, %v1232
  %v1234 = vpop.f32.mrf.mxu0
  %1235 = vdwg.mxu0
  %v1236 = vadd.f32 %v1228, %v1027
  %v1237 = vadd.f32 %v1233, %v1028
  %v1238 = vld [vmem:[%s14] sm:$0x1]
  %v1239 = vld [vmem:[%s15] sm:$0x1]
  %v1240 = vsel %vm66, %v1236, 0.0
  %1241 = vadd.xlane.f32.xlu0 %v1240
  %v1242 = vpop.xlane.xlu0 %1241
  %v1243 = vsel %vm66, %v1237, 0.0
  %1244 = vadd.xlane.f32.xlu0 %v1243
  %v1245 = vpop.xlane.xlu0 %1244
  %v1246 = vmul.f32 %v1242, %v73
  %v1247 = vmul.f32 %v1245, %v73
  %v1248 = vsub.f32 %v1236, %v1246
  %v1249 = vsub.f32 %v1237, %v1247
  %v1250 = vmul.f32 %v1248, %v1248
  %v1251 = vmul.f32 %v1249, %v1249
  %v1252 = vsel %vm66, %v1250, 0.0
  %1253 = vadd.xlane.f32.xlu0 %v1252
  %v1254 = vpop.xlane.xlu0 %1253
  %v1255 = vsel %vm66, %v1251, 0.0
  %1256 = vadd.xlane.f32.xlu0 %v1255
  %v1257 = vpop.xlane.xlu0 %1256
  %v1258 = vmul.f32 %v1254, %v73
  %v1259 = vmul.f32 %v1257, %v73
  %v1260 = vadd.f32 %v1258, 1e-05
  %v1261 = vadd.f32 %v1259, 1e-05
  %v1262 = vrsqrt.pop %v1260
  %v1263 = vrsqrt.pop %v1261
  %v1264 = vmul.f32 %v1248, %v1262
  %v1265 = vmul.f32 %v1249, %v1263
  %v1267 = vlaneseq
  %v1268 = vshrl.u32 %v1267, 7
  %v1269 = vsub.s32 0, %v1268
  %v1270 = vrot.slane %v1238, %v1269
  %v1272 = vmul.f32 %v1264, %v1270
  %v1273 = vmul.f32 %v1265, %v1270
  %v1275 = vlaneseq
  %v1276 = vshrl.u32 %v1275, 7
  %v1277 = vsub.s32 0, %v1276
  %v1278 = vrot.slane %v1239, %v1277
  %v1280 = vadd.f32 %v1272, %v1278
  %v1281 = vadd.f32 %v1273, %v1278
  %v1282 = vadd.f32 %v108, %v1280
  %v1283 = vadd.f32 %v109, %v1281
  %v1284 = vmax.f32 %v108, %v1280
  %v1285 = vmax.f32 %v109, %v1281
  %s1286 = scalar_lea.vmem %s4, 32
  %v1287 = vld [vmem:[%s1286] sm:$0xff]
  %v1288 = vld [vmem:[%s1286 + $0x8] sm:$0xff]
  %v1289 = vld [vmem:[%s1286 + $0x10] sm:$0xff]
  %v1290 = vld [vmem:[%s1286 + $0x18] sm:$0xff]
  %s1291 = scalar_lea.vmem %s5, 1
  %v1292 = vld [vmem:[%s1291] sm:$0x1]
  %v1294 = vlaneseq
  %v1295 = vshrl.u32 %v1294, 7
  %v1296 = vsub.s32 0, %v1295
  %v1297 = vrot.slane %v1292, %v1296
  %v1300 = vsel %vm66, %v1280, 0
  %v1303 = vsel %vm66, %v1281, 0
  %1305 = vmatprep.subr.mxu0 0.0
  %1306 = vmatpush1.msra.mxu0 0.0
  %1307 = vmatprep.subr.mxu0 0.0
  %1308 = vmatpush1.msra.mxu0 0.0
  %1309 = vmatprep.subr.mxu0 0.0
  %1310 = vmatpush1.msra.mxu0 0.0
  %1311 = vmatprep.subr.mxu0 0.0
  %1312 = vmatpush1.msra.mxu0 0.0
  %1313 = vmatprep.subr.mxu0 0.0
  %1314 = vmatpush1.msra.mxu0 0.0
  %1315 = vmatprep.subr.mxu0 0.0
  %1316 = vmatpush1.msra.mxu0 0.0
  %1317 = vmatprep.subr.mxu0 0.0
  %1318 = vmatpush1.msra.mxu0 0.0
  %1319 = vmatprep.subr.mxu0 0.0
  %1320 = vmatpush1.msra.mxu0 0.0
  %1321 = vmatprep.subr.mxu0 0.0
  %1322 = vmatpush1.msra.mxu0 0.0
  %1323 = vmatprep.subr.mxu0 0.0
  %1324 = vmatpush1.msra.mxu0 0.0
  %1325 = vmatprep.subr.mxu0 0.0
  %1326 = vmatpush1.msra.mxu0 0.0
  %1327 = vmatprep.subr.mxu0 0.0
  %1328 = vmatpush1.msra.mxu0 0.0
  %1329 = vmatprep.subr.mxu0 0.0
  %1330 = vmatpush1.msra.mxu0 %v1290
  %1331 = vmatprep.subr.mxu0 0.0
  %1332 = vmatpush1.msra.mxu0 %v1289
  %1333 = vmatprep.subr.mxu0 0.0
  %1334 = vmatpush1.msra.mxu0 %v1288
  %1335 = vmatprep.subr.mxu0 0.0
  %1336 = vmatpush1.msra.mxu0 %v1287
  %1337 = vmatprep.subr.mxu0 0.0
  %1338 = vmatpush2.msra.mxu0 0.0
  %1339 = vmatprep.subr.mxu0 0.0
  %1340 = vmatpush2.msra.mxu0 0.0
  %1341 = vmatprep.subr.mxu0 0.0
  %1342 = vmatpush2.msra.mxu0 0.0
  %1343 = vmatprep.subr.mxu0 0.0
  %1344 = vmatpush2.msra.mxu0 0.0
  %1345 = vmatprep.subr.mxu0 0.0
  %1346 = vmatpush2.msra.mxu0 0.0
  %1347 = vmatprep.subr.mxu0 0.0
  %1348 = vmatpush2.msra.mxu0 0.0
  %1349 = vmatprep.subr.mxu0 0.0
  %1350 = vmatpush2.msra.mxu0 0.0
  %1351 = vmatprep.subr.mxu0 0.0
  %1352 = vmatpush2.msra.mxu0 0.0
  %1353 = vmatprep.subr.mxu0 0.0
  %1354 = vmatpush2.msra.mxu0 0.0
  %1355 = vmatprep.subr.mxu0 0.0
  %1356 = vmatpush2.msra.mxu0 0.0
  %1357 = vmatprep.subr.mxu0 0.0
  %1358 = vmatpush2.msra.mxu0 0.0
  %1359 = vmatprep.subr.mxu0 0.0
  %1360 = vmatpush2.msra.mxu0 0.0
  %1361 = vmatprep.subr.mxu0 0.0
  %1362 = vmatpush2.msra.mxu0 0.0
  %1363 = vmatprep.subr.mxu0 0.0
  %1364 = vmatpush2.msra.mxu0 0.0
  %1365 = vmatprep.subr.mxu0 0.0
  %1366 = vmatpush2.msra.mxu0 0.0
  %1367 = vmatprep.subr.mxu0 0.0
  %1368 = vmatpush2.msra.mxu0 0.0
  %1369 = vmatprep.mubr.f32.mxu0 0.0
  %1370 = vmatmul.mubr.f32.gmra.mxu0 %v1300
  %v1371 = vpop.f32.mrf.mxu0
  %v1372 = vadd.f32 %v1297, %v1371
  %v1373 = vpop.f32.mrf.mxu0
  %1374 = vmatprep.mubr.f32.mxu0 0.0
  %1375 = vmatmul.mubr.f32.gmra.mxu0 %v1303
  %v1376 = vpop.f32.mrf.mxu0
  %v1377 = vadd.f32 %v1297, %v1376
  %v1378 = vpop.f32.mrf.mxu0
  %1379 = vdwg.mxu0
  %1381 = vrot.lane.b32.xlu0 %v1372, 96
  %v1382 = vpop.permute.xlu0 %1381
  %v1383 = vsel %vm208, %v1372, 0
  %v1385 = vsel %vm208, %v1382, 0
  %1387 = vmatprep.subr.mxu0 0.0
  %1388 = vmatpush1.xpose.msra.mxu0 0.0
  %1389 = vmatprep.subr.mxu0 0.0
  %1390 = vmatpush1.xpose.msra.mxu0 0.0
  %1391 = vmatprep.subr.mxu0 0.0
  %1392 = vmatpush1.xpose.msra.mxu0 0.0
  %1393 = vmatprep.subr.mxu0 0.0
  %1394 = vmatpush1.xpose.msra.mxu0 0.0
  %1395 = vmatprep.subr.mxu0 0.0
  %1396 = vmatpush1.xpose.msra.mxu0 0.0
  %1397 = vmatprep.subr.mxu0 0.0
  %1398 = vmatpush1.xpose.msra.mxu0 0.0
  %1399 = vmatprep.subr.mxu0 0.0
  %1400 = vmatpush1.xpose.msra.mxu0 0.0
  %1401 = vmatprep.subr.mxu0 0.0
  %1402 = vmatpush1.xpose.msra.mxu0 0.0
  %1403 = vmatprep.subr.mxu0 0.0
  %1404 = vmatpush1.xpose.msra.mxu0 0.0
  %1405 = vmatprep.subr.mxu0 0.0
  %1406 = vmatpush1.xpose.msra.mxu0 0.0
  %1407 = vmatprep.subr.mxu0 0.0
  %1408 = vmatpush1.xpose.msra.mxu0 0.0
  %1409 = vmatprep.subr.mxu0 0.0
  %1410 = vmatpush1.xpose.msra.mxu0 0.0
  %1411 = vmatprep.subr.mxu0 0.0
  %1412 = vmatpush1.xpose.msra.mxu0 0.0
  %1413 = vmatprep.subr.mxu0 0.0
  %1414 = vmatpush1.xpose.msra.mxu0 0.0
  %1415 = vmatprep.subr.mxu0 0.0
  %1416 = vmatpush1.xpose.msra.mxu0 0.0
  %1417 = vmatprep.subr.mxu0 0.0
  %1418 = vmatpush1.xpose.msra.mxu0 %v1385
  %1419 = vmatprep.subr.mxu0 0.0
  %1420 = vmatpush2.xpose.msra.mxu0 0.0
  %1421 = vmatprep.subr.mxu0 0.0
  %1422 = vmatpush2.xpose.msra.mxu0 0.0
  %1423 = vmatprep.subr.mxu0 0.0
  %1424 = vmatpush2.xpose.msra.mxu0 0.0
  %1425 = vmatprep.subr.mxu0 0.0
  %1426 = vmatpush2.xpose.msra.mxu0 0.0
  %1427 = vmatprep.subr.mxu0 0.0
  %1428 = vmatpush2.xpose.msra.mxu0 0.0
  %1429 = vmatprep.subr.mxu0 0.0
  %1430 = vmatpush2.xpose.msra.mxu0 0.0
  %1431 = vmatprep.subr.mxu0 0.0
  %1432 = vmatpush2.xpose.msra.mxu0 0.0
  %1433 = vmatprep.subr.mxu0 0.0
  %1434 = vmatpush2.xpose.msra.mxu0 0.0
  %1435 = vmatprep.subr.mxu0 0.0
  %1436 = vmatpush2.xpose.msra.mxu0 0.0
  %1437 = vmatprep.subr.mxu0 0.0
  %1438 = vmatpush2.xpose.msra.mxu0 0.0
  %1439 = vmatprep.subr.mxu0 0.0
  %1440 = vmatpush2.xpose.msra.mxu0 0.0
  %1441 = vmatprep.subr.mxu0 0.0
  %1442 = vmatpush2.xpose.msra.mxu0 0.0
  %1443 = vmatprep.subr.mxu0 0.0
  %1444 = vmatpush2.xpose.msra.mxu0 0.0
  %1445 = vmatprep.subr.mxu0 0.0
  %1446 = vmatpush2.xpose.msra.mxu0 0.0
  %1447 = vmatprep.subr.mxu0 0.0
  %1448 = vmatpush2.xpose.msra.mxu0 0.0
  %1449 = vmatprep.subr.mxu0 0.0
  %1450 = vmatpush2.xpose.msra.mxu0 0.0
  %1451 = vmatprep.mubr.f32.mxu0 0.0
  %1452 = vmatmul.mubr.f32.gmra.mxu0 %v1383
  %v1453 = vpop.f32.mrf.mxu0
  %v1454 = vadd.f32 0.0, %v1453
  %v1455 = vpop.f32.mrf.mxu0
  %1456 = vdwg.mxu0
  %v1457 = vmul.f32 %v1454, 0.25
  %v1458 = vadd.f32 %v1457, %v287
  %v1459 = vsel %vm289, %v1458, -inf
  %1460 = vmax.xlane.f32.xlu0 %v1459
  %v1461 = vpop.xlane.xlu0 %1460
  %v1462 = vsub.f32 %v1458, %v1461
  %v1463 = vmul.f32 %v1462, 1.442695
  %v1464 = vpow.pop %v1463
  %v1465 = vsel %vm289, %v1464, 0.0
  %1466 = vadd.xlane.f32.xlu0 %v1465
  %v1467 = vpop.xlane.xlu0 %1466
  %v1468 = vrcp.pop %v1467
  %v1469 = vmul.f32 %v1464, %v1468
  %1470 = vrot.lane.b32.xlu0 %v1372, 64
  %v1471 = vpop.permute.xlu0 %1470
  %v1474 = vsel %vm289, %v1469, 0
  %1476 = vmatprep.subr.mxu0 0.0
  %1477 = vmatpush1.msra.mxu0 0.0
  %1478 = vmatprep.subr.mxu0 0.0
  %1479 = vmatpush1.msra.mxu0 0.0
  %1480 = vmatprep.subr.mxu0 0.0
  %1481 = vmatpush1.msra.mxu0 0.0
  %1482 = vmatprep.subr.mxu0 0.0
  %1483 = vmatpush1.msra.mxu0 0.0
  %1484 = vmatprep.subr.mxu0 0.0
  %1485 = vmatpush1.msra.mxu0 0.0
  %1486 = vmatprep.subr.mxu0 0.0
  %1487 = vmatpush1.msra.mxu0 0.0
  %1488 = vmatprep.subr.mxu0 0.0
  %1489 = vmatpush1.msra.mxu0 0.0
  %1490 = vmatprep.subr.mxu0 0.0
  %1491 = vmatpush1.msra.mxu0 0.0
  %1492 = vmatprep.subr.mxu0 0.0
  %1493 = vmatpush1.msra.mxu0 0.0
  %1494 = vmatprep.subr.mxu0 0.0
  %1495 = vmatpush1.msra.mxu0 0.0
  %1496 = vmatprep.subr.mxu0 0.0
  %1497 = vmatpush1.msra.mxu0 0.0
  %1498 = vmatprep.subr.mxu0 0.0
  %1499 = vmatpush1.msra.mxu0 0.0
  %1500 = vmatprep.subr.mxu0 0.0
  %1501 = vmatpush1.msra.mxu0 0.0
  %1502 = vmatprep.subr.mxu0 0.0
  %1503 = vmatpush1.msra.mxu0 0.0
  %1504 = vmatprep.subr.mxu0 0.0
  %1505 = vmatpush1.msra.mxu0 0.0
  %1506 = vmatprep.subr.mxu0 0.0
  %1507 = vmatpush1.msra.mxu0 %v1471
  %1508 = vmatprep.subr.mxu0 0.0
  %1509 = vmatpush2.msra.mxu0 0.0
  %1510 = vmatprep.subr.mxu0 0.0
  %1511 = vmatpush2.msra.mxu0 0.0
  %1512 = vmatprep.subr.mxu0 0.0
  %1513 = vmatpush2.msra.mxu0 0.0
  %1514 = vmatprep.subr.mxu0 0.0
  %1515 = vmatpush2.msra.mxu0 0.0
  %1516 = vmatprep.subr.mxu0 0.0
  %1517 = vmatpush2.msra.mxu0 0.0
  %1518 = vmatprep.subr.mxu0 0.0
  %1519 = vmatpush2.msra.mxu0 0.0
  %1520 = vmatprep.subr.mxu0 0.0
  %1521 = vmatpush2.msra.mxu0 0.0
  %1522 = vmatprep.subr.mxu0 0.0
  %1523 = vmatpush2.msra.mxu0 0.0
  %1524 = vmatprep.subr.mxu0 0.0
  %1525 = vmatpush2.msra.mxu0 0.0
  %1526 = vmatprep.subr.mxu0 0.0
  %1527 = vmatpush2.msra.mxu0 0.0
  %1528 = vmatprep.subr.mxu0 0.0
  %1529 = vmatpush2.msra.mxu0 0.0
  %1530 = vmatprep.subr.mxu0 0.0
  %1531 = vmatpush2.msra.mxu0 0.0
  %1532 = vmatprep.subr.mxu0 0.0
  %1533 = vmatpush2.msra.mxu0 0.0
  %1534 = vmatprep.subr.mxu0 0.0
  %1535 = vmatpush2.msra.mxu0 0.0
  %1536 = vmatprep.subr.mxu0 0.0
  %1537 = vmatpush2.msra.mxu0 0.0
  %1538 = vmatprep.subr.mxu0 0.0
  %1539 = vmatpush2.msra.mxu0 0.0
  %1540 = vmatprep.mubr.f32.mxu0 0.0
  %1541 = vmatmul.mubr.f32.gmra.mxu0 %v1474
  %v1542 = vpop.f32.mrf.mxu0
  %v1543 = vadd.f32 0.0, %v1542
  %v1544 = vpop.f32.mrf.mxu0
  %1545 = vdwg.mxu0
  %1546 = vrot.lane.b32.xlu0 %v1372, 112
  %v1547 = vpop.permute.xlu0 %1546
  %1548 = vrot.lane.b32.xlu0 %v1372, 80
  %v1549 = vpop.permute.xlu0 %1548
  %v1550 = vsel %vm208, %v1547, 0
  %v1552 = vsel %vm208, %v1549, 0
  %1554 = vmatprep.subr.mxu0 0.0
  %1555 = vmatpush1.xpose.msra.mxu0 0.0
  %1556 = vmatprep.subr.mxu0 0.0
  %1557 = vmatpush1.xpose.msra.mxu0 0.0
  %1558 = vmatprep.subr.mxu0 0.0
  %1559 = vmatpush1.xpose.msra.mxu0 0.0
  %1560 = vmatprep.subr.mxu0 0.0
  %1561 = vmatpush1.xpose.msra.mxu0 0.0
  %1562 = vmatprep.subr.mxu0 0.0
  %1563 = vmatpush1.xpose.msra.mxu0 0.0
  %1564 = vmatprep.subr.mxu0 0.0
  %1565 = vmatpush1.xpose.msra.mxu0 0.0
  %1566 = vmatprep.subr.mxu0 0.0
  %1567 = vmatpush1.xpose.msra.mxu0 0.0
  %1568 = vmatprep.subr.mxu0 0.0
  %1569 = vmatpush1.xpose.msra.mxu0 0.0
  %1570 = vmatprep.subr.mxu0 0.0
  %1571 = vmatpush1.xpose.msra.mxu0 0.0
  %1572 = vmatprep.subr.mxu0 0.0
  %1573 = vmatpush1.xpose.msra.mxu0 0.0
  %1574 = vmatprep.subr.mxu0 0.0
  %1575 = vmatpush1.xpose.msra.mxu0 0.0
  %1576 = vmatprep.subr.mxu0 0.0
  %1577 = vmatpush1.xpose.msra.mxu0 0.0
  %1578 = vmatprep.subr.mxu0 0.0
  %1579 = vmatpush1.xpose.msra.mxu0 0.0
  %1580 = vmatprep.subr.mxu0 0.0
  %1581 = vmatpush1.xpose.msra.mxu0 0.0
  %1582 = vmatprep.subr.mxu0 0.0
  %1583 = vmatpush1.xpose.msra.mxu0 0.0
  %1584 = vmatprep.subr.mxu0 0.0
  %1585 = vmatpush1.xpose.msra.mxu0 %v1552
  %1586 = vmatprep.subr.mxu0 0.0
  %1587 = vmatpush2.xpose.msra.mxu0 0.0
  %1588 = vmatprep.subr.mxu0 0.0
  %1589 = vmatpush2.xpose.msra.mxu0 0.0
  %1590 = vmatprep.subr.mxu0 0.0
  %1591 = vmatpush2.xpose.msra.mxu0 0.0
  %1592 = vmatprep.subr.mxu0 0.0
  %1593 = vmatpush2.xpose.msra.mxu0 0.0
  %1594 = vmatprep.subr.mxu0 0.0
  %1595 = vmatpush2.xpose.msra.mxu0 0.0
  %1596 = vmatprep.subr.mxu0 0.0
  %1597 = vmatpush2.xpose.msra.mxu0 0.0
  %1598 = vmatprep.subr.mxu0 0.0
  %1599 = vmatpush2.xpose.msra.mxu0 0.0
  %1600 = vmatprep.subr.mxu0 0.0
  %1601 = vmatpush2.xpose.msra.mxu0 0.0
  %1602 = vmatprep.subr.mxu0 0.0
  %1603 = vmatpush2.xpose.msra.mxu0 0.0
  %1604 = vmatprep.subr.mxu0 0.0
  %1605 = vmatpush2.xpose.msra.mxu0 0.0
  %1606 = vmatprep.subr.mxu0 0.0
  %1607 = vmatpush2.xpose.msra.mxu0 0.0
  %1608 = vmatprep.subr.mxu0 0.0
  %1609 = vmatpush2.xpose.msra.mxu0 0.0
  %1610 = vmatprep.subr.mxu0 0.0
  %1611 = vmatpush2.xpose.msra.mxu0 0.0
  %1612 = vmatprep.subr.mxu0 0.0
  %1613 = vmatpush2.xpose.msra.mxu0 0.0
  %1614 = vmatprep.subr.mxu0 0.0
  %1615 = vmatpush2.xpose.msra.mxu0 0.0
  %1616 = vmatprep.subr.mxu0 0.0
  %1617 = vmatpush2.xpose.msra.mxu0 0.0
  %1618 = vmatprep.mubr.f32.mxu0 0.0
  %1619 = vmatmul.mubr.f32.gmra.mxu0 %v1550
  %v1620 = vpop.f32.mrf.mxu0
  %v1621 = vadd.f32 0.0, %v1620
  %v1622 = vpop.f32.mrf.mxu0
  %1623 = vdwg.mxu0
  %v1624 = vmul.f32 %v1621, 0.25
  %v1625 = vadd.f32 %v1624, %v287
  %v1626 = vsel %vm289, %v1625, -inf
  %1627 = vmax.xlane.f32.xlu0 %v1626
  %v1628 = vpop.xlane.xlu0 %1627
  %v1629 = vsub.f32 %v1625, %v1628
  %v1630 = vmul.f32 %v1629, 1.442695
  %v1631 = vpow.pop %v1630
  %v1632 = vsel %vm289, %v1631, 0.0
  %1633 = vadd.xlane.f32.xlu0 %v1632
  %v1634 = vpop.xlane.xlu0 %1633
  %v1635 = vrcp.pop %v1634
  %v1636 = vmul.f32 %v1631, %v1635
  %1637 = vrot.lane.b32.xlu0 %v1372, 48
  %v1638 = vpop.permute.xlu0 %1637
  %v1641 = vsel %vm289, %v1636, 0
  %1643 = vmatprep.subr.mxu0 0.0
  %1644 = vmatpush1.msra.mxu0 0.0
  %1645 = vmatprep.subr.mxu0 0.0
  %1646 = vmatpush1.msra.mxu0 0.0
  %1647 = vmatprep.subr.mxu0 0.0
  %1648 = vmatpush1.msra.mxu0 0.0
  %1649 = vmatprep.subr.mxu0 0.0
  %1650 = vmatpush1.msra.mxu0 0.0
  %1651 = vmatprep.subr.mxu0 0.0
  %1652 = vmatpush1.msra.mxu0 0.0
  %1653 = vmatprep.subr.mxu0 0.0
  %1654 = vmatpush1.msra.mxu0 0.0
  %1655 = vmatprep.subr.mxu0 0.0
  %1656 = vmatpush1.msra.mxu0 0.0
  %1657 = vmatprep.subr.mxu0 0.0
  %1658 = vmatpush1.msra.mxu0 0.0
  %1659 = vmatprep.subr.mxu0 0.0
  %1660 = vmatpush1.msra.mxu0 0.0
  %1661 = vmatprep.subr.mxu0 0.0
  %1662 = vmatpush1.msra.mxu0 0.0
  %1663 = vmatprep.subr.mxu0 0.0
  %1664 = vmatpush1.msra.mxu0 0.0
  %1665 = vmatprep.subr.mxu0 0.0
  %1666 = vmatpush1.msra.mxu0 0.0
  %1667 = vmatprep.subr.mxu0 0.0
  %1668 = vmatpush1.msra.mxu0 0.0
  %1669 = vmatprep.subr.mxu0 0.0
  %1670 = vmatpush1.msra.mxu0 0.0
  %1671 = vmatprep.subr.mxu0 0.0
  %1672 = vmatpush1.msra.mxu0 0.0
  %1673 = vmatprep.subr.mxu0 0.0
  %1674 = vmatpush1.msra.mxu0 %v1638
  %1675 = vmatprep.subr.mxu0 0.0
  %1676 = vmatpush2.msra.mxu0 0.0
  %1677 = vmatprep.subr.mxu0 0.0
  %1678 = vmatpush2.msra.mxu0 0.0
  %1679 = vmatprep.subr.mxu0 0.0
  %1680 = vmatpush2.msra.mxu0 0.0
  %1681 = vmatprep.subr.mxu0 0.0
  %1682 = vmatpush2.msra.mxu0 0.0
  %1683 = vmatprep.subr.mxu0 0.0
  %1684 = vmatpush2.msra.mxu0 0.0
  %1685 = vmatprep.subr.mxu0 0.0
  %1686 = vmatpush2.msra.mxu0 0.0
  %1687 = vmatprep.subr.mxu0 0.0
  %1688 = vmatpush2.msra.mxu0 0.0
  %1689 = vmatprep.subr.mxu0 0.0
  %1690 = vmatpush2.msra.mxu0 0.0
  %1691 = vmatprep.subr.mxu0 0.0
  %1692 = vmatpush2.msra.mxu0 0.0
  %1693 = vmatprep.subr.mxu0 0.0
  %1694 = vmatpush2.msra.mxu0 0.0
  %1695 = vmatprep.subr.mxu0 0.0
  %1696 = vmatpush2.msra.mxu0 0.0
  %1697 = vmatprep.subr.mxu0 0.0
  %1698 = vmatpush2.msra.mxu0 0.0
  %1699 = vmatprep.subr.mxu0 0.0
  %1700 = vmatpush2.msra.mxu0 0.0
  %1701 = vmatprep.subr.mxu0 0.0
  %1702 = vmatpush2.msra.mxu0 0.0
  %1703 = vmatprep.subr.mxu0 0.0
  %1704 = vmatpush2.msra.mxu0 0.0
  %1705 = vmatprep.subr.mxu0 0.0
  %1706 = vmatpush2.msra.mxu0 0.0
  %1707 = vmatprep.mubr.f32.mxu0 0.0
  %1708 = vmatmul.mubr.f32.gmra.mxu0 %v1641
  %v1709 = vpop.f32.mrf.mxu0
  %v1710 = vadd.f32 0.0, %v1709
  %v1711 = vpop.f32.mrf.mxu0
  %1712 = vdwg.mxu0
  %1714 = vrot.lane.b32.xlu0 %v1710, 16
  %v1715 = vpop.permute.xlu0 %1714
  %v1717 = vsel %vm208, %v1543, %v1715
  %1719 = vrot.lane.b32.xlu0 %v1377, 96
  %v1720 = vpop.permute.xlu0 %1719
  %v1721 = vsel %vm208, %v1377, 0
  %v1723 = vsel %vm208, %v1720, 0
  %1725 = vmatprep.subr.mxu0 0.0
  %1726 = vmatpush1.xpose.msra.mxu0 0.0
  %1727 = vmatprep.subr.mxu0 0.0
  %1728 = vmatpush1.xpose.msra.mxu0 0.0
  %1729 = vmatprep.subr.mxu0 0.0
  %1730 = vmatpush1.xpose.msra.mxu0 0.0
  %1731 = vmatprep.subr.mxu0 0.0
  %1732 = vmatpush1.xpose.msra.mxu0 0.0
  %1733 = vmatprep.subr.mxu0 0.0
  %1734 = vmatpush1.xpose.msra.mxu0 0.0
  %1735 = vmatprep.subr.mxu0 0.0
  %1736 = vmatpush1.xpose.msra.mxu0 0.0
  %1737 = vmatprep.subr.mxu0 0.0
  %1738 = vmatpush1.xpose.msra.mxu0 0.0
  %1739 = vmatprep.subr.mxu0 0.0
  %1740 = vmatpush1.xpose.msra.mxu0 0.0
  %1741 = vmatprep.subr.mxu0 0.0
  %1742 = vmatpush1.xpose.msra.mxu0 0.0
  %1743 = vmatprep.subr.mxu0 0.0
  %1744 = vmatpush1.xpose.msra.mxu0 0.0
  %1745 = vmatprep.subr.mxu0 0.0
  %1746 = vmatpush1.xpose.msra.mxu0 0.0
  %1747 = vmatprep.subr.mxu0 0.0
  %1748 = vmatpush1.xpose.msra.mxu0 0.0
  %1749 = vmatprep.subr.mxu0 0.0
  %1750 = vmatpush1.xpose.msra.mxu0 0.0
  %1751 = vmatprep.subr.mxu0 0.0
  %1752 = vmatpush1.xpose.msra.mxu0 0.0
  %1753 = vmatprep.subr.mxu0 0.0
  %1754 = vmatpush1.xpose.msra.mxu0 0.0
  %1755 = vmatprep.subr.mxu0 0.0
  %1756 = vmatpush1.xpose.msra.mxu0 %v1723
  %1757 = vmatprep.subr.mxu0 0.0
  %1758 = vmatpush2.xpose.msra.mxu0 0.0
  %1759 = vmatprep.subr.mxu0 0.0
  %1760 = vmatpush2.xpose.msra.mxu0 0.0
  %1761 = vmatprep.subr.mxu0 0.0
  %1762 = vmatpush2.xpose.msra.mxu0 0.0
  %1763 = vmatprep.subr.mxu0 0.0
  %1764 = vmatpush2.xpose.msra.mxu0 0.0
  %1765 = vmatprep.subr.mxu0 0.0
  %1766 = vmatpush2.xpose.msra.mxu0 0.0
  %1767 = vmatprep.subr.mxu0 0.0
  %1768 = vmatpush2.xpose.msra.mxu0 0.0
  %1769 = vmatprep.subr.mxu0 0.0
  %1770 = vmatpush2.xpose.msra.mxu0 0.0
  %1771 = vmatprep.subr.mxu0 0.0
  %1772 = vmatpush2.xpose.msra.mxu0 0.0
  %1773 = vmatprep.subr.mxu0 0.0
  %1774 = vmatpush2.xpose.msra.mxu0 0.0
  %1775 = vmatprep.subr.mxu0 0.0
  %1776 = vmatpush2.xpose.msra.mxu0 0.0
  %1777 = vmatprep.subr.mxu0 0.0
  %1778 = vmatpush2.xpose.msra.mxu0 0.0
  %1779 = vmatprep.subr.mxu0 0.0
  %1780 = vmatpush2.xpose.msra.mxu0 0.0
  %1781 = vmatprep.subr.mxu0 0.0
  %1782 = vmatpush2.xpose.msra.mxu0 0.0
  %1783 = vmatprep.subr.mxu0 0.0
  %1784 = vmatpush2.xpose.msra.mxu0 0.0
  %1785 = vmatprep.subr.mxu0 0.0
  %1786 = vmatpush2.xpose.msra.mxu0 0.0
  %1787 = vmatprep.subr.mxu0 0.0
  %1788 = vmatpush2.xpose.msra.mxu0 0.0
  %1789 = vmatprep.mubr.f32.mxu0 0.0
  %1790 = vmatmul.mubr.f32.gmra.mxu0 %v1721
  %v1791 = vpop.f32.mrf.mxu0
  %v1792 = vadd.f32 0.0, %v1791
  %v1793 = vpop.f32.mrf.mxu0
  %1794 = vdwg.mxu0
  %v1795 = vmul.f32 %v1792, 0.25
  %v1796 = vadd.f32 %v1795, %v630
  %v1797 = vsel %vm289, %v1796, -inf
  %1798 = vmax.xlane.f32.xlu0 %v1797
  %v1799 = vpop.xlane.xlu0 %1798
  %v1800 = vsub.f32 %v1796, %v1799
  %v1801 = vmul.f32 %v1800, 1.442695
  %v1802 = vpow.pop %v1801
  %v1803 = vsel %vm289, %v1802, 0.0
  %1804 = vadd.xlane.f32.xlu0 %v1803
  %v1805 = vpop.xlane.xlu0 %1804
  %v1806 = vrcp.pop %v1805
  %v1807 = vmul.f32 %v1802, %v1806
  %1808 = vrot.lane.b32.xlu0 %v1377, 64
  %v1809 = vpop.permute.xlu0 %1808
  %v1812 = vsel %vm289, %v1807, 0
  %1814 = vmatprep.subr.mxu0 0.0
  %1815 = vmatpush1.msra.mxu0 0.0
  %1816 = vmatprep.subr.mxu0 0.0
  %1817 = vmatpush1.msra.mxu0 0.0
  %1818 = vmatprep.subr.mxu0 0.0
  %1819 = vmatpush1.msra.mxu0 0.0
  %1820 = vmatprep.subr.mxu0 0.0
  %1821 = vmatpush1.msra.mxu0 0.0
  %1822 = vmatprep.subr.mxu0 0.0
  %1823 = vmatpush1.msra.mxu0 0.0
  %1824 = vmatprep.subr.mxu0 0.0
  %1825 = vmatpush1.msra.mxu0 0.0
  %1826 = vmatprep.subr.mxu0 0.0
  %1827 = vmatpush1.msra.mxu0 0.0
  %1828 = vmatprep.subr.mxu0 0.0
  %1829 = vmatpush1.msra.mxu0 0.0
  %1830 = vmatprep.subr.mxu0 0.0
  %1831 = vmatpush1.msra.mxu0 0.0
  %1832 = vmatprep.subr.mxu0 0.0
  %1833 = vmatpush1.msra.mxu0 0.0
  %1834 = vmatprep.subr.mxu0 0.0
  %1835 = vmatpush1.msra.mxu0 0.0
  %1836 = vmatprep.subr.mxu0 0.0
  %1837 = vmatpush1.msra.mxu0 0.0
  %1838 = vmatprep.subr.mxu0 0.0
  %1839 = vmatpush1.msra.mxu0 0.0
  %1840 = vmatprep.subr.mxu0 0.0
  %1841 = vmatpush1.msra.mxu0 0.0
  %1842 = vmatprep.subr.mxu0 0.0
  %1843 = vmatpush1.msra.mxu0 0.0
  %1844 = vmatprep.subr.mxu0 0.0
  %1845 = vmatpush1.msra.mxu0 %v1809
  %1846 = vmatprep.subr.mxu0 0.0
  %1847 = vmatpush2.msra.mxu0 0.0
  %1848 = vmatprep.subr.mxu0 0.0
  %1849 = vmatpush2.msra.mxu0 0.0
  %1850 = vmatprep.subr.mxu0 0.0
  %1851 = vmatpush2.msra.mxu0 0.0
  %1852 = vmatprep.subr.mxu0 0.0
  %1853 = vmatpush2.msra.mxu0 0.0
  %1854 = vmatprep.subr.mxu0 0.0
  %1855 = vmatpush2.msra.mxu0 0.0
  %1856 = vmatprep.subr.mxu0 0.0
  %1857 = vmatpush2.msra.mxu0 0.0
  %1858 = vmatprep.subr.mxu0 0.0
  %1859 = vmatpush2.msra.mxu0 0.0
  %1860 = vmatprep.subr.mxu0 0.0
  %1861 = vmatpush2.msra.mxu0 0.0
  %1862 = vmatprep.subr.mxu0 0.0
  %1863 = vmatpush2.msra.mxu0 0.0
  %1864 = vmatprep.subr.mxu0 0.0
  %1865 = vmatpush2.msra.mxu0 0.0
  %1866 = vmatprep.subr.mxu0 0.0
  %1867 = vmatpush2.msra.mxu0 0.0
  %1868 = vmatprep.subr.mxu0 0.0
  %1869 = vmatpush2.msra.mxu0 0.0
  %1870 = vmatprep.subr.mxu0 0.0
  %1871 = vmatpush2.msra.mxu0 0.0
  %1872 = vmatprep.subr.mxu0 0.0
  %1873 = vmatpush2.msra.mxu0 0.0
  %1874 = vmatprep.subr.mxu0 0.0
  %1875 = vmatpush2.msra.mxu0 0.0
  %1876 = vmatprep.subr.mxu0 0.0
  %1877 = vmatpush2.msra.mxu0 0.0
  %1878 = vmatprep.mubr.f32.mxu0 0.0
  %1879 = vmatmul.mubr.f32.gmra.mxu0 %v1812
  %v1880 = vpop.f32.mrf.mxu0
  %v1881 = vadd.f32 0.0, %v1880
  %v1882 = vpop.f32.mrf.mxu0
  %1883 = vdwg.mxu0
  %1884 = vrot.lane.b32.xlu0 %v1377, 112
  %v1885 = vpop.permute.xlu0 %1884
  %1886 = vrot.lane.b32.xlu0 %v1377, 80
  %v1887 = vpop.permute.xlu0 %1886
  %v1888 = vsel %vm208, %v1885, 0
  %v1890 = vsel %vm208, %v1887, 0
  %1892 = vmatprep.subr.mxu0 0.0
  %1893 = vmatpush1.xpose.msra.mxu0 0.0
  %1894 = vmatprep.subr.mxu0 0.0
  %1895 = vmatpush1.xpose.msra.mxu0 0.0
  %1896 = vmatprep.subr.mxu0 0.0
  %1897 = vmatpush1.xpose.msra.mxu0 0.0
  %1898 = vmatprep.subr.mxu0 0.0
  %1899 = vmatpush1.xpose.msra.mxu0 0.0
  %1900 = vmatprep.subr.mxu0 0.0
  %1901 = vmatpush1.xpose.msra.mxu0 0.0
  %1902 = vmatprep.subr.mxu0 0.0
  %1903 = vmatpush1.xpose.msra.mxu0 0.0
  %1904 = vmatprep.subr.mxu0 0.0
  %1905 = vmatpush1.xpose.msra.mxu0 0.0
  %1906 = vmatprep.subr.mxu0 0.0
  %1907 = vmatpush1.xpose.msra.mxu0 0.0
  %1908 = vmatprep.subr.mxu0 0.0
  %1909 = vmatpush1.xpose.msra.mxu0 0.0
  %1910 = vmatprep.subr.mxu0 0.0
  %1911 = vmatpush1.xpose.msra.mxu0 0.0
  %1912 = vmatprep.subr.mxu0 0.0
  %1913 = vmatpush1.xpose.msra.mxu0 0.0
  %1914 = vmatprep.subr.mxu0 0.0
  %1915 = vmatpush1.xpose.msra.mxu0 0.0
  %1916 = vmatprep.subr.mxu0 0.0
  %1917 = vmatpush1.xpose.msra.mxu0 0.0
  %1918 = vmatprep.subr.mxu0 0.0
  %1919 = vmatpush1.xpose.msra.mxu0 0.0
  %1920 = vmatprep.subr.mxu0 0.0
  %1921 = vmatpush1.xpose.msra.mxu0 0.0
  %1922 = vmatprep.subr.mxu0 0.0
  %1923 = vmatpush1.xpose.msra.mxu0 %v1890
  %1924 = vmatprep.subr.mxu0 0.0
  %1925 = vmatpush2.xpose.msra.mxu0 0.0
  %1926 = vmatprep.subr.mxu0 0.0
  %1927 = vmatpush2.xpose.msra.mxu0 0.0
  %1928 = vmatprep.subr.mxu0 0.0
  %1929 = vmatpush2.xpose.msra.mxu0 0.0
  %1930 = vmatprep.subr.mxu0 0.0
  %1931 = vmatpush2.xpose.msra.mxu0 0.0
  %1932 = vmatprep.subr.mxu0 0.0
  %1933 = vmatpush2.xpose.msra.mxu0 0.0
  %1934 = vmatprep.subr.mxu0 0.0
  %1935 = vmatpush2.xpose.msra.mxu0 0.0
  %1936 = vmatprep.subr.mxu0 0.0
  %1937 = vmatpush2.xpose.msra.mxu0 0.0
  %1938 = vmatprep.subr.mxu0 0.0
  %1939 = vmatpush2.xpose.msra.mxu0 0.0
  %1940 = vmatprep.subr.mxu0 0.0
  %1941 = vmatpush2.xpose.msra.mxu0 0.0
  %1942 = vmatprep.subr.mxu0 0.0
  %1943 = vmatpush2.xpose.msra.mxu0 0.0
  %1944 = vmatprep.subr.mxu0 0.0
  %1945 = vmatpush2.xpose.msra.mxu0 0.0
  %1946 = vmatprep.subr.mxu0 0.0
  %1947 = vmatpush2.xpose.msra.mxu0 0.0
  %1948 = vmatprep.subr.mxu0 0.0
  %1949 = vmatpush2.xpose.msra.mxu0 0.0
  %1950 = vmatprep.subr.mxu0 0.0
  %1951 = vmatpush2.xpose.msra.mxu0 0.0
  %1952 = vmatprep.subr.mxu0 0.0
  %1953 = vmatpush2.xpose.msra.mxu0 0.0
  %1954 = vmatprep.subr.mxu0 0.0
  %1955 = vmatpush2.xpose.msra.mxu0 0.0
  %1956 = vmatprep.mubr.f32.mxu0 0.0
  %1957 = vmatmul.mubr.f32.gmra.mxu0 %v1888
  %v1958 = vpop.f32.mrf.mxu0
  %v1959 = vadd.f32 0.0, %v1958
  %v1960 = vpop.f32.mrf.mxu0
  %1961 = vdwg.mxu0
  %v1962 = vmul.f32 %v1959, 0.25
  %v1963 = vadd.f32 %v1962, %v630
  %v1964 = vsel %vm289, %v1963, -inf
  %1965 = vmax.xlane.f32.xlu0 %v1964
  %v1966 = vpop.xlane.xlu0 %1965
  %v1967 = vsub.f32 %v1963, %v1966
  %v1968 = vmul.f32 %v1967, 1.442695
  %v1969 = vpow.pop %v1968
  %v1970 = vsel %vm289, %v1969, 0.0
  %1971 = vadd.xlane.f32.xlu0 %v1970
  %v1972 = vpop.xlane.xlu0 %1971
  %v1973 = vrcp.pop %v1972
  %v1974 = vmul.f32 %v1969, %v1973
  %1975 = vrot.lane.b32.xlu0 %v1377, 48
  %v1976 = vpop.permute.xlu0 %1975
  %v1979 = vsel %vm289, %v1974, 0
  %1981 = vmatprep.subr.mxu0 0.0
  %1982 = vmatpush1.msra.mxu0 0.0
  %1983 = vmatprep.subr.mxu0 0.0
  %1984 = vmatpush1.msra.mxu0 0.0
  %1985 = vmatprep.subr.mxu0 0.0
  %1986 = vmatpush1.msra.mxu0 0.0
  %1987 = vmatprep.subr.mxu0 0.0
  %1988 = vmatpush1.msra.mxu0 0.0
  %1989 = vmatprep.subr.mxu0 0.0
  %1990 = vmatpush1.msra.mxu0 0.0
  %1991 = vmatprep.subr.mxu0 0.0
  %1992 = vmatpush1.msra.mxu0 0.0
  %1993 = vmatprep.subr.mxu0 0.0
  %1994 = vmatpush1.msra.mxu0 0.0
  %1995 = vmatprep.subr.mxu0 0.0
  %1996 = vmatpush1.msra.mxu0 0.0
  %1997 = vmatprep.subr.mxu0 0.0
  %1998 = vmatpush1.msra.mxu0 0.0
  %1999 = vmatprep.subr.mxu0 0.0
  %2000 = vmatpush1.msra.mxu0 0.0
  %2001 = vmatprep.subr.mxu0 0.0
  %2002 = vmatpush1.msra.mxu0 0.0
  %2003 = vmatprep.subr.mxu0 0.0
  %2004 = vmatpush1.msra.mxu0 0.0
  %2005 = vmatprep.subr.mxu0 0.0
  %2006 = vmatpush1.msra.mxu0 0.0
  %2007 = vmatprep.subr.mxu0 0.0
  %2008 = vmatpush1.msra.mxu0 0.0
  %2009 = vmatprep.subr.mxu0 0.0
  %2010 = vmatpush1.msra.mxu0 0.0
  %2011 = vmatprep.subr.mxu0 0.0
  %2012 = vmatpush1.msra.mxu0 %v1976
  %2013 = vmatprep.subr.mxu0 0.0
  %2014 = vmatpush2.msra.mxu0 0.0
  %2015 = vmatprep.subr.mxu0 0.0
  %2016 = vmatpush2.msra.mxu0 0.0
  %2017 = vmatprep.subr.mxu0 0.0
  %2018 = vmatpush2.msra.mxu0 0.0
  %2019 = vmatprep.subr.mxu0 0.0
  %2020 = vmatpush2.msra.mxu0 0.0
  %2021 = vmatprep.subr.mxu0 0.0
  %2022 = vmatpush2.msra.mxu0 0.0
  %2023 = vmatprep.subr.mxu0 0.0
  %2024 = vmatpush2.msra.mxu0 0.0
  %2025 = vmatprep.subr.mxu0 0.0
  %2026 = vmatpush2.msra.mxu0 0.0
  %2027 = vmatprep.subr.mxu0 0.0
  %2028 = vmatpush2.msra.mxu0 0.0
  %2029 = vmatprep.subr.mxu0 0.0
  %2030 = vmatpush2.msra.mxu0 0.0
  %2031 = vmatprep.subr.mxu0 0.0
  %2032 = vmatpush2.msra.mxu0 0.0
  %2033 = vmatprep.subr.mxu0 0.0
  %2034 = vmatpush2.msra.mxu0 0.0
  %2035 = vmatprep.subr.mxu0 0.0
  %2036 = vmatpush2.msra.mxu0 0.0
  %2037 = vmatprep.subr.mxu0 0.0
  %2038 = vmatpush2.msra.mxu0 0.0
  %2039 = vmatprep.subr.mxu0 0.0
  %2040 = vmatpush2.msra.mxu0 0.0
  %2041 = vmatprep.subr.mxu0 0.0
  %2042 = vmatpush2.msra.mxu0 0.0
  %2043 = vmatprep.subr.mxu0 0.0
  %2044 = vmatpush2.msra.mxu0 0.0
  %2045 = vmatprep.mubr.f32.mxu0 0.0
  %2046 = vmatmul.mubr.f32.gmra.mxu0 %v1979
  %v2047 = vpop.f32.mrf.mxu0
  %v2048 = vadd.f32 0.0, %v2047
  %v2049 = vpop.f32.mrf.mxu0
  %2050 = vdwg.mxu0
  %2052 = vrot.lane.b32.xlu0 %v2048, 16
  %v2053 = vpop.permute.xlu0 %2052
  %v2055 = vsel %vm208, %v1881, %v2053
  %s2056 = scalar_lea.vmem %s6, 32
  %v2057 = vld [vmem:[%s2056] sm:$0xff]
  %v2058 = vld [vmem:[%s2056 + $0x8] sm:$0xff]
  %v2059 = vld [vmem:[%s2056 + $0x10] sm:$0xff]
  %v2060 = vld [vmem:[%s2056 + $0x18] sm:$0xff]
  %s2061 = scalar_lea.vmem %s7, 1
  %v2062 = vld [vmem:[%s2061] sm:$0x1]
  %v2064 = vlaneseq
  %v2065 = vshrl.u32 %v2064, 7
  %v2066 = vsub.s32 0, %v2065
  %v2067 = vrot.slane %v2062, %v2066
  %v2070 = vsel %vm66, %v1717, 0
  %v2073 = vsel %vm66, %v2055, 0
  %2075 = vmatprep.subr.mxu0 0.0
  %2076 = vmatpush1.msra.mxu0 0.0
  %2077 = vmatprep.subr.mxu0 0.0
  %2078 = vmatpush1.msra.mxu0 0.0
  %2079 = vmatprep.subr.mxu0 0.0
  %2080 = vmatpush1.msra.mxu0 0.0
  %2081 = vmatprep.subr.mxu0 0.0
  %2082 = vmatpush1.msra.mxu0 0.0
  %2083 = vmatprep.subr.mxu0 0.0
  %2084 = vmatpush1.msra.mxu0 0.0
  %2085 = vmatprep.subr.mxu0 0.0
  %2086 = vmatpush1.msra.mxu0 0.0
  %2087 = vmatprep.subr.mxu0 0.0
  %2088 = vmatpush1.msra.mxu0 0.0
  %2089 = vmatprep.subr.mxu0 0.0
  %2090 = vmatpush1.msra.mxu0 0.0
  %2091 = vmatprep.subr.mxu0 0.0
  %2092 = vmatpush1.msra.mxu0 0.0
  %2093 = vmatprep.subr.mxu0 0.0
  %2094 = vmatpush1.msra.mxu0 0.0
  %2095 = vmatprep.subr.mxu0 0.0
  %2096 = vmatpush1.msra.mxu0 0.0
  %2097 = vmatprep.subr.mxu0 0.0
  %2098 = vmatpush1.msra.mxu0 0.0
  %2099 = vmatprep.subr.mxu0 0.0
  %2100 = vmatpush1.msra.mxu0 %v2060
  %2101 = vmatprep.subr.mxu0 0.0
  %2102 = vmatpush1.msra.mxu0 %v2059
  %2103 = vmatprep.subr.mxu0 0.0
  %2104 = vmatpush1.msra.mxu0 %v2058
  %2105 = vmatprep.subr.mxu0 0.0
  %2106 = vmatpush1.msra.mxu0 %v2057
  %2107 = vmatprep.subr.mxu0 0.0
  %2108 = vmatpush2.msra.mxu0 0.0
  %2109 = vmatprep.subr.mxu0 0.0
  %2110 = vmatpush2.msra.mxu0 0.0
  %2111 = vmatprep.subr.mxu0 0.0
  %2112 = vmatpush2.msra.mxu0 0.0
  %2113 = vmatprep.subr.mxu0 0.0
  %2114 = vmatpush2.msra.mxu0 0.0
  %2115 = vmatprep.subr.mxu0 0.0
  %2116 = vmatpush2.msra.mxu0 0.0
  %2117 = vmatprep.subr.mxu0 0.0
  %2118 = vmatpush2.msra.mxu0 0.0
  %2119 = vmatprep.subr.mxu0 0.0
  %2120 = vmatpush2.msra.mxu0 0.0
  %2121 = vmatprep.subr.mxu0 0.0
  %2122 = vmatpush2.msra.mxu0 0.0
  %2123 = vmatprep.subr.mxu0 0.0
  %2124 = vmatpush2.msra.mxu0 0.0
  %2125 = vmatprep.subr.mxu0 0.0
  %2126 = vmatpush2.msra.mxu0 0.0
  %2127 = vmatprep.subr.mxu0 0.0
  %2128 = vmatpush2.msra.mxu0 0.0
  %2129 = vmatprep.subr.mxu0 0.0
  %2130 = vmatpush2.msra.mxu0 0.0
  %2131 = vmatprep.subr.mxu0 0.0
  %2132 = vmatpush2.msra.mxu0 0.0
  %2133 = vmatprep.subr.mxu0 0.0
  %2134 = vmatpush2.msra.mxu0 0.0
  %2135 = vmatprep.subr.mxu0 0.0
  %2136 = vmatpush2.msra.mxu0 0.0
  %2137 = vmatprep.subr.mxu0 0.0
  %2138 = vmatpush2.msra.mxu0 0.0
  %2139 = vmatprep.mubr.f32.mxu0 0.0
  %2140 = vmatmul.mubr.f32.gmra.mxu0 %v2070
  %v2141 = vpop.f32.mrf.mxu0
  %v2142 = vadd.f32 %v2067, %v2141
  %v2143 = vpop.f32.mrf.mxu0
  %2144 = vmatprep.mubr.f32.mxu0 0.0
  %2145 = vmatmul.mubr.f32.gmra.mxu0 %v2073
  %v2146 = vpop.f32.mrf.mxu0
  %v2147 = vadd.f32 %v2067, %v2146
  %v2148 = vpop.f32.mrf.mxu0
  %2149 = vdwg.mxu0
  %v2150 = vadd.f32 %v2142, %v1280
  %v2151 = vadd.f32 %v2147, %v1281
  %s2152 = scalar_lea.vmem %s8, 1
  %v2153 = vld [vmem:[%s2152] sm:$0x1]
  %s2154 = scalar_lea.vmem %s9, 1
  %v2155 = vld [vmem:[%s2154] sm:$0x1]
  %v2156 = vsel %vm66, %v2150, 0.0
  %2157 = vadd.xlane.f32.xlu0 %v2156
  %v2158 = vpop.xlane.xlu0 %2157
  %v2159 = vsel %vm66, %v2151, 0.0
  %2160 = vadd.xlane.f32.xlu0 %v2159
  %v2161 = vpop.xlane.xlu0 %2160
  %v2162 = vmul.f32 %v2158, %v73
  %v2163 = vmul.f32 %v2161, %v73
  %v2164 = vsub.f32 %v2150, %v2162
  %v2165 = vsub.f32 %v2151, %v2163
  %v2166 = vmul.f32 %v2164, %v2164
  %v2167 = vmul.f32 %v2165, %v2165
  %v2168 = vsel %vm66, %v2166, 0.0
  %2169 = vadd.xlane.f32.xlu0 %v2168
  %v2170 = vpop.xlane.xlu0 %2169
  %v2171 = vsel %vm66, %v2167, 0.0
  %2172 = vadd.xlane.f32.xlu0 %v2171
  %v2173 = vpop.xlane.xlu0 %2172
  %v2174 = vmul.f32 %v2170, %v73
  %v2175 = vmul.f32 %v2173, %v73
  %v2176 = vadd.f32 %v2174, 1e-05
  %v2177 = vadd.f32 %v2175, 1e-05
  %v2178 = vrsqrt.pop %v2176
  %v2179 = vrsqrt.pop %v2177
  %v2180 = vmul.f32 %v2164, %v2178
  %v2181 = vmul.f32 %v2165, %v2179
  %v2183 = vlaneseq
  %v2184 = vshrl.u32 %v2183, 7
  %v2185 = vsub.s32 0, %v2184
  %v2186 = vrot.slane %v2153, %v2185
  %v2188 = vmul.f32 %v2180, %v2186
  %v2189 = vmul.f32 %v2181, %v2186
  %v2191 = vlaneseq
  %v2192 = vshrl.u32 %v2191, 7
  %v2193 = vsub.s32 0, %v2192
  %v2194 = vrot.slane %v2155, %v2193
  %v2196 = vadd.f32 %v2188, %v2194
  %v2197 = vadd.f32 %v2189, %v2194
  %s2198 = scalar_lea.vmem %s10, 32
  %v2199 = vld [vmem:[%s2198] sm:$0xff]
  %v2200 = vld [vmem:[%s2198 + $0x8] sm:$0xff]
  %v2201 = vld [vmem:[%s2198 + $0x10] sm:$0xff]
  %v2202 = vld [vmem:[%s2198 + $0x18] sm:$0xff]
  %s2203 = scalar_lea.vmem %s11, 1
  %v2204 = vld [vmem:[%s2203] sm:$0x1]
  %v2206 = vlaneseq
  %v2207 = vshrl.u32 %v2206, 7
  %v2208 = vsub.s32 0, %v2207
  %v2209 = vrot.slane %v2204, %v2208
  %v2212 = vsel %vm66, %v2196, 0
  %v2215 = vsel %vm66, %v2197, 0
  %2217 = vmatprep.subr.mxu0 0.0
  %2218 = vmatpush1.msra.mxu0 0.0
  %2219 = vmatprep.subr.mxu0 0.0
  %2220 = vmatpush1.msra.mxu0 0.0
  %2221 = vmatprep.subr.mxu0 0.0
  %2222 = vmatpush1.msra.mxu0 0.0
  %2223 = vmatprep.subr.mxu0 0.0
  %2224 = vmatpush1.msra.mxu0 0.0
  %2225 = vmatprep.subr.mxu0 0.0
  %2226 = vmatpush1.msra.mxu0 0.0
  %2227 = vmatprep.subr.mxu0 0.0
  %2228 = vmatpush1.msra.mxu0 0.0
  %2229 = vmatprep.subr.mxu0 0.0
  %2230 = vmatpush1.msra.mxu0 0.0
  %2231 = vmatprep.subr.mxu0 0.0
  %2232 = vmatpush1.msra.mxu0 0.0
  %2233 = vmatprep.subr.mxu0 0.0
  %2234 = vmatpush1.msra.mxu0 0.0
  %2235 = vmatprep.subr.mxu0 0.0
  %2236 = vmatpush1.msra.mxu0 0.0
  %2237 = vmatprep.subr.mxu0 0.0
  %2238 = vmatpush1.msra.mxu0 0.0
  %2239 = vmatprep.subr.mxu0 0.0
  %2240 = vmatpush1.msra.mxu0 0.0
  %2241 = vmatprep.subr.mxu0 0.0
  %2242 = vmatpush1.msra.mxu0 %v2202
  %2243 = vmatprep.subr.mxu0 0.0
  %2244 = vmatpush1.msra.mxu0 %v2201
  %2245 = vmatprep.subr.mxu0 0.0
  %2246 = vmatpush1.msra.mxu0 %v2200
  %2247 = vmatprep.subr.mxu0 0.0
  %2248 = vmatpush1.msra.mxu0 %v2199
  %2249 = vmatprep.subr.mxu0 0.0
  %2250 = vmatpush2.msra.mxu0 0.0
  %2251 = vmatprep.subr.mxu0 0.0
  %2252 = vmatpush2.msra.mxu0 0.0
  %2253 = vmatprep.subr.mxu0 0.0
  %2254 = vmatpush2.msra.mxu0 0.0
  %2255 = vmatprep.subr.mxu0 0.0
  %2256 = vmatpush2.msra.mxu0 0.0
  %2257 = vmatprep.subr.mxu0 0.0
  %2258 = vmatpush2.msra.mxu0 0.0
  %2259 = vmatprep.subr.mxu0 0.0
  %2260 = vmatpush2.msra.mxu0 0.0
  %2261 = vmatprep.subr.mxu0 0.0
  %2262 = vmatpush2.msra.mxu0 0.0
  %2263 = vmatprep.subr.mxu0 0.0
  %2264 = vmatpush2.msra.mxu0 0.0
  %2265 = vmatprep.subr.mxu0 0.0
  %2266 = vmatpush2.msra.mxu0 0.0
  %2267 = vmatprep.subr.mxu0 0.0
  %2268 = vmatpush2.msra.mxu0 0.0
  %2269 = vmatprep.subr.mxu0 0.0
  %2270 = vmatpush2.msra.mxu0 0.0
  %2271 = vmatprep.subr.mxu0 0.0
  %2272 = vmatpush2.msra.mxu0 0.0
  %2273 = vmatprep.subr.mxu0 0.0
  %2274 = vmatpush2.msra.mxu0 0.0
  %2275 = vmatprep.subr.mxu0 0.0
  %2276 = vmatpush2.msra.mxu0 0.0
  %2277 = vmatprep.subr.mxu0 0.0
  %2278 = vmatpush2.msra.mxu0 0.0
  %2279 = vmatprep.subr.mxu0 0.0
  %2280 = vmatpush2.msra.mxu0 0.0
  %2281 = vmatprep.mubr.f32.mxu0 0.0
  %2282 = vmatmul.mubr.f32.gmra.mxu0 %v2212
  %v2283 = vpop.f32.mrf.mxu0
  %v2284 = vadd.f32 %v2209, %v2283
  %v2285 = vpop.f32.mrf.mxu0
  %2286 = vmatprep.mubr.f32.mxu0 0.0
  %2287 = vmatmul.mubr.f32.gmra.mxu0 %v2215
  %v2288 = vpop.f32.mrf.mxu0
  %v2289 = vadd.f32 %v2209, %v2288
  %v2290 = vpop.f32.mrf.mxu0
  %2291 = vdwg.mxu0
  %v2292 = vmul.f32 %v2284, 0.5
  %v2293 = vmul.f32 %v2289, 0.5
  %v2294 = vmul.f32 %v2284, 0.044715
  %v2295 = vmul.f32 %v2289, 0.044715
  %v2296 = vmul.f32 %v2294, %v2284
  %v2297 = vmul.f32 %v2295, %v2289
  %v2298 = vmul.f32 %v2296, %v2284
  %v2299 = vmul.f32 %v2297, %v2289
  %v2300 = vadd.f32 %v2284, %v2298
  %v2301 = vadd.f32 %v2289, %v2299
  %v2302 = vmul.f32 %v2300, 0.7978846
  %v2303 = vmul.f32 %v2301, 0.7978846
  %v2304 = vtanh.pop %v2302
  %v2305 = vtanh.pop %v2303
  %v2306 = vadd.f32 %v2304, 1.0
  %v2307 = vadd.f32 %v2305, 1.0
  %v2308 = vmul.f32 %v2292, %v2306
  %v2309 = vmul.f32 %v2293, %v2307
  %s2310 = scalar_lea.vmem %s12, 64
  %v2311 = vld [vmem:[%s2310] sm:$0xff]
  %v2312 = vld [vmem:[%s2310 + $0x8] sm:$0xff]
  %v2313 = vld [vmem:[%s2310 + $0x10] sm:$0xff]
  %v2314 = vld [vmem:[%s2310 + $0x18] sm:$0xff]
  %v2315 = vld [vmem:[%s2310 + $0x20] sm:$0xff]
  %v2316 = vld [vmem:[%s2310 + $0x28] sm:$0xff]
  %v2317 = vld [vmem:[%s2310 + $0x30] sm:$0xff]
  %v2318 = vld [vmem:[%s2310 + $0x38] sm:$0xff]
  %s2319 = scalar_lea.vmem %s13, 1
  %v2320 = vld [vmem:[%s2319] sm:$0x1]
  %v2322 = vlaneseq
  %v2323 = vshrl.u32 %v2322, 7
  %v2324 = vsub.s32 0, %v2323
  %v2325 = vrot.slane %v2320, %v2324
  %v2328 = vsel %vm1154, %v2308, 0
  %v2331 = vsel %vm1154, %v2309, 0
  %2333 = vmatprep.subr.mxu0 0.0
  %2334 = vmatpush1.msra.mxu0 0.0
  %2335 = vmatprep.subr.mxu0 0.0
  %2336 = vmatpush1.msra.mxu0 0.0
  %2337 = vmatprep.subr.mxu0 0.0
  %2338 = vmatpush1.msra.mxu0 0.0
  %2339 = vmatprep.subr.mxu0 0.0
  %2340 = vmatpush1.msra.mxu0 0.0
  %2341 = vmatprep.subr.mxu0 0.0
  %2342 = vmatpush1.msra.mxu0 0.0
  %2343 = vmatprep.subr.mxu0 0.0
  %2344 = vmatpush1.msra.mxu0 0.0
  %2345 = vmatprep.subr.mxu0 0.0
  %2346 = vmatpush1.msra.mxu0 0.0
  %2347 = vmatprep.subr.mxu0 0.0
  %2348 = vmatpush1.msra.mxu0 0.0
  %2349 = vmatprep.subr.mxu0 0.0
  %2350 = vmatpush1.msra.mxu0 %v2318
  %2351 = vmatprep.subr.mxu0 0.0
  %2352 = vmatpush1.msra.mxu0 %v2317
  %2353 = vmatprep.subr.mxu0 0.0
  %2354 = vmatpush1.msra.mxu0 %v2316
  %2355 = vmatprep.subr.mxu0 0.0
  %2356 = vmatpush1.msra.mxu0 %v2315
  %2357 = vmatprep.subr.mxu0 0.0
  %2358 = vmatpush1.msra.mxu0 %v2314
  %2359 = vmatprep.subr.mxu0 0.0
  %2360 = vmatpush1.msra.mxu0 %v2313
  %2361 = vmatprep.subr.mxu0 0.0
  %2362 = vmatpush1.msra.mxu0 %v2312
  %2363 = vmatprep.subr.mxu0 0.0
  %2364 = vmatpush1.msra.mxu0 %v2311
  %2365 = vmatprep.subr.mxu0 0.0
  %2366 = vmatpush2.msra.mxu0 0.0
  %2367 = vmatprep.subr.mxu0 0.0
  %2368 = vmatpush2.msra.mxu0 0.0
  %2369 = vmatprep.subr.mxu0 0.0
  %2370 = vmatpush2.msra.mxu0 0.0
  %2371 = vmatprep.subr.mxu0 0.0
  %2372 = vmatpush2.msra.mxu0 0.0
  %2373 = vmatprep.subr.mxu0 0.0
  %2374 = vmatpush2.msra.mxu0 0.0
  %2375 = vmatprep.subr.mxu0 0.0
  %2376 = vmatpush2.msra.mxu0 0.0
  %2377 = vmatprep.subr.mxu0 0.0
  %2378 = vmatpush2.msra.mxu0 0.0
  %2379 = vmatprep.subr.mxu0 0.0
  %2380 = vmatpush2.msra.mxu0 0.0
  %2381 = vmatprep.subr.mxu0 0.0
  %2382 = vmatpush2.msra.mxu0 0.0
  %2383 = vmatprep.subr.mxu0 0.0
  %2384 = vmatpush2.msra.mxu0 0.0
  %2385 = vmatprep.subr.mxu0 0.0
  %2386 = vmatpush2.msra.mxu0 0.0
  %2387 = vmatprep.subr.mxu0 0.0
  %2388 = vmatpush2.msra.mxu0 0.0
  %2389 = vmatprep.subr.mxu0 0.0
  %2390 = vmatpush2.msra.mxu0 0.0
  %2391 = vmatprep.subr.mxu0 0.0
  %2392 = vmatpush2.msra.mxu0 0.0
  %2393 = vmatprep.subr.mxu0 0.0
  %2394 = vmatpush2.msra.mxu0 0.0
  %2395 = vmatprep.subr.mxu0 0.0
  %2396 = vmatpush2.msra.mxu0 0.0
  %2397 = vmatprep.mubr.f32.mxu0 0.0
  %2398 = vmatmul.mubr.f32.gmra.mxu0 %v2328
  %v2399 = vpop.f32.mrf.mxu0
  %v2400 = vadd.f32 %v2325, %v2399
  %v2401 = vpop.f32.mrf.mxu0
  %2402 = vmatprep.mubr.f32.mxu0 0.0
  %2403 = vmatmul.mubr.f32.gmra.mxu0 %v2331
  %v2404 = vpop.f32.mrf.mxu0
  %v2405 = vadd.f32 %v2325, %v2404
  %v2406 = vpop.f32.mrf.mxu0
  %2407 = vdwg.mxu0
  %v2408 = vadd.f32 %v2400, %v2196
  %v2409 = vadd.f32 %v2405, %v2197
  %s2410 = scalar_lea.vmem %s14, 1
  %v2411 = vld [vmem:[%s2410] sm:$0x1]
  %s2412 = scalar_lea.vmem %s15, 1
  %v2413 = vld [vmem:[%s2412] sm:$0x1]
  %v2414 = vsel %vm66, %v2408, 0.0
  %2415 = vadd.xlane.f32.xlu0 %v2414
  %v2416 = vpop.xlane.xlu0 %2415
  %v2417 = vsel %vm66, %v2409, 0.0
  %2418 = vadd.xlane.f32.xlu0 %v2417
  %v2419 = vpop.xlane.xlu0 %2418
  %v2420 = vmul.f32 %v2416, %v73
  %v2421 = vmul.f32 %v2419, %v73
  %v2422 = vsub.f32 %v2408, %v2420
  %v2423 = vsub.f32 %v2409, %v2421
  %v2424 = vmul.f32 %v2422, %v2422
  %v2425 = vmul.f32 %v2423, %v2423
  %v2426 = vsel %vm66, %v2424, 0.0
  %2427 = vadd.xlane.f32.xlu0 %v2426
  %v2428 = vpop.xlane.xlu0 %2427
  %v2429 = vsel %vm66, %v2425, 0.0
  %2430 = vadd.xlane.f32.xlu0 %v2429
  %v2431 = vpop.xlane.xlu0 %2430
  %v2432 = vmul.f32 %v2428, %v73
  %v2433 = vmul.f32 %v2431, %v73
  %v2434 = vadd.f32 %v2432, 1e-05
  %v2435 = vadd.f32 %v2433, 1e-05
  %v2436 = vrsqrt.pop %v2434
  %v2437 = vrsqrt.pop %v2435
  %v2438 = vmul.f32 %v2422, %v2436
  %v2439 = vmul.f32 %v2423, %v2437
  %v2441 = vlaneseq
  %v2442 = vshrl.u32 %v2441, 7
  %v2443 = vsub.s32 0, %v2442
  %v2444 = vrot.slane %v2411, %v2443
  %v2446 = vmul.f32 %v2438, %v2444
  %v2447 = vmul.f32 %v2439, %v2444
  %v2449 = vlaneseq
  %v2450 = vshrl.u32 %v2449, 7
  %v2451 = vsub.s32 0, %v2450
  %v2452 = vrot.slane %v2413, %v2451
  %v2454 = vadd.f32 %v2446, %v2452
  %v2455 = vadd.f32 %v2447, %v2452
  %v2456 = vadd.f32 %v1282, %v2454
  %v2457 = vadd.f32 %v1283, %v2455
  %v2458 = vmax.f32 %v1284, %v2454
  %v2459 = vmax.f32 %v1285, %v2455
  %s2460 = scalar_lea.vmem %s4, 64
  %v2461 = vld [vmem:[%s2460] sm:$0xff]
  %v2462 = vld [vmem:[%s2460 + $0x8] sm:$0xff]
  %v2463 = vld [vmem:[%s2460 + $0x10] sm:$0xff]
  %v2464 = vld [vmem:[%s2460 + $0x18] sm:$0xff]
  %s2465 = scalar_lea.vmem %s5, 2
  %v2466 = vld [vmem:[%s2465] sm:$0x1]
  %v2468 = vlaneseq
  %v2469 = vshrl.u32 %v2468, 7
  %v2470 = vsub.s32 0, %v2469
  %v2471 = vrot.slane %v2466, %v2470
  %v2474 = vsel %vm66, %v2454, 0
  %v2477 = vsel %vm66, %v2455, 0
  %2479 = vmatprep.subr.mxu0 0.0
  %2480 = vmatpush1.msra.mxu0 0.0
  %2481 = vmatprep.subr.mxu0 0.0
  %2482 = vmatpush1.msra.mxu0 0.0
  %2483 = vmatprep.subr.mxu0 0.0
  %2484 = vmatpush1.msra.mxu0 0.0
  %2485 = vmatprep.subr.mxu0 0.0
  %2486 = vmatpush1.msra.mxu0 0.0
  %2487 = vmatprep.subr.mxu0 0.0
  %2488 = vmatpush1.msra.mxu0 0.0
  %2489 = vmatprep.subr.mxu0 0.0
  %2490 = vmatpush1.msra.mxu0 0.0
  %2491 = vmatprep.subr.mxu0 0.0
  %2492 = vmatpush1.msra.mxu0 0.0
  %2493 = vmatprep.subr.mxu0 0.0
  %2494 = vmatpush1.msra.mxu0 0.0
  %2495 = vmatprep.subr.mxu0 0.0
  %2496 = vmatpush1.msra.mxu0 0.0
  %2497 = vmatprep.subr.mxu0 0.0
  %2498 = vmatpush1.msra.mxu0 0.0
  %2499 = vmatprep.subr.mxu0 0.0
  %2500 = vmatpush1.msra.mxu0 0.0
  %2501 = vmatprep.subr.mxu0 0.0
  %2502 = vmatpush1.msra.mxu0 0.0
  %2503 = vmatprep.subr.mxu0 0.0
  %2504 = vmatpush1.msra.mxu0 %v2464
  %2505 = vmatprep.subr.mxu0 0.0
  %2506 = vmatpush1.msra.mxu0 %v2463
  %2507 = vmatprep.subr.mxu0 0.0
  %2508 = vmatpush1.msra.mxu0 %v2462
  %2509 = vmatprep.subr.mxu0 0.0
  %2510 = vmatpush1.msra.mxu0 %v2461
  %2511 = vmatprep.subr.mxu0 0.0
  %2512 = vmatpush2.msra.mxu0 0.0
  %2513 = vmatprep.subr.mxu0 0.0
  %2514 = vmatpush2.msra.mxu0 0.0
  %2515 = vmatprep.subr.mxu0 0.0
  %2516 = vmatpush2.msra.mxu0 0.0
  %2517 = vmatprep.subr.mxu0 0.0
  %2518 = vmatpush2.msra.mxu0 0.0
  %2519 = vmatprep.subr.mxu0 0.0
  %2520 = vmatpush2.msra.mxu0 0.0
  %2521 = vmatprep.subr.mxu0 0.0
  %2522 = vmatpush2.msra.mxu0 0.0
  %2523 = vmatprep.subr.mxu0 0.0
  %2524 = vmatpush2.msra.mxu0 0.0
  %2525 = vmatprep.subr.mxu0 0.0
  %2526 = vmatpush2.msra.mxu0 0.0
  %2527 = vmatprep.subr.mxu0 0.0
  %2528 = vmatpush2.msra.mxu0 0.0
  %2529 = vmatprep.subr.mxu0 0.0
  %2530 = vmatpush2.msra.mxu0 0.0
  %2531 = vmatprep.subr.mxu0 0.0
  %2532 = vmatpush2.msra.mxu0 0.0
  %2533 = vmatprep.subr.mxu0 0.0
  %2534 = vmatpush2.msra.mxu0 0.0
  %2535 = vmatprep.subr.mxu0 0.0
  %2536 = vmatpush2.msra.mxu0 0.0
  %2537 = vmatprep.subr.mxu0 0.0
  %2538 = vmatpush2.msra.mxu0 0.0
  %2539 = vmatprep.subr.mxu0 0.0
  %2540 = vmatpush2.msra.mxu0 0.0
  %2541 = vmatprep.subr.mxu0 0.0
  %2542 = vmatpush2.msra.mxu0 0.0
  %2543 = vmatprep.mubr.f32.mxu0 0.0
  %2544 = vmatmul.mubr.f32.gmra.mxu0 %v2474
  %v2545 = vpop.f32.mrf.mxu0
  %v2546 = vadd.f32 %v2471, %v2545
  %v2547 = vpop.f32.mrf.mxu0
  %2548 = vmatprep.mubr.f32.mxu0 0.0
  %2549 = vmatmul.mubr.f32.gmra.mxu0 %v2477
  %v2550 = vpop.f32.mrf.mxu0
  %v2551 = vadd.f32 %v2471, %v2550
  %v2552 = vpop.f32.mrf.mxu0
  %2553 = vdwg.mxu0
  %2555 = vrot.lane.b32.xlu0 %v2546, 96
  %v2556 = vpop.permute.xlu0 %2555
  %v2557 = vsel %vm208, %v2546, 0
  %v2559 = vsel %vm208, %v2556, 0
  %2561 = vmatprep.subr.mxu0 0.0
  %2562 = vmatpush1.xpose.msra.mxu0 0.0
  %2563 = vmatprep.subr.mxu0 0.0
  %2564 = vmatpush1.xpose.msra.mxu0 0.0
  %2565 = vmatprep.subr.mxu0 0.0
  %2566 = vmatpush1.xpose.msra.mxu0 0.0
  %2567 = vmatprep.subr.mxu0 0.0
  %2568 = vmatpush1.xpose.msra.mxu0 0.0
  %2569 = vmatprep.subr.mxu0 0.0
  %2570 = vmatpush1.xpose.msra.mxu0 0.0
  %2571 = vmatprep.subr.mxu0 0.0
  %2572 = vmatpush1.xpose.msra.mxu0 0.0
  %2573 = vmatprep.subr.mxu0 0.0
  %2574 = vmatpush1.xpose.msra.mxu0 0.0
  %2575 = vmatprep.subr.mxu0 0.0
  %2576 = vmatpush1.xpose.msra.mxu0 0.0
  %2577 = vmatprep.subr.mxu0 0.0
  %2578 = vmatpush1.xpose.msra.mxu0 0.0
  %2579 = vmatprep.subr.mxu0 0.0
  %2580 = vmatpush1.xpose.msra.mxu0 0.0
  %2581 = vmatprep.subr.mxu0 0.0
  %2582 = vmatpush1.xpose.msra.mxu0 0.0
  %2583 = vmatprep.subr.mxu0 0.0
  %2584 = vmatpush1.xpose.msra.mxu0 0.0
  %2585 = vmatprep.subr.mxu0 0.0
  %2586 = vmatpush1.xpose.msra.mxu0 0.0
  %2587 = vmatprep.subr.mxu0 0.0
  %2588 = vmatpush1.xpose.msra.mxu0 0.0
  %2589 = vmatprep.subr.mxu0 0.0
  %2590 = vmatpush1.xpose.msra.mxu0 0.0
  %2591 = vmatprep.subr.mxu0 0.0
  %2592 = vmatpush1.xpose.msra.mxu0 %v2559
  %2593 = vmatprep.subr.mxu0 0.0
  %2594 = vmatpush2.xpose.msra.mxu0 0.0
  %2595 = vmatprep.subr.mxu0 0.0
  %2596 = vmatpush2.xpose.msra.mxu0 0.0
  %2597 = vmatprep.subr.mxu0 0.0
  %2598 = vmatpush2.xpose.msra.mxu0 0.0
  %2599 = vmatprep.subr.mxu0 0.0
  %2600 = vmatpush2.xpose.msra.mxu0 0.0
  %2601 = vmatprep.subr.mxu0 0.0
  %2602 = vmatpush2.xpose.msra.mxu0 0.0
  %2603 = vmatprep.subr.mxu0 0.0
  %2604 = vmatpush2.xpose.msra.mxu0 0.0
  %2605 = vmatprep.subr.mxu0 0.0
  %2606 = vmatpush2.xpose.msra.mxu0 0.0
  %2607 = vmatprep.subr.mxu0 0.0
  %2608 = vmatpush2.xpose.msra.mxu0 0.0
  %2609 = vmatprep.subr.mxu0 0.0
  %2610 = vmatpush2.xpose.msra.mxu0 0.0
  %2611 = vmatprep.subr.mxu0 0.0
  %2612 = vmatpush2.xpose.msra.mxu0 0.0
  %2613 = vmatprep.subr.mxu0 0.0
  %2614 = vmatpush2.xpose.msra.mxu0 0.0
  %2615 = vmatprep.subr.mxu0 0.0
  %2616 = vmatpush2.xpose.msra.mxu0 0.0
  %2617 = vmatprep.subr.mxu0 0.0
  %2618 = vmatpush2.xpose.msra.mxu0 0.0
  %2619 = vmatprep.subr.mxu0 0.0
  %2620 = vmatpush2.xpose.msra.mxu0 0.0
  %2621 = vmatprep.subr.mxu0 0.0
  %2622 = vmatpush2.xpose.msra.mxu0 0.0
  %2623 = vmatprep.subr.mxu0 0.0
  %2624 = vmatpush2.xpose.msra.mxu0 0.0
  %2625 = vmatprep.mubr.f32.mxu0 0.0
  %2626 = vmatmul.mubr.f32.gmra.mxu0 %v2557
  %v2627 = vpop.f32.mrf.mxu0
  %v2628 = vadd.f32 0.0, %v2627
  %v2629 = vpop.f32.mrf.mxu0
  %2630 = vdwg.mxu0
  %v2631 = vmul.f32 %v2628, 0.25
  %v2632 = vadd.f32 %v2631, %v287
  %v2633 = vsel %vm289, %v2632, -inf
  %2634 = vmax.xlane.f32.xlu0 %v2633
  %v2635 = vpop.xlane.xlu0 %2634
  %v2636 = vsub.f32 %v2632, %v2635
  %v2637 = vmul.f32 %v2636, 1.442695
  %v2638 = vpow.pop %v2637
  %v2639 = vsel %vm289, %v2638, 0.0
  %2640 = vadd.xlane.f32.xlu0 %v2639
  %v2641 = vpop.xlane.xlu0 %2640
  %v2642 = vrcp.pop %v2641
  %v2643 = vmul.f32 %v2638, %v2642
  %2644 = vrot.lane.b32.xlu0 %v2546, 64
  %v2645 = vpop.permute.xlu0 %2644
  %v2648 = vsel %vm289, %v2643, 0
  %2650 = vmatprep.subr.mxu0 0.0
  %2651 = vmatpush1.msra.mxu0 0.0
  %2652 = vmatprep.subr.mxu0 0.0
  %2653 = vmatpush1.msra.mxu0 0.0
  %2654 = vmatprep.subr.mxu0 0.0
  %2655 = vmatpush1.msra.mxu0 0.0
  %2656 = vmatprep.subr.mxu0 0.0
  %2657 = vmatpush1.msra.mxu0 0.0
  %2658 = vmatprep.subr.mxu0 0.0
  %2659 = vmatpush1.msra.mxu0 0.0
  %2660 = vmatprep.subr.mxu0 0.0
  %2661 = vmatpush1.msra.mxu0 0.0
  %2662 = vmatprep.subr.mxu0 0.0
  %2663 = vmatpush1.msra.mxu0 0.0
  %2664 = vmatprep.subr.mxu0 0.0
  %2665 = vmatpush1.msra.mxu0 0.0
  %2666 = vmatprep.subr.mxu0 0.0
  %2667 = vmatpush1.msra.mxu0 0.0
  %2668 = vmatprep.subr.mxu0 0.0
  %2669 = vmatpush1.msra.mxu0 0.0
  %2670 = vmatprep.subr.mxu0 0.0
  %2671 = vmatpush1.msra.mxu0 0.0
  %2672 = vmatprep.subr.mxu0 0.0
  %2673 = vmatpush1.msra.mxu0 0.0
  %2674 = vmatprep.subr.mxu0 0.0
  %2675 = vmatpush1.msra.mxu0 0.0
  %2676 = vmatprep.subr.mxu0 0.0
  %2677 = vmatpush1.msra.mxu0 0.0
  %2678 = vmatprep.subr.mxu0 0.0
  %2679 = vmatpush1.msra.mxu0 0.0
  %2680 = vmatprep.subr.mxu0 0.0
  %2681 = vmatpush1.msra.mxu0 %v2645
  %2682 = vmatprep.subr.mxu0 0.0
  %2683 = vmatpush2.msra.mxu0 0.0
  %2684 = vmatprep.subr.mxu0 0.0
  %2685 = vmatpush2.msra.mxu0 0.0
  %2686 = vmatprep.subr.mxu0 0.0
  %2687 = vmatpush2.msra.mxu0 0.0
  %2688 = vmatprep.subr.mxu0 0.0
  %2689 = vmatpush2.msra.mxu0 0.0
  %2690 = vmatprep.subr.mxu0 0.0
  %2691 = vmatpush2.msra.mxu0 0.0
  %2692 = vmatprep.subr.mxu0 0.0
  %2693 = vmatpush2.msra.mxu0 0.0
  %2694 = vmatprep.subr.mxu0 0.0
  %2695 = vmatpush2.msra.mxu0 0.0
  %2696 = vmatprep.subr.mxu0 0.0
  %2697 = vmatpush2.msra.mxu0 0.0
  %2698 = vmatprep.subr.mxu0 0.0
  %2699 = vmatpush2.msra.mxu0 0.0
  %2700 = vmatprep.subr.mxu0 0.0
  %2701 = vmatpush2.msra.mxu0 0.0
  %2702 = vmatprep.subr.mxu0 0.0
  %2703 = vmatpush2.msra.mxu0 0.0
  %2704 = vmatprep.subr.mxu0 0.0
  %2705 = vmatpush2.msra.mxu0 0.0
  %2706 = vmatprep.subr.mxu0 0.0
  %2707 = vmatpush2.msra.mxu0 0.0
  %2708 = vmatprep.subr.mxu0 0.0
  %2709 = vmatpush2.msra.mxu0 0.0
  %2710 = vmatprep.subr.mxu0 0.0
  %2711 = vmatpush2.msra.mxu0 0.0
  %2712 = vmatprep.subr.mxu0 0.0
  %2713 = vmatpush2.msra.mxu0 0.0
  %2714 = vmatprep.mubr.f32.mxu0 0.0
  %2715 = vmatmul.mubr.f32.gmra.mxu0 %v2648
  %v2716 = vpop.f32.mrf.mxu0
  %v2717 = vadd.f32 0.0, %v2716
  %v2718 = vpop.f32.mrf.mxu0
  %2719 = vdwg.mxu0
  %2720 = vrot.lane.b32.xlu0 %v2546, 112
  %v2721 = vpop.permute.xlu0 %2720
  %2722 = vrot.lane.b32.xlu0 %v2546, 80
  %v2723 = vpop.permute.xlu0 %2722
  %v2724 = vsel %vm208, %v2721, 0
  %v2726 = vsel %vm208, %v2723, 0
  %2728 = vmatprep.subr.mxu0 0.0
  %2729 = vmatpush1.xpose.msra.mxu0 0.0
  %2730 = vmatprep.subr.mxu0 0.0
  %2731 = vmatpush1.xpose.msra.mxu0 0.0
  %2732 = vmatprep.subr.mxu0 0.0
  %2733 = vmatpush1.xpose.msra.mxu0 0.0
  %2734 = vmatprep.subr.mxu0 0.0
  %2735 = vmatpush1.xpose.msra.mxu0 0.0
  %2736 = vmatprep.subr.mxu0 0.0
  %2737 = vmatpush1.xpose.msra.mxu0 0.0
  %2738 = vmatprep.subr.mxu0 0.0
  %2739 = vmatpush1.xpose.msra.mxu0 0.0
  %2740 = vmatprep.subr.mxu0 0.0
  %2741 = vmatpush1.xpose.msra.mxu0 0.0
  %2742 = vmatprep.subr.mxu0 0.0
  %2743 = vmatpush1.xpose.msra.mxu0 0.0
  %2744 = vmatprep.subr.mxu0 0.0
  %2745 = vmatpush1.xpose.msra.mxu0 0.0
  %2746 = vmatprep.subr.mxu0 0.0
  %2747 = vmatpush1.xpose.msra.mxu0 0.0
  %2748 = vmatprep.subr.mxu0 0.0
  %2749 = vmatpush1.xpose.msra.mxu0 0.0
  %2750 = vmatprep.subr.mxu0 0.0
  %2751 = vmatpush1.xpose.msra.mxu0 0.0
  %2752 = vmatprep.subr.mxu0 0.0
  %2753 = vmatpush1.xpose.msra.mxu0 0.0
  %2754 = vmatprep.subr.mxu0 0.0
  %2755 = vmatpush1.xpose.msra.mxu0 0.0
  %2756 = vmatprep.subr.mxu0 0.0
  %2757 = vmatpush1.xpose.msra.mxu0 0.0
  %2758 = vmatprep.subr.mxu0 0.0
  %2759 = vmatpush1.xpose.msra.mxu0 %v2726
  %2760 = vmatprep.subr.mxu0 0.0
  %2761 = vmatpush2.xpose.msra.mxu0 0.0
  %2762 = vmatprep.subr.mxu0 0.0
  %2763 = vmatpush2.xpose.msra.mxu0 0.0
  %2764 = vmatprep.subr.mxu0 0.0
  %2765 = vmatpush2.xpose.msra.mxu0 0.0
  %2766 = vmatprep.subr.mxu0 0.0
  %2767 = vmatpush2.xpose.msra.mxu0 0.0
  %2768 = vmatprep.subr.mxu0 0.0
  %2769 = vmatpush2.xpose.msra.mxu0 0.0
  %2770 = vmatprep.subr.mxu0 0.0
  %2771 = vmatpush2.xpose.msra.mxu0 0.0
  %2772 = vmatprep.subr.mxu0 0.0
  %2773 = vmatpush2.xpose.msra.mxu0 0.0
  %2774 = vmatprep.subr.mxu0 0.0
  %2775 = vmatpush2.xpose.msra.mxu0 0.0
  %2776 = vmatprep.subr.mxu0 0.0
  %2777 = vmatpush2.xpose.msra.mxu0 0.0
  %2778 = vmatprep.subr.mxu0 0.0
  %2779 = vmatpush2.xpose.msra.mxu0 0.0
  %2780 = vmatprep.subr.mxu0 0.0
  %2781 = vmatpush2.xpose.msra.mxu0 0.0
  %2782 = vmatprep.subr.mxu0 0.0
  %2783 = vmatpush2.xpose.msra.mxu0 0.0
  %2784 = vmatprep.subr.mxu0 0.0
  %2785 = vmatpush2.xpose.msra.mxu0 0.0
  %2786 = vmatprep.subr.mxu0 0.0
  %2787 = vmatpush2.xpose.msra.mxu0 0.0
  %2788 = vmatprep.subr.mxu0 0.0
  %2789 = vmatpush2.xpose.msra.mxu0 0.0
  %2790 = vmatprep.subr.mxu0 0.0
  %2791 = vmatpush2.xpose.msra.mxu0 0.0
  %2792 = vmatprep.mubr.f32.mxu0 0.0
  %2793 = vmatmul.mubr.f32.gmra.mxu0 %v2724
  %v2794 = vpop.f32.mrf.mxu0
  %v2795 = vadd.f32 0.0, %v2794
  %v2796 = vpop.f32.mrf.mxu0
  %2797 = vdwg.mxu0
  %v2798 = vmul.f32 %v2795, 0.25
  %v2799 = vadd.f32 %v2798, %v287
  %v2800 = vsel %vm289, %v2799, -inf
  %2801 = vmax.xlane.f32.xlu0 %v2800
  %v2802 = vpop.xlane.xlu0 %2801
  %v2803 = vsub.f32 %v2799, %v2802
  %v2804 = vmul.f32 %v2803, 1.442695
  %v2805 = vpow.pop %v2804
  %v2806 = vsel %vm289, %v2805, 0.0
  %2807 = vadd.xlane.f32.xlu0 %v2806
  %v2808 = vpop.xlane.xlu0 %2807
  %v2809 = vrcp.pop %v2808
  %v2810 = vmul.f32 %v2805, %v2809
  %2811 = vrot.lane.b32.xlu0 %v2546, 48
  %v2812 = vpop.permute.xlu0 %2811
  %v2815 = vsel %vm289, %v2810, 0
  %2817 = vmatprep.subr.mxu0 0.0
  %2818 = vmatpush1.msra.mxu0 0.0
  %2819 = vmatprep.subr.mxu0 0.0
  %2820 = vmatpush1.msra.mxu0 0.0
  %2821 = vmatprep.subr.mxu0 0.0
  %2822 = vmatpush1.msra.mxu0 0.0
  %2823 = vmatprep.subr.mxu0 0.0
  %2824 = vmatpush1.msra.mxu0 0.0
  %2825 = vmatprep.subr.mxu0 0.0
  %2826 = vmatpush1.msra.mxu0 0.0
  %2827 = vmatprep.subr.mxu0 0.0
  %2828 = vmatpush1.msra.mxu0 0.0
  %2829 = vmatprep.subr.mxu0 0.0
  %2830 = vmatpush1.msra.mxu0 0.0
  %2831 = vmatprep.subr.mxu0 0.0
  %2832 = vmatpush1.msra.mxu0 0.0
  %2833 = vmatprep.subr.mxu0 0.0
  %2834 = vmatpush1.msra.mxu0 0.0
  %2835 = vmatprep.subr.mxu0 0.0
  %2836 = vmatpush1.msra.mxu0 0.0
  %2837 = vmatprep.subr.mxu0 0.0
  %2838 = vmatpush1.msra.mxu0 0.0
  %2839 = vmatprep.subr.mxu0 0.0
  %2840 = vmatpush1.msra.mxu0 0.0
  %2841 = vmatprep.subr.mxu0 0.0
  %2842 = vmatpush1.msra.mxu0 0.0
  %2843 = vmatprep.subr.mxu0 0.0
  %2844 = vmatpush1.msra.mxu0 0.0
  %2845 = vmatprep.subr.mxu0 0.0
  %2846 = vmatpush1.msra.mxu0 0.0
  %2847 = vmatprep.subr.mxu0 0.0
  %2848 = vmatpush1.msra.mxu0 %v2812
  %2849 = vmatprep.subr.mxu0 0.0
  %2850 = vmatpush2.msra.mxu0 0.0
  %2851 = vmatprep.subr.mxu0 0.0
  %2852 = vmatpush2.msra.mxu0 0.0
  %2853 = vmatprep.subr.mxu0 0.0
  %2854 = vmatpush2.msra.mxu0 0.0
  %2855 = vmatprep.subr.mxu0 0.0
  %2856 = vmatpush2.msra.mxu0 0.0
  %2857 = vmatprep.subr.mxu0 0.0
  %2858 = vmatpush2.msra.mxu0 0.0
  %2859 = vmatprep.subr.mxu0 0.0
  %2860 = vmatpush2.msra.mxu0 0.0
  %2861 = vmatprep.subr.mxu0 0.0
  %2862 = vmatpush2.msra.mxu0 0.0
  %2863 = vmatprep.subr.mxu0 0.0
  %2864 = vmatpush2.msra.mxu0 0.0
  %2865 = vmatprep.subr.mxu0 0.0
  %2866 = vmatpush2.msra.mxu0 0.0
  %2867 = vmatprep.subr.mxu0 0.0
  %2868 = vmatpush2.msra.mxu0 0.0
  %2869 = vmatprep.subr.mxu0 0.0
  %2870 = vmatpush2.msra.mxu0 0.0
  %2871 = vmatprep.subr.mxu0 0.0
  %2872 = vmatpush2.msra.mxu0 0.0
  %2873 = vmatprep.subr.mxu0 0.0
  %2874 = vmatpush2.msra.mxu0 0.0
  %2875 = vmatprep.subr.mxu0 0.0
  %2876 = vmatpush2.msra.mxu0 0.0
  %2877 = vmatprep.subr.mxu0 0.0
  %2878 = vmatpush2.msra.mxu0 0.0
  %2879 = vmatprep.subr.mxu0 0.0
  %2880 = vmatpush2.msra.mxu0 0.0
  %2881 = vmatprep.mubr.f32.mxu0 0.0
  %2882 = vmatmul.mubr.f32.gmra.mxu0 %v2815
  %v2883 = vpop.f32.mrf.mxu0
  %v2884 = vadd.f32 0.0, %v2883
  %v2885 = vpop.f32.mrf.mxu0
  %2886 = vdwg.mxu0
  %2888 = vrot.lane.b32.xlu0 %v2884, 16
  %v2889 = vpop.permute.xlu0 %2888
  %v2891 = vsel %vm208, %v2717, %v2889
  %2893 = vrot.lane.b32.xlu0 %v2551, 96
  %v2894 = vpop.permute.xlu0 %2893
  %v2895 = vsel %vm208, %v2551, 0
  %v2897 = vsel %vm208, %v2894, 0
  %2899 = vmatprep.subr.mxu0 0.0
  %2900 = vmatpush1.xpose.msra.mxu0 0.0
  %2901 = vmatprep.subr.mxu0 0.0
  %2902 = vmatpush1.xpose.msra.mxu0 0.0
  %2903 = vmatprep.subr.mxu0 0.0
  %2904 = vmatpush1.xpose.msra.mxu0 0.0
  %2905 = vmatprep.subr.mxu0 0.0
  %2906 = vmatpush1.xpose.msra.mxu0 0.0
  %2907 = vmatprep.subr.mxu0 0.0
  %2908 = vmatpush1.xpose.msra.mxu0 0.0
  %2909 = vmatprep.subr.mxu0 0.0
  %2910 = vmatpush1.xpose.msra.mxu0 0.0
  %2911 = vmatprep.subr.mxu0 0.0
  %2912 = vmatpush1.xpose.msra.mxu0 0.0
  %2913 = vmatprep.subr.mxu0 0.0
  %2914 = vmatpush1.xpose.msra.mxu0 0.0
  %2915 = vmatprep.subr.mxu0 0.0
  %2916 = vmatpush1.xpose.msra.mxu0 0.0
  %2917 = vmatprep.subr.mxu0 0.0
  %2918 = vmatpush1.xpose.msra.mxu0 0.0
  %2919 = vmatprep.subr.mxu0 0.0
  %2920 = vmatpush1.xpose.msra.mxu0 0.0
  %2921 = vmatprep.subr.mxu0 0.0
  %2922 = vmatpush1.xpose.msra.mxu0 0.0
  %2923 = vmatprep.subr.mxu0 0.0
  %2924 = vmatpush1.xpose.msra.mxu0 0.0
  %2925 = vmatprep.subr.mxu0 0.0
  %2926 = vmatpush1.xpose.msra.mxu0 0.0
  %2927 = vmatprep.subr.mxu0 0.0
  %2928 = vmatpush1.xpose.msra.mxu0 0.0
  %2929 = vmatprep.subr.mxu0 0.0
  %2930 = vmatpush1.xpose.msra.mxu0 %v2897
  %2931 = vmatprep.subr.mxu0 0.0
  %2932 = vmatpush2.xpose.msra.mxu0 0.0
  %2933 = vmatprep.subr.mxu0 0.0
  %2934 = vmatpush2.xpose.msra.mxu0 0.0
  %2935 = vmatprep.subr.mxu0 0.0
  %2936 = vmatpush2.xpose.msra.mxu0 0.0
  %2937 = vmatprep.subr.mxu0 0.0
  %2938 = vmatpush2.xpose.msra.mxu0 0.0
  %2939 = vmatprep.subr.mxu0 0.0
  %2940 = vmatpush2.xpose.msra.mxu0 0.0
  %2941 = vmatprep.subr.mxu0 0.0
  %2942 = vmatpush2.xpose.msra.mxu0 0.0
  %2943 = vmatprep.subr.mxu0 0.0
  %2944 = vmatpush2.xpose.msra.mxu0 0.0
  %2945 = vmatprep.subr.mxu0 0.0
  %2946 = vmatpush2.xpose.msra.mxu0 0.0
  %2947 = vmatprep.subr.mxu0 0.0
  %2948 = vmatpush2.xpose.msra.mxu0 0.0
  %2949 = vmatprep.subr.mxu0 0.0
  %2950 = vmatpush2.xpose.msra.mxu0 0.0
  %2951 = vmatprep.subr.mxu0 0.0
  %2952 = vmatpush2.xpose.msra.mxu0 0.0
  %2953 = vmatprep.subr.mxu0 0.0
  %2954 = vmatpush2.xpose.msra.mxu0 0.0
  %2955 = vmatprep.subr.mxu0 0.0
  %2956 = vmatpush2.xpose.msra.mxu0 0.0
  %2957 = vmatprep.subr.mxu0 0.0
  %2958 = vmatpush2.xpose.msra.mxu0 0.0
  %2959 = vmatprep.subr.mxu0 0.0
  %2960 = vmatpush2.xpose.msra.mxu0 0.0
  %2961 = vmatprep.subr.mxu0 0.0
  %2962 = vmatpush2.xpose.msra.mxu0 0.0
  %2963 = vmatprep.mubr.f32.mxu0 0.0
  %2964 = vmatmul.mubr.f32.gmra.mxu0 %v2895
  %v2965 = vpop.f32.mrf.mxu0
  %v2966 = vadd.f32 0.0, %v2965
  %v2967 = vpop.f32.mrf.mxu0
  %2968 = vdwg.mxu0
  %v2969 = vmul.f32 %v2966, 0.25
  %v2970 = vadd.f32 %v2969, %v630
  %v2971 = vsel %vm289, %v2970, -inf
  %2972 = vmax.xlane.f32.xlu0 %v2971
  %v2973 = vpop.xlane.xlu0 %2972
  %v2974 = vsub.f32 %v2970, %v2973
  %v2975 = vmul.f32 %v2974, 1.442695
  %v2976 = vpow.pop %v2975
  %v2977 = vsel %vm289, %v2976, 0.0
  %2978 = vadd.xlane.f32.xlu0 %v2977
  %v2979 = vpop.xlane.xlu0 %2978
  %v2980 = vrcp.pop %v2979
  %v2981 = vmul.f32 %v2976, %v2980
  %2982 = vrot.lane.b32.xlu0 %v2551, 64
  %v2983 = vpop.permute.xlu0 %2982
  %v2986 = vsel %vm289, %v2981, 0
  %2988 = vmatprep.subr.mxu0 0.0
  %2989 = vmatpush1.msra.mxu0 0.0
  %2990 = vmatprep.subr.mxu0 0.0
  %2991 = vmatpush1.msra.mxu0 0.0
  %2992 = vmatprep.subr.mxu0 0.0
  %2993 = vmatpush1.msra.mxu0 0.0
  %2994 = vmatprep.subr.mxu0 0.0
  %2995 = vmatpush1.msra.mxu0 0.0
  %2996 = vmatprep.subr.mxu0 0.0
  %2997 = vmatpush1.msra.mxu0 0.0
  %2998 = vmatprep.subr.mxu0 0.0
  %2999 = vmatpush1.msra.mxu0 0.0
  %3000 = vmatprep.subr.mxu0 0.0
  %3001 = vmatpush1.msra.mxu0 0.0
  %3002 = vmatprep.subr.mxu0 0.0
  %3003 = vmatpush1.msra.mxu0 0.0
  %3004 = vmatprep.subr.mxu0 0.0
  %3005 = vmatpush1.msra.mxu0 0.0
  %3006 = vmatprep.subr.mxu0 0.0
  %3007 = vmatpush1.msra.mxu0 0.0
  %3008 = vmatprep.subr.mxu0 0.0
  %3009 = vmatpush1.msra.mxu0 0.0
  %3010 = vmatprep.subr.mxu0 0.0
  %3011 = vmatpush1.msra.mxu0 0.0
  %3012 = vmatprep.subr.mxu0 0.0
  %3013 = vmatpush1.msra.mxu0 0.0
  %3014 = vmatprep.subr.mxu0 0.0
  %3015 = vmatpush1.msra.mxu0 0.0
  %3016 = vmatprep.subr.mxu0 0.0
  %3017 = vmatpush1.msra.mxu0 0.0
  %3018 = vmatprep.subr.mxu0 0.0
  %3019 = vmatpush1.msra.mxu0 %v2983
  %3020 = vmatprep.subr.mxu0 0.0
  %3021 = vmatpush2.msra.mxu0 0.0
  %3022 = vmatprep.subr.mxu0 0.0
  %3023 = vmatpush2.msra.mxu0 0.0
  %3024 = vmatprep.subr.mxu0 0.0
  %3025 = vmatpush2.msra.mxu0 0.0
  %3026 = vmatprep.subr.mxu0 0.0
  %3027 = vmatpush2.msra.mxu0 0.0
  %3028 = vmatprep.subr.mxu0 0.0
  %3029 = vmatpush2.msra.mxu0 0.0
  %3030 = vmatprep.subr.mxu0 0.0
  %3031 = vmatpush2.msra.mxu0 0.0
  %3032 = vmatprep.subr.mxu0 0.0
  %3033 = vmatpush2.msra.mxu0 0.0
  %3034 = vmatprep.subr.mxu0 0.0
  %3035 = vmatpush2.msra.mxu0 0.0
  %3036 = vmatprep.subr.mxu0 0.0
  %3037 = vmatpush2.msra.mxu0 0.0
  %3038 = vmatprep.subr.mxu0 0.0
  %3039 = vmatpush2.msra.mxu0 0.0
  %3040 = vmatprep.subr.mxu0 0.0
  %3041 = vmatpush2.msra.mxu0 0.0
  %3042 = vmatprep.subr.mxu0 0.0
  %3043 = vmatpush2.msra.mxu0 0.0
  %3044 = vmatprep.subr.mxu0 0.0
  %3045 = vmatpush2.msra.mxu0 0.0
  %3046 = vmatprep.subr.mxu0 0.0
  %3047 = vmatpush2.msra.mxu0 0.0
  %3048 = vmatprep.subr.mxu0 0.0
  %3049 = vmatpush2.msra.mxu0 0.0
  %3050 = vmatprep.subr.mxu0 0.0
  %3051 = vmatpush2.msra.mxu0 0.0
  %3052 = vmatprep.mubr.f32.mxu0 0.0
  %3053 = vmatmul.mubr.f32.gmra.mxu0 %v2986
  %v3054 = vpop.f32.mrf.mxu0
  %v3055 = vadd.f32 0.0, %v3054
  %v3056 = vpop.f32.mrf.mxu0
  %3057 = vdwg.mxu0
  %3058 = vrot.lane.b32.xlu0 %v2551, 112
  %v3059 = vpop.permute.xlu0 %3058
  %3060 = vrot.lane.b32.xlu0 %v2551, 80
  %v3061 = vpop.permute.xlu0 %3060
  %v3062 = vsel %vm208, %v3059, 0
  %v3064 = vsel %vm208, %v3061, 0
  %3066 = vmatprep.subr.mxu0 0.0
  %3067 = vmatpush1.xpose.msra.mxu0 0.0
  %3068 = vmatprep.subr.mxu0 0.0
  %3069 = vmatpush1.xpose.msra.mxu0 0.0
  %3070 = vmatprep.subr.mxu0 0.0
  %3071 = vmatpush1.xpose.msra.mxu0 0.0
  %3072 = vmatprep.subr.mxu0 0.0
  %3073 = vmatpush1.xpose.msra.mxu0 0.0
  %3074 = vmatprep.subr.mxu0 0.0
  %3075 = vmatpush1.xpose.msra.mxu0 0.0
  %3076 = vmatprep.subr.mxu0 0.0
  %3077 = vmatpush1.xpose.msra.mxu0 0.0
  %3078 = vmatprep.subr.mxu0 0.0
  %3079 = vmatpush1.xpose.msra.mxu0 0.0
  %3080 = vmatprep.subr.mxu0 0.0
  %3081 = vmatpush1.xpose.msra.mxu0 0.0
  %3082 = vmatprep.subr.mxu0 0.0
  %3083 = vmatpush1.xpose.msra.mxu0 0.0
  %3084 = vmatprep.subr.mxu0 0.0
  %3085 = vmatpush1.xpose.msra.mxu0 0.0
  %3086 = vmatprep.subr.mxu0 0.0
  %3087 = vmatpush1.xpose.msra.mxu0 0.0
  %3088 = vmatprep.subr.mxu0 0.0
  %3089 = vmatpush1.xpose.msra.mxu0 0.0
  %3090 = vmatprep.subr.mxu0 0.0
  %3091 = vmatpush1.xpose.msra.mxu0 0.0
  %3092 = vmatprep.subr.mxu0 0.0
  %3093 = vmatpush1.xpose.msra.mxu0 0.0
  %3094 = vmatprep.subr.mxu0 0.0
  %3095 = vmatpush1.xpose.msra.mxu0 0.0
  %3096 = vmatprep.subr.mxu0 0.0
  %3097 = vmatpush1.xpose.msra.mxu0 %v3064
  %3098 = vmatprep.subr.mxu0 0.0
  %3099 = vmatpush2.xpose.msra.mxu0 0.0
  %3100 = vmatprep.subr.mxu0 0.0
  %3101 = vmatpush2.xpose.msra.mxu0 0.0
  %3102 = vmatprep.subr.mxu0 0.0
  %3103 = vmatpush2.xpose.msra.mxu0 0.0
  %3104 = vmatprep.subr.mxu0 0.0
  %3105 = vmatpush2.xpose.msra.mxu0 0.0
  %3106 = vmatprep.subr.mxu0 0.0
  %3107 = vmatpush2.xpose.msra.mxu0 0.0
  %3108 = vmatprep.subr.mxu0 0.0
  %3109 = vmatpush2.xpose.msra.mxu0 0.0
  %3110 = vmatprep.subr.mxu0 0.0
  %3111 = vmatpush2.xpose.msra.mxu0 0.0
  %3112 = vmatprep.subr.mxu0 0.0
  %3113 = vmatpush2.xpose.msra.mxu0 0.0
  %3114 = vmatprep.subr.mxu0 0.0
  %3115 = vmatpush2.xpose.msra.mxu0 0.0
  %3116 = vmatprep.subr.mxu0 0.0
  %3117 = vmatpush2.xpose.msra.mxu0 0.0
  %3118 = vmatprep.subr.mxu0 0.0
  %3119 = vmatpush2.xpose.msra.mxu0 0.0
  %3120 = vmatprep.subr.mxu0 0.0
  %3121 = vmatpush2.xpose.msra.mxu0 0.0
  %3122 = vmatprep.subr.mxu0 0.0
  %3123 = vmatpush2.xpose.msra.mxu0 0.0
  %3124 = vmatprep.subr.mxu0 0.0
  %3125 = vmatpush2.xpose.msra.mxu0 0.0
  %3126 = vmatprep.subr.mxu0 0.0
  %3127 = vmatpush2.xpose.msra.mxu0 0.0
  %3128 = vmatprep.subr.mxu0 0.0
  %3129 = vmatpush2.xpose.msra.mxu0 0.0
  %3130 = vmatprep.mubr.f32.mxu0 0.0
  %3131 = vmatmul.mubr.f32.gmra.mxu0 %v3062
  %v3132 = vpop.f32.mrf.mxu0
  %v3133 = vadd.f32 0.0, %v3132
  %v3134 = vpop.f32.mrf.mxu0
  %3135 = vdwg.mxu0
  %v3136 = vmul.f32 %v3133, 0.25
  %v3137 = vadd.f32 %v3136, %v630
  %v3138 = vsel %vm289, %v3137, -inf
  %3139 = vmax.xlane.f32.xlu0 %v3138
  %v3140 = vpop.xlane.xlu0 %3139
  %v3141 = vsub.f32 %v3137, %v3140
  %v3142 = vmul.f32 %v3141, 1.442695
  %v3143 = vpow.pop %v3142
  %v3144 = vsel %vm289, %v3143, 0.0
  %3145 = vadd.xlane.f32.xlu0 %v3144
  %v3146 = vpop.xlane.xlu0 %3145
  %v3147 = vrcp.pop %v3146
  %v3148 = vmul.f32 %v3143, %v3147
  %3149 = vrot.lane.b32.xlu0 %v2551, 48
  %v3150 = vpop.permute.xlu0 %3149
  %v3153 = vsel %vm289, %v3148, 0
  %3155 = vmatprep.subr.mxu0 0.0
  %3156 = vmatpush1.msra.mxu0 0.0
  %3157 = vmatprep.subr.mxu0 0.0
  %3158 = vmatpush1.msra.mxu0 0.0
  %3159 = vmatprep.subr.mxu0 0.0
  %3160 = vmatpush1.msra.mxu0 0.0
  %3161 = vmatprep.subr.mxu0 0.0
  %3162 = vmatpush1.msra.mxu0 0.0
  %3163 = vmatprep.subr.mxu0 0.0
  %3164 = vmatpush1.msra.mxu0 0.0
  %3165 = vmatprep.subr.mxu0 0.0
  %3166 = vmatpush1.msra.mxu0 0.0
  %3167 = vmatprep.subr.mxu0 0.0
  %3168 = vmatpush1.msra.mxu0 0.0
  %3169 = vmatprep.subr.mxu0 0.0
  %3170 = vmatpush1.msra.mxu0 0.0
  %3171 = vmatprep.subr.mxu0 0.0
  %3172 = vmatpush1.msra.mxu0 0.0
  %3173 = vmatprep.subr.mxu0 0.0
  %3174 = vmatpush1.msra.mxu0 0.0
  %3175 = vmatprep.subr.mxu0 0.0
  %3176 = vmatpush1.msra.mxu0 0.0
  %3177 = vmatprep.subr.mxu0 0.0
  %3178 = vmatpush1.msra.mxu0 0.0
  %3179 = vmatprep.subr.mxu0 0.0
  %3180 = vmatpush1.msra.mxu0 0.0
  %3181 = vmatprep.subr.mxu0 0.0
  %3182 = vmatpush1.msra.mxu0 0.0
  %3183 = vmatprep.subr.mxu0 0.0
  %3184 = vmatpush1.msra.mxu0 0.0
  %3185 = vmatprep.subr.mxu0 0.0
  %3186 = vmatpush1.msra.mxu0 %v3150
  %3187 = vmatprep.subr.mxu0 0.0
  %3188 = vmatpush2.msra.mxu0 0.0
  %3189 = vmatprep.subr.mxu0 0.0
  %3190 = vmatpush2.msra.mxu0 0.0
  %3191 = vmatprep.subr.mxu0 0.0
  %3192 = vmatpush2.msra.mxu0 0.0
  %3193 = vmatprep.subr.mxu0 0.0
  %3194 = vmatpush2.msra.mxu0 0.0
  %3195 = vmatprep.subr.mxu0 0.0
  %3196 = vmatpush2.msra.mxu0 0.0
  %3197 = vmatprep.subr.mxu0 0.0
  %3198 = vmatpush2.msra.mxu0 0.0
  %3199 = vmatprep.subr.mxu0 0.0
  %3200 = vmatpush2.msra.mxu0 0.0
  %3201 = vmatprep.subr.mxu0 0.0
  %3202 = vmatpush2.msra.mxu0 0.0
  %3203 = vmatprep.subr.mxu0 0.0
  %3204 = vmatpush2.msra.mxu0 0.0
  %3205 = vmatprep.subr.mxu0 0.0
  %3206 = vmatpush2.msra.mxu0 0.0
  %3207 = vmatprep.subr.mxu0 0.0
  %3208 = vmatpush2.msra.mxu0 0.0
  %3209 = vmatprep.subr.mxu0 0.0
  %3210 = vmatpush2.msra.mxu0 0.0
  %3211 = vmatprep.subr.mxu0 0.0
  %3212 = vmatpush2.msra.mxu0 0.0
  %3213 = vmatprep.subr.mxu0 0.0
  %3214 = vmatpush2.msra.mxu0 0.0
  %3215 = vmatprep.subr.mxu0 0.0
  %3216 = vmatpush2.msra.mxu0 0.0
  %3217 = vmatprep.subr.mxu0 0.0
  %3218 = vmatpush2.msra.mxu0 0.0
  %3219 = vmatprep.mubr.f32.mxu0 0.0
  %3220 = vmatmul.mubr.f32.gmra.mxu0 %v3153
  %v3221 = vpop.f32.mrf.mxu0
  %v3222 = vadd.f32 0.0, %v3221
  %v3223 = vpop.f32.mrf.mxu0
  %3224 = vdwg.mxu0
  %3226 = vrot.lane.b32.xlu0 %v3222, 16
  %v3227 = vpop.permute.xlu0 %3226
  %v3229 = vsel %vm208, %v3055, %v3227
  %s3230 = scalar_lea.vmem %s6, 64
  %v3231 = vld [vmem:[%s3230] sm:$0xff]
  %v3232 = vld [vmem:[%s3230 + $0x8] sm:$0xff]
  %v3233 = vld [vmem:[%s3230 + $0x10] sm:$0xff]
  %v3234 = vld [vmem:[%s3230 + $0x18] sm:$0xff]
  %s3235 = scalar_lea.vmem %s7, 2
  %v3236 = vld [vmem:[%s3235] sm:$0x1]
  %v3238 = vlaneseq
  %v3239 = vshrl.u32 %v3238, 7
  %v3240 = vsub.s32 0, %v3239
  %v3241 = vrot.slane %v3236, %v3240
  %v3244 = vsel %vm66, %v2891, 0
  %v3247 = vsel %vm66, %v3229, 0
  %3249 = vmatprep.subr.mxu0 0.0
  %3250 = vmatpush1.msra.mxu0 0.0
  %3251 = vmatprep.subr.mxu0 0.0
  %3252 = vmatpush1.msra.mxu0 0.0
  %3253 = vmatprep.subr.mxu0 0.0
  %3254 = vmatpush1.msra.mxu0 0.0
  %3255 = vmatprep.subr.mxu0 0.0
  %3256 = vmatpush1.msra.mxu0 0.0
  %3257 = vmatprep.subr.mxu0 0.0
  %3258 = vmatpush1.msra.mxu0 0.0
  %3259 = vmatprep.subr.mxu0 0.0
  %3260 = vmatpush1.msra.mxu0 0.0
  %3261 = vmatprep.subr.mxu0 0.0
  %3262 = vmatpush1.msra.mxu0 0.0
  %3263 = vmatprep.subr.mxu0 0.0
  %3264 = vmatpush1.msra.mxu0 0.0
  %3265 = vmatprep.subr.mxu0 0.0
  %3266 = vmatpush1.msra.mxu0 0.0
  %3267 = vmatprep.subr.mxu0 0.0
  %3268 = vmatpush1.msra.mxu0 0.0
  %3269 = vmatprep.subr.mxu0 0.0
  %3270 = vmatpush1.msra.mxu0 0.0
  %3271 = vmatprep.subr.mxu0 0.0
  %3272 = vmatpush1.msra.mxu0 0.0
  %3273 = vmatprep.subr.mxu0 0.0
  %3274 = vmatpush1.msra.mxu0 %v3234
  %3275 = vmatprep.subr.mxu0 0.0
  %3276 = vmatpush1.msra.mxu0 %v3233
  %3277 = vmatprep.subr.mxu0 0.0
  %3278 = vmatpush1.msra.mxu0 %v3232
  %3279 = vmatprep.subr.mxu0 0.0
  %3280 = vmatpush1.msra.mxu0 %v3231
  %3281 = vmatprep.subr.mxu0 0.0
  %3282 = vmatpush2.msra.mxu0 0.0
  %3283 = vmatprep.subr.mxu0 0.0
  %3284 = vmatpush2.msra.mxu0 0.0
  %3285 = vmatprep.subr.mxu0 0.0
  %3286 = vmatpush2.msra.mxu0 0.0
  %3287 = vmatprep.subr.mxu0 0.0
  %3288 = vmatpush2.msra.mxu0 0.0
  %3289 = vmatprep.subr.mxu0 0.0
  %3290 = vmatpush2.msra.mxu0 0.0
  %3291 = vmatprep.subr.mxu0 0.0
  %3292 = vmatpush2.msra.mxu0 0.0
  %3293 = vmatprep.subr.mxu0 0.0
  %3294 = vmatpush2.msra.mxu0 0.0
  %3295 = vmatprep.subr.mxu0 0.0
  %3296 = vmatpush2.msra.mxu0 0.0
  %3297 = vmatprep.subr.mxu0 0.0
  %3298 = vmatpush2.msra.mxu0 0.0
  %3299 = vmatprep.subr.mxu0 0.0
  %3300 = vmatpush2.msra.mxu0 0.0
  %3301 = vmatprep.subr.mxu0 0.0
  %3302 = vmatpush2.msra.mxu0 0.0
  %3303 = vmatprep.subr.mxu0 0.0
  %3304 = vmatpush2.msra.mxu0 0.0
  %3305 = vmatprep.subr.mxu0 0.0
  %3306 = vmatpush2.msra.mxu0 0.0
  %3307 = vmatprep.subr.mxu0 0.0
  %3308 = vmatpush2.msra.mxu0 0.0
  %3309 = vmatprep.subr.mxu0 0.0
  %3310 = vmatpush2.msra.mxu0 0.0
  %3311 = vmatprep.subr.mxu0 0.0
  %3312 = vmatpush2.msra.mxu0 0.0
  %3313 = vmatprep.mubr.f32.mxu0 0.0
  %3314 = vmatmul.mubr.f32.gmra.mxu0 %v3244
  %v3315 = vpop.f32.mrf.mxu0
  %v3316 = vadd.f32 %v3241, %v3315
  %v3317 = vpop.f32.mrf.mxu0
  %3318 = vmatprep.mubr.f32.mxu0 0.0
  %3319 = vmatmul.mubr.f32.gmra.mxu0 %v3247
  %v3320 = vpop.f32.mrf.mxu0
  %v3321 = vadd.f32 %v3241, %v3320
  %v3322 = vpop.f32.mrf.mxu0
  %3323 = vdwg.mxu0
  %v3324 = vadd.f32 %v3316, %v2454
  %v3325 = vadd.f32 %v3321, %v2455
  %s3326 = scalar_lea.vmem %s8, 2
  %v3327 = vld [vmem:[%s3326] sm:$0x1]
  %s3328 = scalar_lea.vmem %s9, 2
  %v3329 = vld [vmem:[%s3328] sm:$0x1]
  %v3330 = vsel %vm66, %v3324, 0.0
  %3331 = vadd.xlane.f32.xlu0 %v3330
  %v3332 = vpop.xlane.xlu0 %3331
  %v3333 = vsel %vm66, %v3325, 0.0
  %3334 = vadd.xlane.f32.xlu0 %v3333
  %v3335 = vpop.xlane.xlu0 %3334
  %v3336 = vmul.f32 %v3332, %v73
  %v3337 = vmul.f32 %v3335, %v73
  %v3338 = vsub.f32 %v3324, %v3336
  %v3339 = vsub.f32 %v3325, %v3337
  %v3340 = vmul.f32 %v3338, %v3338
  %v3341 = vmul.f32 %v3339, %v3339
  %v3342 = vsel %vm66, %v3340, 0.0
  %3343 = vadd.xlane.f32.xlu0 %v3342
  %v3344 = vpop.xlane.xlu0 %3343
  %v3345 = vsel %vm66, %v3341, 0.0
  %3346 = vadd.xlane.f32.xlu0 %v3345
  %v3347 = vpop.xlane.xlu0 %3346
  %v3348 = vmul.f32 %v3344, %v73
  %v3349 = vmul.f32 %v3347, %v73
  %v3350 = vadd.f32 %v3348, 1e-05
  %v3351 = vadd.f32 %v3349, 1e-05
  %v3352 = vrsqrt.pop %v3350
  %v3353 = vrsqrt.pop %v3351
  %v3354 = vmul.f32 %v3338, %v3352
  %v3355 = vmul.f32 %v3339, %v3353
  %v3357 = vlaneseq
  %v3358 = vshrl.u32 %v3357, 7
  %v3359 = vsub.s32 0, %v3358
  %v3360 = vrot.slane %v3327, %v3359
  %v3362 = vmul.f32 %v3354, %v3360
  %v3363 = vmul.f32 %v3355, %v3360
  %v3365 = vlaneseq
  %v3366 = vshrl.u32 %v3365, 7
  %v3367 = vsub.s32 0, %v3366
  %v3368 = vrot.slane %v3329, %v3367
  %v3370 = vadd.f32 %v3362, %v3368
  %v3371 = vadd.f32 %v3363, %v3368
  %s3372 = scalar_lea.vmem %s10, 64
  %v3373 = vld [vmem:[%s3372] sm:$0xff]
  %v3374 = vld [vmem:[%s3372 + $0x8] sm:$0xff]
  %v3375 = vld [vmem:[%s3372 + $0x10] sm:$0xff]
  %v3376 = vld [vmem:[%s3372 + $0x18] sm:$0xff]
  %s3377 = scalar_lea.vmem %s11, 2
  %v3378 = vld [vmem:[%s3377] sm:$0x1]
  %v3380 = vlaneseq
  %v3381 = vshrl.u32 %v3380, 7
  %v3382 = vsub.s32 0, %v3381
  %v3383 = vrot.slane %v3378, %v3382
  %v3386 = vsel %vm66, %v3370, 0
  %v3389 = vsel %vm66, %v3371, 0
  %3391 = vmatprep.subr.mxu0 0.0
  %3392 = vmatpush1.msra.mxu0 0.0
  %3393 = vmatprep.subr.mxu0 0.0
  %3394 = vmatpush1.msra.mxu0 0.0
  %3395 = vmatprep.subr.mxu0 0.0
  %3396 = vmatpush1.msra.mxu0 0.0
  %3397 = vmatprep.subr.mxu0 0.0
  %3398 = vmatpush1.msra.mxu0 0.0
  %3399 = vmatprep.subr.mxu0 0.0
  %3400 = vmatpush1.msra.mxu0 0.0
  %3401 = vmatprep.subr.mxu0 0.0
  %3402 = vmatpush1.msra.mxu0 0.0
  %3403 = vmatprep.subr.mxu0 0.0
  %3404 = vmatpush1.msra.mxu0 0.0
  %3405 = vmatprep.subr.mxu0 0.0
  %3406 = vmatpush1.msra.mxu0 0.0
  %3407 = vmatprep.subr.mxu0 0.0
  %3408 = vmatpush1.msra.mxu0 0.0
  %3409 = vmatprep.subr.mxu0 0.0
  %3410 = vmatpush1.msra.mxu0 0.0
  %3411 = vmatprep.subr.mxu0 0.0
  %3412 = vmatpush1.msra.mxu0 0.0
  %3413 = vmatprep.subr.mxu0 0.0
  %3414 = vmatpush1.msra.mxu0 0.0
  %3415 = vmatprep.subr.mxu0 0.0
  %3416 = vmatpush1.msra.mxu0 %v3376
  %3417 = vmatprep.subr.mxu0 0.0
  %3418 = vmatpush1.msra.mxu0 %v3375
  %3419 = vmatprep.subr.mxu0 0.0
  %3420 = vmatpush1.msra.mxu0 %v3374
  %3421 = vmatprep.subr.mxu0 0.0
  %3422 = vmatpush1.msra.mxu0 %v3373
  %3423 = vmatprep.subr.mxu0 0.0
  %3424 = vmatpush2.msra.mxu0 0.0
  %3425 = vmatprep.subr.mxu0 0.0
  %3426 = vmatpush2.msra.mxu0 0.0
  %3427 = vmatprep.subr.mxu0 0.0
  %3428 = vmatpush2.msra.mxu0 0.0
  %3429 = vmatprep.subr.mxu0 0.0
  %3430 = vmatpush2.msra.mxu0 0.0
  %3431 = vmatprep.subr.mxu0 0.0
  %3432 = vmatpush2.msra.mxu0 0.0
  %3433 = vmatprep.subr.mxu0 0.0
  %3434 = vmatpush2.msra.mxu0 0.0
  %3435 = vmatprep.subr.mxu0 0.0
  %3436 = vmatpush2.msra.mxu0 0.0
  %3437 = vmatprep.subr.mxu0 0.0
  %3438 = vmatpush2.msra.mxu0 0.0
  %3439 = vmatprep.subr.mxu0 0.0
  %3440 = vmatpush2.msra.mxu0 0.0
  %3441 = vmatprep.subr.mxu0 0.0
  %3442 = vmatpush2.msra.mxu0 0.0
  %3443 = vmatprep.subr.mxu0 0.0
  %3444 = vmatpush2.msra.mxu0 0.0
  %3445 = vmatprep.subr.mxu0 0.0
  %3446 = vmatpush2.msra.mxu0 0.0
  %3447 = vmatprep.subr.mxu0 0.0
  %3448 = vmatpush2.msra.mxu0 0.0
  %3449 = vmatprep.subr.mxu0 0.0
  %3450 = vmatpush2.msra.mxu0 0.0
  %3451 = vmatprep.subr.mxu0 0.0
  %3452 = vmatpush2.msra.mxu0 0.0
  %3453 = vmatprep.subr.mxu0 0.0
  %3454 = vmatpush2.msra.mxu0 0.0
  %3455 = vmatprep.mubr.f32.mxu0 0.0
  %3456 = vmatmul.mubr.f32.gmra.mxu0 %v3386
  %v3457 = vpop.f32.mrf.mxu0
  %v3458 = vadd.f32 %v3383, %v3457
  %v3459 = vpop.f32.mrf.mxu0
  %3460 = vmatprep.mubr.f32.mxu0 0.0
  %3461 = vmatmul.mubr.f32.gmra.mxu0 %v3389
  %v3462 = vpop.f32.mrf.mxu0
  %v3463 = vadd.f32 %v3383, %v3462
  %v3464 = vpop.f32.mrf.mxu0
  %3465 = vdwg.mxu0
  %v3466 = vmul.f32 %v3458, 0.5
  %v3467 = vmul.f32 %v3463, 0.5
  %v3468 = vmul.f32 %v3458, 0.044715
  %v3469 = vmul.f32 %v3463, 0.044715
  %v3470 = vmul.f32 %v3468, %v3458
  %v3471 = vmul.f32 %v3469, %v3463
  %v3472 = vmul.f32 %v3470, %v3458
  %v3473 = vmul.f32 %v3471, %v3463
  %v3474 = vadd.f32 %v3458, %v3472
  %v3475 = vadd.f32 %v3463, %v3473
  %v3476 = vmul.f32 %v3474, 0.7978846
  %v3477 = vmul.f32 %v3475, 0.7978846
  %v3478 = vtanh.pop %v3476
  %v3479 = vtanh.pop %v3477
  %v3480 = vadd.f32 %v3478, 1.0
  %v3481 = vadd.f32 %v3479, 1.0
  %v3482 = vmul.f32 %v3466, %v3480
  %v3483 = vmul.f32 %v3467, %v3481
  %s3484 = scalar_lea.vmem %s12, 128
  %v3485 = vld [vmem:[%s3484] sm:$0xff]
  %v3486 = vld [vmem:[%s3484 + $0x8] sm:$0xff]
  %v3487 = vld [vmem:[%s3484 + $0x10] sm:$0xff]
  %v3488 = vld [vmem:[%s3484 + $0x18] sm:$0xff]
  %v3489 = vld [vmem:[%s3484 + $0x20] sm:$0xff]
  %v3490 = vld [vmem:[%s3484 + $0x28] sm:$0xff]
  %v3491 = vld [vmem:[%s3484 + $0x30] sm:$0xff]
  %v3492 = vld [vmem:[%s3484 + $0x38] sm:$0xff]
  %s3493 = scalar_lea.vmem %s13, 2
  %v3494 = vld [vmem:[%s3493] sm:$0x1]
  %v3496 = vlaneseq
  %v3497 = vshrl.u32 %v3496, 7
  %v3498 = vsub.s32 0, %v3497
  %v3499 = vrot.slane %v3494, %v3498
  %v3502 = vsel %vm1154, %v3482, 0
  %v3505 = vsel %vm1154, %v3483, 0
  %3507 = vmatprep.subr.mxu0 0.0
  %3508 = vmatpush1.msra.mxu0 0.0
  %3509 = vmatprep.subr.mxu0 0.0
  %3510 = vmatpush1.msra.mxu0 0.0
  %3511 = vmatprep.subr.mxu0 0.0
  %3512 = vmatpush1.msra.mxu0 0.0
  %3513 = vmatprep.subr.mxu0 0.0
  %3514 = vmatpush1.msra.mxu0 0.0
  %3515 = vmatprep.subr.mxu0 0.0
  %3516 = vmatpush1.msra.mxu0 0.0
  %3517 = vmatprep.subr.mxu0 0.0
  %3518 = vmatpush1.msra.mxu0 0.0
  %3519 = vmatprep.subr.mxu0 0.0
  %3520 = vmatpush1.msra.mxu0 0.0
  %3521 = vmatprep.subr.mxu0 0.0
  %3522 = vmatpush1.msra.mxu0 0.0
  %3523 = vmatprep.subr.mxu0 0.0
  %3524 = vmatpush1.msra.mxu0 %v3492
  %3525 = vmatprep.subr.mxu0 0.0
  %3526 = vmatpush1.msra.mxu0 %v3491
  %3527 = vmatprep.subr.mxu0 0.0
  %3528 = vmatpush1.msra.mxu0 %v3490
  %3529 = vmatprep.subr.mxu0 0.0
  %3530 = vmatpush1.msra.mxu0 %v3489
  %3531 = vmatprep.subr.mxu0 0.0
  %3532 = vmatpush1.msra.mxu0 %v3488
  %3533 = vmatprep.subr.mxu0 0.0
  %3534 = vmatpush1.msra.mxu0 %v3487
  %3535 = vmatprep.subr.mxu0 0.0
  %3536 = vmatpush1.msra.mxu0 %v3486
  %3537 = vmatprep.subr.mxu0 0.0
  %3538 = vmatpush1.msra.mxu0 %v3485
  %3539 = vmatprep.subr.mxu0 0.0
  %3540 = vmatpush2.msra.mxu0 0.0
  %3541 = vmatprep.subr.mxu0 0.0
  %3542 = vmatpush2.msra.mxu0 0.0
  %3543 = vmatprep.subr.mxu0 0.0
  %3544 = vmatpush2.msra.mxu0 0.0
  %3545 = vmatprep.subr.mxu0 0.0
  %3546 = vmatpush2.msra.mxu0 0.0
  %3547 = vmatprep.subr.mxu0 0.0
  %3548 = vmatpush2.msra.mxu0 0.0
  %3549 = vmatprep.subr.mxu0 0.0
  %3550 = vmatpush2.msra.mxu0 0.0
  %3551 = vmatprep.subr.mxu0 0.0
  %3552 = vmatpush2.msra.mxu0 0.0
  %3553 = vmatprep.subr.mxu0 0.0
  %3554 = vmatpush2.msra.mxu0 0.0
  %3555 = vmatprep.subr.mxu0 0.0
  %3556 = vmatpush2.msra.mxu0 0.0
  %3557 = vmatprep.subr.mxu0 0.0
  %3558 = vmatpush2.msra.mxu0 0.0
  %3559 = vmatprep.subr.mxu0 0.0
  %3560 = vmatpush2.msra.mxu0 0.0
  %3561 = vmatprep.subr.mxu0 0.0
  %3562 = vmatpush2.msra.mxu0 0.0
  %3563 = vmatprep.subr.mxu0 0.0
  %3564 = vmatpush2.msra.mxu0 0.0
  %3565 = vmatprep.subr.mxu0 0.0
  %3566 = vmatpush2.msra.mxu0 0.0
  %3567 = vmatprep.subr.mxu0 0.0
  %3568 = vmatpush2.msra.mxu0 0.0
  %3569 = vmatprep.subr.mxu0 0.0
  %3570 = vmatpush2.msra.mxu0 0.0
  %3571 = vmatprep.mubr.f32.mxu0 0.0
  %3572 = vmatmul.mubr.f32.gmra.mxu0 %v3502
  %v3573 = vpop.f32.mrf.mxu0
  %v3574 = vadd.f32 %v3499, %v3573
  %v3575 = vpop.f32.mrf.mxu0
  %3576 = vmatprep.mubr.f32.mxu0 0.0
  %3577 = vmatmul.mubr.f32.gmra.mxu0 %v3505
  %v3578 = vpop.f32.mrf.mxu0
  %v3579 = vadd.f32 %v3499, %v3578
  %v3580 = vpop.f32.mrf.mxu0
  %3581 = vdwg.mxu0
  %v3582 = vadd.f32 %v3574, %v3370
  %v3583 = vadd.f32 %v3579, %v3371
  %s3584 = scalar_lea.vmem %s14, 2
  %v3585 = vld [vmem:[%s3584] sm:$0x1]
  %s3586 = scalar_lea.vmem %s15, 2
  %v3587 = vld [vmem:[%s3586] sm:$0x1]
  %v3588 = vsel %vm66, %v3582, 0.0
  %3589 = vadd.xlane.f32.xlu0 %v3588
  %v3590 = vpop.xlane.xlu0 %3589
  %v3591 = vsel %vm66, %v3583, 0.0
  %3592 = vadd.xlane.f32.xlu0 %v3591
  %v3593 = vpop.xlane.xlu0 %3592
  %v3594 = vmul.f32 %v3590, %v73
  %v3595 = vmul.f32 %v3593, %v73
  %v3596 = vsub.f32 %v3582, %v3594
  %v3597 = vsub.f32 %v3583, %v3595
  %v3598 = vmul.f32 %v3596, %v3596
  %v3599 = vmul.f32 %v3597, %v3597
  %v3600 = vsel %vm66, %v3598, 0.0
  %3601 = vadd.xlane.f32.xlu0 %v3600
  %v3602 = vpop.xlane.xlu0 %3601
  %v3603 = vsel %vm66, %v3599, 0.0
  %3604 = vadd.xlane.f32.xlu0 %v3603
  %v3605 = vpop.xlane.xlu0 %3604
  %v3606 = vmul.f32 %v3602, %v73
  %v3607 = vmul.f32 %v3605, %v73
  %v3608 = vadd.f32 %v3606, 1e-05
  %v3609 = vadd.f32 %v3607, 1e-05
  %v3610 = vrsqrt.pop %v3608
  %v3611 = vrsqrt.pop %v3609
  %v3612 = vmul.f32 %v3596, %v3610
  %v3613 = vmul.f32 %v3597, %v3611
  %v3615 = vlaneseq
  %v3616 = vshrl.u32 %v3615, 7
  %v3617 = vsub.s32 0, %v3616
  %v3618 = vrot.slane %v3585, %v3617
  %v3620 = vmul.f32 %v3612, %v3618
  %v3621 = vmul.f32 %v3613, %v3618
  %v3623 = vlaneseq
  %v3624 = vshrl.u32 %v3623, 7
  %v3625 = vsub.s32 0, %v3624
  %v3626 = vrot.slane %v3587, %v3625
  %v3628 = vadd.f32 %v3620, %v3626
  %v3629 = vadd.f32 %v3621, %v3626
  %v3630 = vadd.f32 %v2456, %v3628
  %v3631 = vadd.f32 %v2457, %v3629
  %v3632 = vmax.f32 %v2458, %v3628
  %v3633 = vmax.f32 %v2459, %v3629
  %v3634 = vmul.f32 %v3630, 0.25
  %v3635 = vmul.f32 %v3631, 0.25
  %v3636 = vld [vmem:[%s16] sm:$0xff]
  %v3637 = vld [vmem:[%s16 + $0x8] sm:$0xff]
  %v3638 = vld [vmem:[%s16 + $0x10] sm:$0xff]
  %v3639 = vld [vmem:[%s16 + $0x18] sm:$0xff]
  %v3640 = vld [vmem:[%s17] sm:$0xff]
  %v3641 = vld [vmem:[%s17 + $0x8] sm:$0xff]
  %v3642 = vld [vmem:[%s17 + $0x10] sm:$0xff]
  %v3643 = vld [vmem:[%s17 + $0x18] sm:$0xff]
  %v3645 = vsel %vm66, %v3632, 0
  %v3648 = vsel %vm66, %v3633, 0
  %3650 = vmatprep.subr.mxu0 0.0
  %3651 = vmatpush1.msra.mxu0 0.0
  %3652 = vmatprep.subr.mxu0 0.0
  %3653 = vmatpush1.msra.mxu0 0.0
  %3654 = vmatprep.subr.mxu0 0.0
  %3655 = vmatpush1.msra.mxu0 0.0
  %3656 = vmatprep.subr.mxu0 0.0
  %3657 = vmatpush1.msra.mxu0 0.0
  %3658 = vmatprep.subr.mxu0 0.0
  %3659 = vmatpush1.msra.mxu0 0.0
  %3660 = vmatprep.subr.mxu0 0.0
  %3661 = vmatpush1.msra.mxu0 0.0
  %3662 = vmatprep.subr.mxu0 0.0
  %3663 = vmatpush1.msra.mxu0 0.0
  %3664 = vmatprep.subr.mxu0 0.0
  %3665 = vmatpush1.msra.mxu0 0.0
  %3666 = vmatprep.subr.mxu0 0.0
  %3667 = vmatpush1.msra.mxu0 0.0
  %3668 = vmatprep.subr.mxu0 0.0
  %3669 = vmatpush1.msra.mxu0 0.0
  %3670 = vmatprep.subr.mxu0 0.0
  %3671 = vmatpush1.msra.mxu0 0.0
  %3672 = vmatprep.subr.mxu0 0.0
  %3673 = vmatpush1.msra.mxu0 0.0
  %3674 = vmatprep.subr.mxu0 0.0
  %3675 = vmatpush1.msra.mxu0 %v3643
  %3676 = vmatprep.subr.mxu0 0.0
  %3677 = vmatpush1.msra.mxu0 %v3642
  %3678 = vmatprep.subr.mxu0 0.0
  %3679 = vmatpush1.msra.mxu0 %v3641
  %3680 = vmatprep.subr.mxu0 0.0
  %3681 = vmatpush1.msra.mxu0 %v3640
  %3682 = vmatprep.subr.mxu0 0.0
  %3683 = vmatpush2.msra.mxu0 0.0
  %3684 = vmatprep.subr.mxu0 0.0
  %3685 = vmatpush2.msra.mxu0 0.0
  %3686 = vmatprep.subr.mxu0 0.0
  %3687 = vmatpush2.msra.mxu0 0.0
  %3688 = vmatprep.subr.mxu0 0.0
  %3689 = vmatpush2.msra.mxu0 0.0
  %3690 = vmatprep.subr.mxu0 0.0
  %3691 = vmatpush2.msra.mxu0 0.0
  %3692 = vmatprep.subr.mxu0 0.0
  %3693 = vmatpush2.msra.mxu0 0.0
  %3694 = vmatprep.subr.mxu0 0.0
  %3695 = vmatpush2.msra.mxu0 0.0
  %3696 = vmatprep.subr.mxu0 0.0
  %3697 = vmatpush2.msra.mxu0 0.0
  %3698 = vmatprep.subr.mxu0 0.0
  %3699 = vmatpush2.msra.mxu0 0.0
  %3700 = vmatprep.subr.mxu0 0.0
  %3701 = vmatpush2.msra.mxu0 0.0
  %3702 = vmatprep.subr.mxu0 0.0
  %3703 = vmatpush2.msra.mxu0 0.0
  %3704 = vmatprep.subr.mxu0 0.0
  %3705 = vmatpush2.msra.mxu0 0.0
  %3706 = vmatprep.subr.mxu0 0.0
  %3707 = vmatpush2.msra.mxu0 0.0
  %3708 = vmatprep.subr.mxu0 0.0
  %3709 = vmatpush2.msra.mxu0 0.0
  %3710 = vmatprep.subr.mxu0 0.0
  %3711 = vmatpush2.msra.mxu0 0.0
  %3712 = vmatprep.subr.mxu0 0.0
  %3713 = vmatpush2.msra.mxu0 0.0
  %3714 = vmatprep.mubr.f32.mxu0 0.0
  %3715 = vmatmul.mubr.f32.gmra.mxu0 %v3645
  %v3716 = vpop.f32.mrf.mxu0
  %v3717 = vadd.f32 0.0, %v3716
  %v3718 = vpop.f32.mrf.mxu0
  %3719 = vmatprep.mubr.f32.mxu0 0.0
  %3720 = vmatmul.mubr.f32.gmra.mxu0 %v3648
  %v3721 = vpop.f32.mrf.mxu0
  %v3722 = vadd.f32 0.0, %v3721
  %v3723 = vpop.f32.mrf.mxu0
  %3724 = vdwg.mxu0
  %v3726 = vsel %vm66, %v3634, 0
  %v3729 = vsel %vm66, %v3635, 0
  %3731 = vmatprep.subr.mxu0 0.0
  %3732 = vmatpush1.msra.mxu0 0.0
  %3733 = vmatprep.subr.mxu0 0.0
  %3734 = vmatpush1.msra.mxu0 0.0
  %3735 = vmatprep.subr.mxu0 0.0
  %3736 = vmatpush1.msra.mxu0 0.0
  %3737 = vmatprep.subr.mxu0 0.0
  %3738 = vmatpush1.msra.mxu0 0.0
  %3739 = vmatprep.subr.mxu0 0.0
  %3740 = vmatpush1.msra.mxu0 0.0
  %3741 = vmatprep.subr.mxu0 0.0
  %3742 = vmatpush1.msra.mxu0 0.0
  %3743 = vmatprep.subr.mxu0 0.0
  %3744 = vmatpush1.msra.mxu0 0.0
  %3745 = vmatprep.subr.mxu0 0.0
  %3746 = vmatpush1.msra.mxu0 0.0
  %3747 = vmatprep.subr.mxu0 0.0
  %3748 = vmatpush1.msra.mxu0 0.0
  %3749 = vmatprep.subr.mxu0 0.0
  %3750 = vmatpush1.msra.mxu0 0.0
  %3751 = vmatprep.subr.mxu0 0.0
  %3752 = vmatpush1.msra.mxu0 0.0
  %3753 = vmatprep.subr.mxu0 0.0
  %3754 = vmatpush1.msra.mxu0 0.0
  %3755 = vmatprep.subr.mxu0 0.0
  %3756 = vmatpush1.msra.mxu0 %v3639
  %3757 = vmatprep.subr.mxu0 0.0
  %3758 = vmatpush1.msra.mxu0 %v3638
  %3759 = vmatprep.subr.mxu0 0.0
  %3760 = vmatpush1.msra.mxu0 %v3637
  %3761 = vmatprep.subr.mxu0 0.0
  %3762 = vmatpush1.msra.mxu0 %v3636
  %3763 = vmatprep.subr.mxu0 0.0
  %3764 = vmatpush2.msra.mxu0 0.0
  %3765 = vmatprep.subr.mxu0 0.0
  %3766 = vmatpush2.msra.mxu0 0.0
  %3767 = vmatprep.subr.mxu0 0.0
  %3768 = vmatpush2.msra.mxu0 0.0
  %3769 = vmatprep.subr.mxu0 0.0
  %3770 = vmatpush2.msra.mxu0 0.0
  %3771 = vmatprep.subr.mxu0 0.0
  %3772 = vmatpush2.msra.mxu0 0.0
  %3773 = vmatprep.subr.mxu0 0.0
  %3774 = vmatpush2.msra.mxu0 0.0
  %3775 = vmatprep.subr.mxu0 0.0
  %3776 = vmatpush2.msra.mxu0 0.0
  %3777 = vmatprep.subr.mxu0 0.0
  %3778 = vmatpush2.msra.mxu0 0.0
  %3779 = vmatprep.subr.mxu0 0.0
  %3780 = vmatpush2.msra.mxu0 0.0
  %3781 = vmatprep.subr.mxu0 0.0
  %3782 = vmatpush2.msra.mxu0 0.0
  %3783 = vmatprep.subr.mxu0 0.0
  %3784 = vmatpush2.msra.mxu0 0.0
  %3785 = vmatprep.subr.mxu0 0.0
  %3786 = vmatpush2.msra.mxu0 0.0
  %3787 = vmatprep.subr.mxu0 0.0
  %3788 = vmatpush2.msra.mxu0 0.0
  %3789 = vmatprep.subr.mxu0 0.0
  %3790 = vmatpush2.msra.mxu0 0.0
  %3791 = vmatprep.subr.mxu0 0.0
  %3792 = vmatpush2.msra.mxu0 0.0
  %3793 = vmatprep.subr.mxu0 0.0
  %3794 = vmatpush2.msra.mxu0 0.0
  %3795 = vmatprep.mubr.f32.mxu0 0.0
  %3796 = vmatmul.mubr.f32.gmra.mxu0 %v3726
  %v3797 = vpop.f32.mrf.mxu0
  %v3798 = vadd.f32 %v3717, %v3797
  %v3799 = vpop.f32.mrf.mxu0
  %3800 = vmatprep.mubr.f32.mxu0 0.0
  %3801 = vmatmul.mubr.f32.gmra.mxu0 %v3729
  %v3802 = vpop.f32.mrf.mxu0
  %v3803 = vadd.f32 %v3722, %v3802
  %v3804 = vpop.f32.mrf.mxu0
  %3805 = vdwg.mxu0
  %v3806 = vld [vmem:[%s18] sm:$0x1]
  %v3808 = vlaneseq
  %v3809 = vshrl.u32 %v3808, 7
  %v3810 = vsub.s32 0, %v3809
  %v3811 = vrot.slane %v3806, %v3810
  %v3813 = vadd.f32 %v3798, %v3811
  %v3814 = vadd.f32 %v3803, %v3811
  %vm3815 = vcmask 15360
  %3816 = vst.msk [vmem:[%s19] sm:$0xff] %vm3815, %v3813
  %3817 = vst.msk [vmem:[%s19 + $0x8] sm:$0xff] %vm3815, %v3814
  // Predicated region
  $region78: #{nlp_model_forward.1} parent=0 // pred_check
    _
  $region79: #{nlp_model_forward.1} parent=0 // pred_check_branch
    %3819 = sbr.rel (0) target = $region81
  $region80: #{nlp_model_forward.1} parent=0 // pred_region
    _
  $region81: #{nlp_model_forward.1} parent=0 // pred_fallthru
    _
  // Predicated region
  $region82: #{nlp_model_forward.1} parent=0 // pred_check
    _
  $region83: #{nlp_model_forward.1} parent=0 // pred_check_branch
    %3821 = sbr.rel (0) target = $region85
  $region84: #{nlp_model_forward.1} parent=0 // pred_region
    _
  $region85: #{nlp_model_forward.1} parent=0 // pred_fallthru
    _

</llo_original>
